<compile_context>
chip_gen: v6e
topology: v6e:2x2x1
jax: 0.10.0
libtpu: 0.0.40
codegen_flags: <defaults>
</compile_context>

<pallas_src>
import functools

import numpy as np
import jax
import jax.numpy as jnp
from jax.experimental import pallas as pl
from jax.experimental.pallas import tpu as pltpu

_EPS = 1e-5
_MATMUL_DTYPE = jnp.bfloat16   # MXU operand dtype; accumulation stays f32.


def _should_fuse_shortcut():
    """Fuse the 1x1 shortcut into conv1's output columns only on chips with a
    256-wide MXU (v6e / v7x); on 128-wide MXUs (<= v5) keep it separate."""
    try:
        kind = jax.devices()[0].device_kind.lower()
        return not any(t in kind for t in ("v2", "v3", "v4", "v5"))
    except Exception:
        return True


# ----------------------------- kernel -----------------------------

def _reslayer_kernel(*refs, N, H, W, Cin, Cout, n_blocks, fuse_sc):
    """Fused ResLayer forward, lane-dense (N, rows, w*C + c) layout.

    refs (in order):
      xpad                          (N, H+2, (W+2)*Cin) f32, pre-padded input
      fold1, unfold1                (W*Cout, Cout), (Cout, W*Cout)
      [fold2, unfold2]  if fuse_sc  block-diag (x2) versions
      per block: w1_kh0..2, w2_kh0..2 [, ws]   expanded bf16 weights
      out                           (N, H, W*Cout) f32
      pad_c (scratch)               (N, H+2, (W+2)*Cout) f32
    """
    Hp, Wp = H + 2, W + 2
    NH = N * H
    LC = W * Cout
    inv_cnt = 1.0 / float(N * H * W)

    idx = 0
    xpad_ref = refs[idx]; idx += 1
    fold1 = refs[idx][...]; unfold1 = refs[idx + 1][...]; idx += 2
    if fuse_sc:
        fold2 = refs[idx][...]; unfold2 = refs[idx + 1][...]; idx += 2
    per_block = 6 if fuse_sc else 7
    w_refs = refs[idx: idx + per_block * n_blocks]; idx += per_block * n_blocks
    out_ref = refs[idx]; idx += 1
    pad_c = refs[idx]

    def conv3x3(pad_ref, w3, C):
        # 3x3 / stride-1 / pad-1 conv as three accumulated matmuls; the kw
        # shift lives in the expanded weights, so every operand is the
        # contiguous padded row slab (no lane shifts, no lane concat).
        full = pad_ref[...]                                      # (N, Hp, Wp*C)
        acc = None
        for kh in range(3):
            rows = full[:, kh:kh + H, :].reshape(NH, Wp * C)
            d = jnp.dot(rows.astype(_MATMUL_DTYPE), w3[kh][...],
                        preferred_element_type=jnp.float32)
            acc = d if acc is None else acc + d
        return acc                                               # (NH, Nout) f32

    def batchnorm(y, fold, unfold):
        # Training-mode BatchNorm2d (gamma=1, beta=0): one-pass batch stats in
        # f32, biased variance.  fold/unfold dots are batched: [sum; sumsq]
        # share one fold matmul, [mean; inv_std] share one unfold matmul.
        stats = jnp.concatenate(
            [jnp.sum(y, axis=0, keepdims=True),
             jnp.sum(y * y, axis=0, keepdims=True)], axis=0)      # (2, L)
        folded = jnp.dot(stats, fold,
                         preferred_element_type=jnp.float32) * inv_cnt
        mean = folded[0:1, :]
        inv_std = jax.lax.rsqrt(folded[1:2, :] - mean * mean + _EPS)
        mi = jnp.dot(jnp.concatenate([mean, inv_std], axis=0), unfold,
                     preferred_element_type=jnp.float32)          # (2, L)
        return (y - mi[0:1, :]) * mi[1:2, :]

    # Single full-lane memset zeroes row + lane halos; interiors are always
    # overwritten before being read.
    pad_c[...] = jnp.zeros((N, Hp, Wp * Cout), jnp.float32)

    in_pad, c_in = xpad_ref, Cin
    for b in range(n_blocks):
        w1 = w_refs[per_block * b: per_block * b + 3]
        w2 = w_refs[per_block * b + 3: per_block * b + 6]

        pre1 = conv3x3(in_pad, w1, c_in)          # (NH, LC) or (NH, 2*LC)
        if fuse_sc:
            # conv1 and the 1x1 shortcut share one 256-wide matmul; their two
            # BNs run through one block-diagonal fold/unfold pair.
            ysc = batchnorm(pre1, fold2, unfold2)
            y1 = jnp.maximum(ysc[:, :LC], 0.0)
            sc = ysc[:, LC:]
        else:
            y1 = jnp.maximum(batchnorm(pre1, fold1, unfold1), 0.0)
            cur = in_pad[:, 1:H + 1, 0:W * c_in].reshape(NH, W * c_in)
            sc_pre = jnp.dot(cur.astype(_MATMUL_DTYPE),
                             w_refs[per_block * b + 6][...],
                             preferred_element_type=jnp.float32)
            sc = batchnorm(sc_pre, fold1, unfold1)

        # Pad conv2's input in VMEM: lane-0 aligned, full-lane interior store.
        pad_c[:, 1:H + 1, 0:LC] = y1.reshape(N, H, LC)

        y2 = batchnorm(conv3x3(pad_c, w2, Cout), fold1, unfold1)
        cur_out = jnp.maximum(y2 + sc, 0.0)        # (NH, LC) f32

        if b + 1 < n_blocks:
            # Next block consumes this output; reuse the same padded scratch.
            pad_c[:, 1:H + 1, 0:LC] = cur_out.reshape(N, H, LC)
            in_pad, c_in = pad_c, Cout
        else:
            out_ref[...] = cur_out.reshape(N, H, LC)


# ------------------------- weight preparation -------------------------

def _tap_select(W, kw):
    # (Wp, W) 0/1 matrix mapping padded lane-groups (live first, halo last)
    # to output positions for horizontal tap kw of a pad-1 3x3 conv.
    Wp = W + 2
    P = np.zeros((Wp, W), np.float32)
    for w_out in range(W):
        p = w_out + kw                        # padded input column
        g = (p - 1) if 1 <= p <= W else (W if p == 0 else W + 1)
        P[g, w_out] = 1.0
    return P


def _expand_conv3x3(w_hwio, W, fuse_ws=None):
    # (3,3,Ci,Co) -> three (Wp*Ci, Nout) weights, one per vertical tap kh; the
    # horizontal shift kw is folded in via _tap_select.  If fuse_ws (1x1
    # shortcut, (Ci,Co)) is given, it is appended as W*Co extra output columns
    # on the centre vertical tap (zero columns on the other two).
    Co = w_hwio.shape[3]
    LC = W * Co
    mats = []
    for kh in range(3):
        m = None
        for kw in range(3):
            t = jnp.kron(jnp.asarray(_tap_select(W, kw)), w_hwio[kh, kw])
            m = t if m is None else m + t
        if fuse_ws is not None:
            extra = (jnp.kron(jnp.asarray(_tap_select(W, 1)), fuse_ws)
                     if kh == 1 else jnp.zeros((m.shape[0], LC), m.dtype))
            m = jnp.concatenate([m, extra], axis=1)
        mats.append(m)
    return mats


def _expand_conv1x1(w_2d, W):
    return jnp.kron(jnp.eye(W, dtype=w_2d.dtype), w_2d)      # (W*Ci, W*Co)


# ------------------------- parameter construction -------------------------

def _init_resblock_params(key, cin, cout):
    ks = jax.random.split(key, 3)

    def kaiming_hwio(k, shape):
        # kaiming_normal_(mode='fan_out', nonlinearity='relu')
        fan_out = shape[0] * shape[1] * shape[3]
        return jax.random.normal(k, shape, jnp.float32) * jnp.sqrt(2.0 / fan_out)

    # Conv biases omitted: each conv feeds a training-mode BN with gamma=1 /
    # beta=0, so a per-channel bias cancels exactly.
    return dict(w1=kaiming_hwio(ks[0], (3, 3, cin, cout)),
                w2=kaiming_hwio(ks[1], (3, 3, cout, cout)),
                ws=kaiming_hwio(ks[2], (1, 1, cin, cout))[0, 0])   # (cin, cout)


def init_res_layer(key, in_channels, out_channels, num_blocks=3):
    # Mirrors ResLayer.__init__: num_blocks-1 ResBlocks total.
    keys = jax.random.split(key, max(num_blocks, 2))
    params = [_init_resblock_params(keys[0], in_channels, out_channels)]
    for i in range(1, num_blocks - 1):
        params.append(_init_resblock_params(keys[i], out_channels, out_channels))
    return params


# ------------------------- forward wrapper -------------------------

def res_layer_forward(x_nchw, blocks_params, stride=1):
    # TODO(synk): only stride=1 (the module's default) is implemented.
    assert stride == 1, "only stride=1 supported"
    N, Cin, H, W = x_nchw.shape
    Cout = blocks_params[0]["w1"].shape[-1]
    n_blocks = len(blocks_params)
    Hp, Wp = H + 2, W + 2
    LC = W * Cout
    fuse_sc = _should_fuse_shortcut()

    # NCHW -> lane-dense NHWC, pre-padded in the permuted layout (live columns
    # first, halo columns last; halo rows at padded rows 0 and H+1).
    x = jnp.transpose(x_nchw, (0, 2, 3, 1)).astype(jnp.float32)     # (N,H,W,Cin)
    x_pad = jnp.pad(x, ((0, 0), (1, 1), (0, 2), (0, 0)))            # (N,Hp,Wp,Cin)
    x_pad = x_pad.reshape(N, Hp, Wp * Cin)

    # BatchNorm channel fold / broadcast 0/1 matrices (lane = w*Cout + c).
    eye = np.eye(Cout, dtype=np.float32)
    fold1 = np.tile(eye, (W, 1))            # (LC, Cout)
    unfold1 = np.tile(eye, (1, W))          # (Cout, LC)
    fold_mats = [jnp.asarray(fold1), jnp.asarray(unfold1)]
    if fuse_sc:
        fold2 = np.zeros((2 * LC, 2 * Cout), np.float32)
        fold2[:LC, :Cout] = fold1
        fold2[LC:, Cout:] = fold1
        unfold2 = np.zeros((2 * Cout, 2 * LC), np.float32)
        unfold2[:Cout, :LC] = unfold1
        unfold2[Cout:, LC:] = unfold1
        fold_mats += [jnp.asarray(fold2), jnp.asarray(unfold2)]

    weights = []
    for p in blocks_params:
        w1m = _expand_conv3x3(p["w1"], W, fuse_ws=(p["ws"] if fuse_sc else None))
        w2m = _expand_conv3x3(p["w2"], W)
        weights += [m.astype(_MATMUL_DTYPE) for m in (w1m + w2m)]
        if not fuse_sc:
            weights.append(_expand_conv1x1(p["ws"], W).astype(_MATMUL_DTYPE))

    kernel = functools.partial(_reslayer_kernel, N=N, H=H, W=W, Cin=Cin,
                               Cout=Cout, n_blocks=n_blocks, fuse_sc=fuse_sc)
    vmem = functools.partial(pl.BlockSpec, memory_space=pltpu.MemorySpace.VMEM)
    inputs = [x_pad] + fold_mats + weights

    out = pl.pallas_call(
        kernel,
        out_shape=jax.ShapeDtypeStruct((N, H, LC), jnp.float32),
        in_specs=[vmem() for _ in inputs],
        out_specs=vmem(),
        scratch_shapes=[pltpu.VMEM((N, Hp, Wp * Cout), jnp.float32)],
    )(*inputs)

    # lane-dense -> NCHW
    return jnp.transpose(out.reshape(N, H, W, Cout), (0, 3, 1, 2))


if __name__ == "__main__":
    key = jax.random.PRNGKey(0)
    kx, kp = jax.random.split(key)

    N, C_IN, H, W = 2, 4, 16, 16
    C_OUT = 8

    x = jax.random.normal(kx, (N, C_IN, H, W), jnp.float32)      # NCHW like PyTorch
    params = init_res_layer(kp, C_IN, C_OUT, num_blocks=3)

    out = jax.jit(res_layer_forward)(x, params)
    out = jax.block_until_ready(out)
    assert out.shape == (N, C_OUT, H, W)
    assert bool(jnp.all(jnp.isfinite(out)))
    print("KERNEL_OK")
</pallas_src>

<mosaic_0001>
module attributes {stable_mosaic.version = 11 : i64} {
  func.func @_reslayer_kernel(%arg0: memref<2x18x72xf32, #tpu.memory_space<vmem>>, %arg1: memref<128x8xf32, #tpu.memory_space<vmem>>, %arg2: memref<8x128xf32, #tpu.memory_space<vmem>>, %arg3: memref<256x16xf32, #tpu.memory_space<vmem>>, %arg4: memref<16x256xf32, #tpu.memory_space<vmem>>, %arg5: memref<72x256xbf16, #tpu.memory_space<vmem>>, %arg6: memref<72x256xbf16, #tpu.memory_space<vmem>>, %arg7: memref<72x256xbf16, #tpu.memory_space<vmem>>, %arg8: memref<144x128xbf16, #tpu.memory_space<vmem>>, %arg9: memref<144x128xbf16, #tpu.memory_space<vmem>>, %arg10: memref<144x128xbf16, #tpu.memory_space<vmem>>, %arg11: memref<144x256xbf16, #tpu.memory_space<vmem>>, %arg12: memref<144x256xbf16, #tpu.memory_space<vmem>>, %arg13: memref<144x256xbf16, #tpu.memory_space<vmem>>, %arg14: memref<144x128xbf16, #tpu.memory_space<vmem>>, %arg15: memref<144x128xbf16, #tpu.memory_space<vmem>>, %arg16: memref<144x128xbf16, #tpu.memory_space<vmem>>, %arg17: memref<2x16x128xf32, #tpu.memory_space<vmem>>, %arg18: memref<2x18x144xf32, #tpu.memory_space<vmem>>) attributes {dimension_semantics = [], scalar_prefetch = 0 : i64, scratch_operands = 1 : i64, tpu.core_type = #tpu.core_type<tc>} {
    %c0 = arith.constant 0 : index
    %c0_0 = arith.constant 0 : index
    %0 = vector.load %arg1[%c0, %c0_0] : memref<128x8xf32, #tpu.memory_space<vmem>>, vector<128x8xf32>
    %c0_1 = arith.constant 0 : index
    %c0_2 = arith.constant 0 : index
    %1 = vector.load %arg2[%c0_1, %c0_2] : memref<8x128xf32, #tpu.memory_space<vmem>>, vector<8x128xf32>
    %c0_3 = arith.constant 0 : index
    %c0_4 = arith.constant 0 : index
    %2 = vector.load %arg3[%c0_3, %c0_4] : memref<256x16xf32, #tpu.memory_space<vmem>>, vector<256x16xf32>
    %c0_5 = arith.constant 0 : index
    %c0_6 = arith.constant 0 : index
    %3 = vector.load %arg4[%c0_5, %c0_6] : memref<16x256xf32, #tpu.memory_space<vmem>>, vector<16x256xf32>
    %cst = arith.constant 0.000000e+00 : f32
    %4 = vector.broadcast %cst : f32 to vector<2x18x144xf32>
    %c0_7 = arith.constant 0 : index
    %c0_8 = arith.constant 0 : index
    %c0_9 = arith.constant 0 : index
    %5 = vector.load %arg18[%c0_7, %c0_8, %c0_9] : memref<2x18x144xf32, #tpu.memory_space<vmem>>, vector<2x18x144xf32>
    tpu.vector_store %arg18[%c0_7, %c0_8, %c0_9], %4 {strides = array<i32>} : memref<2x18x144xf32, #tpu.memory_space<vmem>>, vector<2x18x144xf32>,
    %c0_10 = arith.constant 0 : index
    %c0_11 = arith.constant 0 : index
    %c0_12 = arith.constant 0 : index
    %6 = vector.load %arg0[%c0_10, %c0_11, %c0_12] : memref<2x18x72xf32, #tpu.memory_space<vmem>>, vector<2x18x72xf32>
    %7 = vector.extract_strided_slice %6 {offsets = [0, 0, 0], sizes = [2, 16, 72], strides = [1, 1, 1]} : vector<2x18x72xf32> to vector<2x16x72xf32>
    %8 = vector.shape_cast %7 : vector<2x16x72xf32> to vector<32x72xf32>
    %9 = arith.truncf %8 : vector<32x72xf32> to vector<32x72xbf16>
    %c0_13 = arith.constant 0 : index
    %c0_14 = arith.constant 0 : index
    %10 = vector.load %arg5[%c0_13, %c0_14] : memref<72x256xbf16, #tpu.memory_space<vmem>>, vector<72x256xbf16>
    %cst_15 = arith.constant dense<0.000000e+00> : vector<32x256xf32>
    %11 = tpu.matmul %9, %10, %cst_15 {dimension_numbers = #tpu.dot_dimension_numbers<[1], [0], [0], [1], [0, 0, 1, 1], [], []>} : vector<32x72xbf16>, vector<72x256xbf16>, vector<32x256xf32> -> vector<32x256xf32>
    %12 = vector.extract_strided_slice %6 {offsets = [0, 1, 0], sizes = [2, 16, 72], strides = [1, 1, 1]} : vector<2x18x72xf32> to vector<2x16x72xf32>
    %13 = vector.shape_cast %12 : vector<2x16x72xf32> to vector<32x72xf32>
    %14 = arith.truncf %13 : vector<32x72xf32> to vector<32x72xbf16>
    %c0_16 = arith.constant 0 : index
    %c0_17 = arith.constant 0 : index
    %15 = vector.load %arg6[%c0_16, %c0_17] : memref<72x256xbf16, #tpu.memory_space<vmem>>, vector<72x256xbf16>
    %cst_18 = arith.constant dense<0.000000e+00> : vector<32x256xf32>
    %16 = tpu.matmul %14, %15, %cst_18 {dimension_numbers = #tpu.dot_dimension_numbers<[1], [0], [0], [1], [0, 0, 1, 1], [], []>} : vector<32x72xbf16>, vector<72x256xbf16>, vector<32x256xf32> -> vector<32x256xf32>
    %17 = arith.addf %11, %16 : vector<32x256xf32>
    %18 = vector.extract_strided_slice %6 {offsets = [0, 2, 0], sizes = [2, 16, 72], strides = [1, 1, 1]} : vector<2x18x72xf32> to vector<2x16x72xf32>
    %19 = vector.shape_cast %18 : vector<2x16x72xf32> to vector<32x72xf32>
    %20 = arith.truncf %19 : vector<32x72xf32> to vector<32x72xbf16>
    %c0_19 = arith.constant 0 : index
    %c0_20 = arith.constant 0 : index
    %21 = vector.load %arg7[%c0_19, %c0_20] : memref<72x256xbf16, #tpu.memory_space<vmem>>, vector<72x256xbf16>
    %cst_21 = arith.constant dense<0.000000e+00> : vector<32x256xf32>
    %22 = tpu.matmul %20, %21, %cst_21 {dimension_numbers = #tpu.dot_dimension_numbers<[1], [0], [0], [1], [0, 0, 1, 1], [], []>} : vector<32x72xbf16>, vector<72x256xbf16>, vector<32x256xf32> -> vector<32x256xf32>
    %23 = arith.addf %17, %22 : vector<32x256xf32>
    %cst_22 = arith.constant dense<0.000000e+00> : vector<256xf32>
    %24 = vector.multi_reduction <add>, %23, %cst_22 [0] : vector<32x256xf32> to vector<256xf32>
    %25 = vector.shape_cast %24 : vector<256xf32> to vector<1x256xf32>
    %26 = arith.mulf %23, %23 : vector<32x256xf32>
    %cst_23 = arith.constant dense<0.000000e+00> : vector<256xf32>
    %27 = vector.multi_reduction <add>, %26, %cst_23 [0] : vector<32x256xf32> to vector<256xf32>
    %28 = vector.shape_cast %27 : vector<256xf32> to vector<1x256xf32>
    %29 = tpu.concatenate %25, %28 in 0 : vector<1x256xf32>, vector<1x256xf32> -> vector<2x256xf32>
    %cst_24 = arith.constant dense<0.000000e+00> : vector<2x16xf32>
    %30 = tpu.matmul %29, %2, %cst_24 {dimension_numbers = #tpu.dot_dimension_numbers<[1], [0], [0], [1], [0, 0, 1, 1], [], []>} : vector<2x256xf32>, vector<256x16xf32>, vector<2x16xf32> -> vector<2x16xf32>
    %cst_25 = arith.constant 0.001953125 : f32
    %31 = vector.broadcast %cst_25 : f32 to vector<2x16xf32>
    %32 = arith.mulf %30, %31 : vector<2x16xf32>
    %33 = vector.extract_strided_slice %32 {offsets = [0, 0], sizes = [1, 16], strides = [1, 1]} : vector<2x16xf32> to vector<1x16xf32>
    %34 = vector.extract_strided_slice %32 {offsets = [1, 0], sizes = [1, 16], strides = [1, 1]} : vector<2x16xf32> to vector<1x16xf32>
    %35 = arith.mulf %33, %33 : vector<1x16xf32>
    %36 = arith.subf %34, %35 : vector<1x16xf32>
    %cst_26 = arith.constant 9.99999974E-6 : f32
    %37 = vector.broadcast %cst_26 : f32 to vector<1x16xf32>
    %38 = arith.addf %36, %37 : vector<1x16xf32>
    %39 = math.rsqrt %38 : vector<1x16xf32>
    %40 = tpu.concatenate %33, %39 in 0 : vector<1x16xf32>, vector<1x16xf32> -> vector<2x16xf32>
    %cst_27 = arith.constant dense<0.000000e+00> : vector<2x256xf32>
    %41 = tpu.matmul %40, %3, %cst_27 {dimension_numbers = #tpu.dot_dimension_numbers<[1], [0], [0], [1], [0, 0, 1, 1], [], []>} : vector<2x16xf32>, vector<16x256xf32>, vector<2x256xf32> -> vector<2x256xf32>
    %42 = vector.extract_strided_slice %41 {offsets = [0, 0], sizes = [1, 256], strides = [1, 1]} : vector<2x256xf32> to vector<1x256xf32>
    %43 = vector.broadcast %42 : vector<1x256xf32> to vector<32x256xf32>
    %44 = arith.subf %23, %43 : vector<32x256xf32>
    %45 = vector.extract_strided_slice %41 {offsets = [1, 0], sizes = [1, 256], strides = [1, 1]} : vector<2x256xf32> to vector<1x256xf32>
    %46 = vector.broadcast %45 : vector<1x256xf32> to vector<32x256xf32>
    %47 = arith.mulf %44, %46 : vector<32x256xf32>
    %48 = vector.extract_strided_slice %47 {offsets = [0, 0], sizes = [32, 128], strides = [1, 1]} : vector<32x256xf32> to vector<32x128xf32>
    %cst_28 = arith.constant 0.000000e+00 : f32
    %49 = vector.broadcast %cst_28 : f32 to vector<32x128xf32>
    %50 = arith.maximumf %48, %49 : vector<32x128xf32>
    %51 = vector.extract_strided_slice %47 {offsets = [0, 128], sizes = [32, 128], strides = [1, 1]} : vector<32x256xf32> to vector<32x128xf32>
    %52 = vector.shape_cast %50 : vector<32x128xf32> to vector<2x16x128xf32>
    %c0_29 = arith.constant 0 : index
    %c1 = arith.constant 1 : index
    %c0_30 = arith.constant 0 : index
    %53 = vector.load %arg18[%c0_29, %c1, %c0_30] : memref<2x18x144xf32, #tpu.memory_space<vmem>>, vector<2x16x128xf32>
    tpu.vector_store %arg18[%c0_29, %c1, %c0_30], %52 {strides = array<i32>} : memref<2x18x144xf32, #tpu.memory_space<vmem>>, vector<2x16x128xf32>,
    %c0_31 = arith.constant 0 : index
    %c0_32 = arith.constant 0 : index
    %c0_33 = arith.constant 0 : index
    %54 = vector.load %arg18[%c0_31, %c0_32, %c0_33] : memref<2x18x144xf32, #tpu.memory_space<vmem>>, vector<2x18x144xf32>
    %55 = vector.extract_strided_slice %54 {offsets = [0, 0, 0], sizes = [2, 16, 144], strides = [1, 1, 1]} : vector<2x18x144xf32> to vector<2x16x144xf32>
    %56 = vector.shape_cast %55 : vector<2x16x144xf32> to vector<32x144xf32>
    %57 = arith.truncf %56 : vector<32x144xf32> to vector<32x144xbf16>
    %c0_34 = arith.constant 0 : index
    %c0_35 = arith.constant 0 : index
    %58 = vector.load %arg8[%c0_34, %c0_35] : memref<144x128xbf16, #tpu.memory_space<vmem>>, vector<144x128xbf16>
    %cst_36 = arith.constant dense<0.000000e+00> : vector<32x128xf32>
    %59 = tpu.matmul %57, %58, %cst_36 {dimension_numbers = #tpu.dot_dimension_numbers<[1], [0], [0], [1], [0, 0, 1, 1], [], []>} : vector<32x144xbf16>, vector<144x128xbf16>, vector<32x128xf32> -> vector<32x128xf32>
    %60 = vector.extract_strided_slice %54 {offsets = [0, 1, 0], sizes = [2, 16, 144], strides = [1, 1, 1]} : vector<2x18x144xf32> to vector<2x16x144xf32>
    %61 = vector.shape_cast %60 : vector<2x16x144xf32> to vector<32x144xf32>
    %62 = arith.truncf %61 : vector<32x144xf32> to vector<32x144xbf16>
    %c0_37 = arith.constant 0 : index
    %c0_38 = arith.constant 0 : index
    %63 = vector.load %arg9[%c0_37, %c0_38] : memref<144x128xbf16, #tpu.memory_space<vmem>>, vector<144x128xbf16>
    %cst_39 = arith.constant dense<0.000000e+00> : vector<32x128xf32>
    %64 = tpu.matmul %62, %63, %cst_39 {dimension_numbers = #tpu.dot_dimension_numbers<[1], [0], [0], [1], [0, 0, 1, 1], [], []>} : vector<32x144xbf16>, vector<144x128xbf16>, vector<32x128xf32> -> vector<32x128xf32>
    %65 = arith.addf %59, %64 : vector<32x128xf32>
    %66 = vector.extract_strided_slice %54 {offsets = [0, 2, 0], sizes = [2, 16, 144], strides = [1, 1, 1]} : vector<2x18x144xf32> to vector<2x16x144xf32>
    %67 = vector.shape_cast %66 : vector<2x16x144xf32> to vector<32x144xf32>
    %68 = arith.truncf %67 : vector<32x144xf32> to vector<32x144xbf16>
    %c0_40 = arith.constant 0 : index
    %c0_41 = arith.constant 0 : index
    %69 = vector.load %arg10[%c0_40, %c0_41] : memref<144x128xbf16, #tpu.memory_space<vmem>>, vector<144x128xbf16>
    %cst_42 = arith.constant dense<0.000000e+00> : vector<32x128xf32>
    %70 = tpu.matmul %68, %69, %cst_42 {dimension_numbers = #tpu.dot_dimension_numbers<[1], [0], [0], [1], [0, 0, 1, 1], [], []>} : vector<32x144xbf16>, vector<144x128xbf16>, vector<32x128xf32> -> vector<32x128xf32>
    %71 = arith.addf %65, %70 : vector<32x128xf32>
    %cst_43 = arith.constant dense<0.000000e+00> : vector<128xf32>
    %72 = vector.multi_reduction <add>, %71, %cst_43 [0] : vector<32x128xf32> to vector<128xf32>
    %73 = vector.shape_cast %72 : vector<128xf32> to vector<1x128xf32>
    %74 = arith.mulf %71, %71 : vector<32x128xf32>
    %cst_44 = arith.constant dense<0.000000e+00> : vector<128xf32>
    %75 = vector.multi_reduction <add>, %74, %cst_44 [0] : vector<32x128xf32> to vector<128xf32>
    %76 = vector.shape_cast %75 : vector<128xf32> to vector<1x128xf32>
    %77 = tpu.concatenate %73, %76 in 0 : vector<1x128xf32>, vector<1x128xf32> -> vector<2x128xf32>
    %cst_45 = arith.constant dense<0.000000e+00> : vector<2x8xf32>
    %78 = tpu.matmul %77, %0, %cst_45 {dimension_numbers = #tpu.dot_dimension_numbers<[1], [0], [0], [1], [0, 0, 1, 1], [], []>} : vector<2x128xf32>, vector<128x8xf32>, vector<2x8xf32> -> vector<2x8xf32>
    %cst_46 = arith.constant 0.001953125 : f32
    %79 = vector.broadcast %cst_46 : f32 to vector<2x8xf32>
    %80 = arith.mulf %78, %79 : vector<2x8xf32>
    %81 = vector.extract_strided_slice %80 {offsets = [0, 0], sizes = [1, 8], strides = [1, 1]} : vector<2x8xf32> to vector<1x8xf32>
    %82 = vector.extract_strided_slice %80 {offsets = [1, 0], sizes = [1, 8], strides = [1, 1]} : vector<2x8xf32> to vector<1x8xf32>
    %83 = arith.mulf %81, %81 : vector<1x8xf32>
    %84 = arith.subf %82, %83 : vector<1x8xf32>
    %cst_47 = arith.constant 9.99999974E-6 : f32
    %85 = vector.broadcast %cst_47 : f32 to vector<1x8xf32>
    %86 = arith.addf %84, %85 : vector<1x8xf32>
    %87 = math.rsqrt %86 : vector<1x8xf32>
    %88 = tpu.concatenate %81, %87 in 0 : vector<1x8xf32>, vector<1x8xf32> -> vector<2x8xf32>
    %cst_48 = arith.constant dense<0.000000e+00> : vector<2x128xf32>
    %89 = tpu.matmul %88, %1, %cst_48 {dimension_numbers = #tpu.dot_dimension_numbers<[1], [0], [0], [1], [0, 0, 1, 1], [], []>} : vector<2x8xf32>, vector<8x128xf32>, vector<2x128xf32> -> vector<2x128xf32>
    %90 = vector.extract_strided_slice %89 {offsets = [0, 0], sizes = [1, 128], strides = [1, 1]} : vector<2x128xf32> to vector<1x128xf32>
    %91 = vector.broadcast %90 : vector<1x128xf32> to vector<32x128xf32>
    %92 = arith.subf %71, %91 : vector<32x128xf32>
    %93 = vector.extract_strided_slice %89 {offsets = [1, 0], sizes = [1, 128], strides = [1, 1]} : vector<2x128xf32> to vector<1x128xf32>
    %94 = vector.broadcast %93 : vector<1x128xf32> to vector<32x128xf32>
    %95 = arith.mulf %92, %94 : vector<32x128xf32>
    %96 = arith.addf %95, %51 : vector<32x128xf32>
    %cst_49 = arith.constant 0.000000e+00 : f32
    %97 = vector.broadcast %cst_49 : f32 to vector<32x128xf32>
    %98 = arith.maximumf %96, %97 : vector<32x128xf32>
    %99 = vector.shape_cast %98 : vector<32x128xf32> to vector<2x16x128xf32>
    %c0_50 = arith.constant 0 : index
    %c1_51 = arith.constant 1 : index
    %c0_52 = arith.constant 0 : index
    %100 = vector.load %arg18[%c0_50, %c1_51, %c0_52] : memref<2x18x144xf32, #tpu.memory_space<vmem>>, vector<2x16x128xf32>
    tpu.vector_store %arg18[%c0_50, %c1_51, %c0_52], %99 {strides = array<i32>} : memref<2x18x144xf32, #tpu.memory_space<vmem>>, vector<2x16x128xf32>,
    %c0_53 = arith.constant 0 : index
    %c0_54 = arith.constant 0 : index
    %c0_55 = arith.constant 0 : index
    %101 = vector.load %arg18[%c0_53, %c0_54, %c0_55] : memref<2x18x144xf32, #tpu.memory_space<vmem>>, vector<2x18x144xf32>
    %102 = vector.extract_strided_slice %101 {offsets = [0, 0, 0], sizes = [2, 16, 144], strides = [1, 1, 1]} : vector<2x18x144xf32> to vector<2x16x144xf32>
    %103 = vector.shape_cast %102 : vector<2x16x144xf32> to vector<32x144xf32>
    %104 = arith.truncf %103 : vector<32x144xf32> to vector<32x144xbf16>
    %c0_56 = arith.constant 0 : index
    %c0_57 = arith.constant 0 : index
    %105 = vector.load %arg11[%c0_56, %c0_57] : memref<144x256xbf16, #tpu.memory_space<vmem>>, vector<144x256xbf16>
    %cst_58 = arith.constant dense<0.000000e+00> : vector<32x256xf32>
    %106 = tpu.matmul %104, %105, %cst_58 {dimension_numbers = #tpu.dot_dimension_numbers<[1], [0], [0], [1], [0, 0, 1, 1], [], []>} : vector<32x144xbf16>, vector<144x256xbf16>, vector<32x256xf32> -> vector<32x256xf32>
    %107 = vector.extract_strided_slice %101 {offsets = [0, 1, 0], sizes = [2, 16, 144], strides = [1, 1, 1]} : vector<2x18x144xf32> to vector<2x16x144xf32>
    %108 = vector.shape_cast %107 : vector<2x16x144xf32> to vector<32x144xf32>
    %109 = arith.truncf %108 : vector<32x144xf32> to vector<32x144xbf16>
    %c0_59 = arith.constant 0 : index
    %c0_60 = arith.constant 0 : index
    %110 = vector.load %arg12[%c0_59, %c0_60] : memref<144x256xbf16, #tpu.memory_space<vmem>>, vector<144x256xbf16>
    %cst_61 = arith.constant dense<0.000000e+00> : vector<32x256xf32>
    %111 = tpu.matmul %109, %110, %cst_61 {dimension_numbers = #tpu.dot_dimension_numbers<[1], [0], [0], [1], [0, 0, 1, 1], [], []>} : vector<32x144xbf16>, vector<144x256xbf16>, vector<32x256xf32> -> vector<32x256xf32>
    %112 = arith.addf %106, %111 : vector<32x256xf32>
    %113 = vector.extract_strided_slice %101 {offsets = [0, 2, 0], sizes = [2, 16, 144], strides = [1, 1, 1]} : vector<2x18x144xf32> to vector<2x16x144xf32>
    %114 = vector.shape_cast %113 : vector<2x16x144xf32> to vector<32x144xf32>
    %115 = arith.truncf %114 : vector<32x144xf32> to vector<32x144xbf16>
    %c0_62 = arith.constant 0 : index
    %c0_63 = arith.constant 0 : index
    %116 = vector.load %arg13[%c0_62, %c0_63] : memref<144x256xbf16, #tpu.memory_space<vmem>>, vector<144x256xbf16>
    %cst_64 = arith.constant dense<0.000000e+00> : vector<32x256xf32>
    %117 = tpu.matmul %115, %116, %cst_64 {dimension_numbers = #tpu.dot_dimension_numbers<[1], [0], [0], [1], [0, 0, 1, 1], [], []>} : vector<32x144xbf16>, vector<144x256xbf16>, vector<32x256xf32> -> vector<32x256xf32>
    %118 = arith.addf %112, %117 : vector<32x256xf32>
    %cst_65 = arith.constant dense<0.000000e+00> : vector<256xf32>
    %119 = vector.multi_reduction <add>, %118, %cst_65 [0] : vector<32x256xf32> to vector<256xf32>
    %120 = vector.shape_cast %119 : vector<256xf32> to vector<1x256xf32>
    %121 = arith.mulf %118, %118 : vector<32x256xf32>
    %cst_66 = arith.constant dense<0.000000e+00> : vector<256xf32>
    %122 = vector.multi_reduction <add>, %121, %cst_66 [0] : vector<32x256xf32> to vector<256xf32>
    %123 = vector.shape_cast %122 : vector<256xf32> to vector<1x256xf32>
    %124 = tpu.concatenate %120, %123 in 0 : vector<1x256xf32>, vector<1x256xf32> -> vector<2x256xf32>
    %cst_67 = arith.constant dense<0.000000e+00> : vector<2x16xf32>
    %125 = tpu.matmul %124, %2, %cst_67 {dimension_numbers = #tpu.dot_dimension_numbers<[1], [0], [0], [1], [0, 0, 1, 1], [], []>} : vector<2x256xf32>, vector<256x16xf32>, vector<2x16xf32> -> vector<2x16xf32>
    %cst_68 = arith.constant 0.001953125 : f32
    %126 = vector.broadcast %cst_68 : f32 to vector<2x16xf32>
    %127 = arith.mulf %125, %126 : vector<2x16xf32>
    %128 = vector.extract_strided_slice %127 {offsets = [0, 0], sizes = [1, 16], strides = [1, 1]} : vector<2x16xf32> to vector<1x16xf32>
    %129 = vector.extract_strided_slice %127 {offsets = [1, 0], sizes = [1, 16], strides = [1, 1]} : vector<2x16xf32> to vector<1x16xf32>
    %130 = arith.mulf %128, %128 : vector<1x16xf32>
    %131 = arith.subf %129, %130 : vector<1x16xf32>
    %cst_69 = arith.constant 9.99999974E-6 : f32
    %132 = vector.broadcast %cst_69 : f32 to vector<1x16xf32>
    %133 = arith.addf %131, %132 : vector<1x16xf32>
    %134 = math.rsqrt %133 : vector<1x16xf32>
    %135 = tpu.concatenate %128, %134 in 0 : vector<1x16xf32>, vector<1x16xf32> -> vector<2x16xf32>
    %cst_70 = arith.constant dense<0.000000e+00> : vector<2x256xf32>
    %136 = tpu.matmul %135, %3, %cst_70 {dimension_numbers = #tpu.dot_dimension_numbers<[1], [0], [0], [1], [0, 0, 1, 1], [], []>} : vector<2x16xf32>, vector<16x256xf32>, vector<2x256xf32> -> vector<2x256xf32>
    %137 = vector.extract_strided_slice %136 {offsets = [0, 0], sizes = [1, 256], strides = [1, 1]} : vector<2x256xf32> to vector<1x256xf32>
    %138 = vector.broadcast %137 : vector<1x256xf32> to vector<32x256xf32>
    %139 = arith.subf %118, %138 : vector<32x256xf32>
    %140 = vector.extract_strided_slice %136 {offsets = [1, 0], sizes = [1, 256], strides = [1, 1]} : vector<2x256xf32> to vector<1x256xf32>
    %141 = vector.broadcast %140 : vector<1x256xf32> to vector<32x256xf32>
    %142 = arith.mulf %139, %141 : vector<32x256xf32>
    %143 = vector.extract_strided_slice %142 {offsets = [0, 0], sizes = [32, 128], strides = [1, 1]} : vector<32x256xf32> to vector<32x128xf32>
    %cst_71 = arith.constant 0.000000e+00 : f32
    %144 = vector.broadcast %cst_71 : f32 to vector<32x128xf32>
    %145 = arith.maximumf %143, %144 : vector<32x128xf32>
    %146 = vector.extract_strided_slice %142 {offsets = [0, 128], sizes = [32, 128], strides = [1, 1]} : vector<32x256xf32> to vector<32x128xf32>
    %147 = vector.shape_cast %145 : vector<32x128xf32> to vector<2x16x128xf32>
    %c0_72 = arith.constant 0 : index
    %c1_73 = arith.constant 1 : index
    %c0_74 = arith.constant 0 : index
    %148 = vector.load %arg18[%c0_72, %c1_73, %c0_74] : memref<2x18x144xf32, #tpu.memory_space<vmem>>, vector<2x16x128xf32>
    tpu.vector_store %arg18[%c0_72, %c1_73, %c0_74], %147 {strides = array<i32>} : memref<2x18x144xf32, #tpu.memory_space<vmem>>, vector<2x16x128xf32>,
    %c0_75 = arith.constant 0 : index
    %c0_76 = arith.constant 0 : index
    %c0_77 = arith.constant 0 : index
    %149 = vector.load %arg18[%c0_75, %c0_76, %c0_77] : memref<2x18x144xf32, #tpu.memory_space<vmem>>, vector<2x18x144xf32>
    %150 = vector.extract_strided_slice %149 {offsets = [0, 0, 0], sizes = [2, 16, 144], strides = [1, 1, 1]} : vector<2x18x144xf32> to vector<2x16x144xf32>
    %151 = vector.shape_cast %150 : vector<2x16x144xf32> to vector<32x144xf32>
    %152 = arith.truncf %151 : vector<32x144xf32> to vector<32x144xbf16>
    %c0_78 = arith.constant 0 : index
    %c0_79 = arith.constant 0 : index
    %153 = vector.load %arg14[%c0_78, %c0_79] : memref<144x128xbf16, #tpu.memory_space<vmem>>, vector<144x128xbf16>
    %cst_80 = arith.constant dense<0.000000e+00> : vector<32x128xf32>
    %154 = tpu.matmul %152, %153, %cst_80 {dimension_numbers = #tpu.dot_dimension_numbers<[1], [0], [0], [1], [0, 0, 1, 1], [], []>} : vector<32x144xbf16>, vector<144x128xbf16>, vector<32x128xf32> -> vector<32x128xf32>
    %155 = vector.extract_strided_slice %149 {offsets = [0, 1, 0], sizes = [2, 16, 144], strides = [1, 1, 1]} : vector<2x18x144xf32> to vector<2x16x144xf32>
    %156 = vector.shape_cast %155 : vector<2x16x144xf32> to vector<32x144xf32>
    %157 = arith.truncf %156 : vector<32x144xf32> to vector<32x144xbf16>
    %c0_81 = arith.constant 0 : index
    %c0_82 = arith.constant 0 : index
    %158 = vector.load %arg15[%c0_81, %c0_82] : memref<144x128xbf16, #tpu.memory_space<vmem>>, vector<144x128xbf16>
    %cst_83 = arith.constant dense<0.000000e+00> : vector<32x128xf32>
    %159 = tpu.matmul %157, %158, %cst_83 {dimension_numbers = #tpu.dot_dimension_numbers<[1], [0], [0], [1], [0, 0, 1, 1], [], []>} : vector<32x144xbf16>, vector<144x128xbf16>, vector<32x128xf32> -> vector<32x128xf32>
    %160 = arith.addf %154, %159 : vector<32x128xf32>
    %161 = vector.extract_strided_slice %149 {offsets = [0, 2, 0], sizes = [2, 16, 144], strides = [1, 1, 1]} : vector<2x18x144xf32> to vector<2x16x144xf32>
    %162 = vector.shape_cast %161 : vector<2x16x144xf32> to vector<32x144xf32>
    %163 = arith.truncf %162 : vector<32x144xf32> to vector<32x144xbf16>
    %c0_84 = arith.constant 0 : index
    %c0_85 = arith.constant 0 : index
    %164 = vector.load %arg16[%c0_84, %c0_85] : memref<144x128xbf16, #tpu.memory_space<vmem>>, vector<144x128xbf16>
    %cst_86 = arith.constant dense<0.000000e+00> : vector<32x128xf32>
    %165 = tpu.matmul %163, %164, %cst_86 {dimension_numbers = #tpu.dot_dimension_numbers<[1], [0], [0], [1], [0, 0, 1, 1], [], []>} : vector<32x144xbf16>, vector<144x128xbf16>, vector<32x128xf32> -> vector<32x128xf32>
    %166 = arith.addf %160, %165 : vector<32x128xf32>
    %cst_87 = arith.constant dense<0.000000e+00> : vector<128xf32>
    %167 = vector.multi_reduction <add>, %166, %cst_87 [0] : vector<32x128xf32> to vector<128xf32>
    %168 = vector.shape_cast %167 : vector<128xf32> to vector<1x128xf32>
    %169 = arith.mulf %166, %166 : vector<32x128xf32>
    %cst_88 = arith.constant dense<0.000000e+00> : vector<128xf32>
    %170 = vector.multi_reduction <add>, %169, %cst_88 [0] : vector<32x128xf32> to vector<128xf32>
    %171 = vector.shape_cast %170 : vector<128xf32> to vector<1x128xf32>
    %172 = tpu.concatenate %168, %171 in 0 : vector<1x128xf32>, vector<1x128xf32> -> vector<2x128xf32>
    %cst_89 = arith.constant dense<0.000000e+00> : vector<2x8xf32>
    %173 = tpu.matmul %172, %0, %cst_89 {dimension_numbers = #tpu.dot_dimension_numbers<[1], [0], [0], [1], [0, 0, 1, 1], [], []>} : vector<2x128xf32>, vector<128x8xf32>, vector<2x8xf32> -> vector<2x8xf32>
    %cst_90 = arith.constant 0.001953125 : f32
    %174 = vector.broadcast %cst_90 : f32 to vector<2x8xf32>
    %175 = arith.mulf %173, %174 : vector<2x8xf32>
    %176 = vector.extract_strided_slice %175 {offsets = [0, 0], sizes = [1, 8], strides = [1, 1]} : vector<2x8xf32> to vector<1x8xf32>
    %177 = vector.extract_strided_slice %175 {offsets = [1, 0], sizes = [1, 8], strides = [1, 1]} : vector<2x8xf32> to vector<1x8xf32>
    %178 = arith.mulf %176, %176 : vector<1x8xf32>
    %179 = arith.subf %177, %178 : vector<1x8xf32>
    %cst_91 = arith.constant 9.99999974E-6 : f32
    %180 = vector.broadcast %cst_91 : f32 to vector<1x8xf32>
    %181 = arith.addf %179, %180 : vector<1x8xf32>
    %182 = math.rsqrt %181 : vector<1x8xf32>
    %183 = tpu.concatenate %176, %182 in 0 : vector<1x8xf32>, vector<1x8xf32> -> vector<2x8xf32>
    %cst_92 = arith.constant dense<0.000000e+00> : vector<2x128xf32>
    %184 = tpu.matmul %183, %1, %cst_92 {dimension_numbers = #tpu.dot_dimension_numbers<[1], [0], [0], [1], [0, 0, 1, 1], [], []>} : vector<2x8xf32>, vector<8x128xf32>, vector<2x128xf32> -> vector<2x128xf32>
    %185 = vector.extract_strided_slice %184 {offsets = [0, 0], sizes = [1, 128], strides = [1, 1]} : vector<2x128xf32> to vector<1x128xf32>
    %186 = vector.broadcast %185 : vector<1x128xf32> to vector<32x128xf32>
    %187 = arith.subf %166, %186 : vector<32x128xf32>
    %188 = vector.extract_strided_slice %184 {offsets = [1, 0], sizes = [1, 128], strides = [1, 1]} : vector<2x128xf32> to vector<1x128xf32>
    %189 = vector.broadcast %188 : vector<1x128xf32> to vector<32x128xf32>
    %190 = arith.mulf %187, %189 : vector<32x128xf32>
    %191 = arith.addf %190, %146 : vector<32x128xf32>
    %cst_93 = arith.constant 0.000000e+00 : f32
    %192 = vector.broadcast %cst_93 : f32 to vector<32x128xf32>
    %193 = arith.maximumf %191, %192 : vector<32x128xf32>
    %194 = vector.shape_cast %193 : vector<32x128xf32> to vector<2x16x128xf32>
    %c0_94 = arith.constant 0 : index
    %c0_95 = arith.constant 0 : index
    %c0_96 = arith.constant 0 : index
    %195 = vector.load %arg17[%c0_94, %c0_95, %c0_96] : memref<2x16x128xf32, #tpu.memory_space<vmem>>, vector<2x16x128xf32>
    tpu.vector_store %arg17[%c0_94, %c0_95, %c0_96], %194 {strides = array<i32>} : memref<2x16x128xf32, #tpu.memory_space<vmem>>, vector<2x16x128xf32>,
    return
  }
}

</mosaic_0001>

<llo_original>
// kernel: res_layer_forward.1
$region0: #{res_layer_forward.1}
  #allocation0 [shape = 'u32[]', space=smem, size = 0x4, offset = 0x4, fixed_abs, tag = 'smem constant byte address 0x4 - core index']
  #allocation1 [shape = 'u32[144,128]{1,0:T(1,128)}', space=vmem, size = 0x12000, scoped, tag = 'internal scratch']
  #allocation2 [shape = 'f32[2,18,144]{2,1,0:T(8,128)}', space=vmem, size = 0xc000, scoped, tag = 'scratch operand']
  %s0 = inlined_call_operand.vmem [shape: f32[2,18,72], index: 0, kind: input, shape index: {}]
  %s1 = inlined_call_operand.vmem [shape: f32[128,8], index: 1, kind: input, shape index: {}]
  %s2 = inlined_call_operand.vmem [shape: f32[8,128], index: 2, kind: input, shape index: {}]
  %s3 = inlined_call_operand.vmem [shape: f32[256,16], index: 3, kind: input, shape index: {}]
  %s4 = inlined_call_operand.vmem [shape: f32[16,256], index: 4, kind: input, shape index: {}]
  %s5 = inlined_call_operand.vmem [shape: bf16[72,256], index: 5, kind: input, shape index: {}]
  %s6 = inlined_call_operand.vmem [shape: bf16[72,256], index: 6, kind: input, shape index: {}]
  %s7 = inlined_call_operand.vmem [shape: bf16[72,256], index: 7, kind: input, shape index: {}]
  %s8 = inlined_call_operand.vmem [shape: bf16[144,128], index: 8, kind: input, shape index: {}]
  %s9 = inlined_call_operand.vmem [shape: bf16[144,128], index: 9, kind: input, shape index: {}]
  %s10 = inlined_call_operand.vmem [shape: bf16[144,128], index: 10, kind: input, shape index: {}]
  %s11 = inlined_call_operand.vmem [shape: bf16[144,256], index: 11, kind: input, shape index: {}]
  %s12 = inlined_call_operand.vmem [shape: bf16[144,256], index: 12, kind: input, shape index: {}]
  %s13 = inlined_call_operand.vmem [shape: bf16[144,256], index: 13, kind: input, shape index: {}]
  %s14 = inlined_call_operand.vmem [shape: bf16[144,128], index: 14, kind: input, shape index: {}]
  %s15 = inlined_call_operand.vmem [shape: bf16[144,128], index: 15, kind: input, shape index: {}]
  %s16 = inlined_call_operand.vmem [shape: bf16[144,128], index: 16, kind: input, shape index: {}]
  %s17 = inlined_call_operand.vmem [shape: f32[2,16,128], index: 17, kind: output, shape index: {}]
  %s18 = sld [smem:[#allocation0]]
  $region78: #{res_layer_forward.1} parent=0
    _
  %s20 = ssub.s32 1, %s18
  %s21 = scalar_select 0, %s20, %s18
  // Predicated region
  $region2: #{res_layer_forward.1} parent=0 // pred_check
    _
  $region3: #{res_layer_forward.1} parent=0 // pred_check_branch
    %23 = sbr.rel (0) target = $region5
  $region4: #{res_layer_forward.1} parent=0 // pred_region
    _
  $region5: #{res_layer_forward.1} parent=0 // pred_fallthru
    _
  // Predicated region
  $region6: #{res_layer_forward.1} parent=0 // pred_check
    _
  $region7: #{res_layer_forward.1} parent=0 // pred_check_branch
    %25 = sbr.rel (0) target = $region9
  $region8: #{res_layer_forward.1} parent=0 // pred_region
    _
  $region9: #{res_layer_forward.1} parent=0 // pred_fallthru
    _
  // Predicated region
  $region10: #{res_layer_forward.1} parent=0 // pred_check
    _
  $region11: #{res_layer_forward.1} parent=0 // pred_check_branch
    %27 = sbr.rel (0) target = $region13
  $region12: #{res_layer_forward.1} parent=0 // pred_region
    _
  $region13: #{res_layer_forward.1} parent=0 // pred_fallthru
    _
  // Predicated region
  $region14: #{res_layer_forward.1} parent=0 // pred_check
    _
  $region15: #{res_layer_forward.1} parent=0 // pred_check_branch
    %29 = sbr.rel (0) target = $region17
  $region16: #{res_layer_forward.1} parent=0 // pred_region
    _
  $region17: #{res_layer_forward.1} parent=0 // pred_fallthru
    _
  // Predicated region
  $region18: #{res_layer_forward.1} parent=0 // pred_check
    _
  $region19: #{res_layer_forward.1} parent=0 // pred_check_branch
    %31 = sbr.rel (0) target = $region21
  $region20: #{res_layer_forward.1} parent=0 // pred_region
    _
  $region21: #{res_layer_forward.1} parent=0 // pred_fallthru
    _
  // Predicated region
  $region22: #{res_layer_forward.1} parent=0 // pred_check
    _
  $region23: #{res_layer_forward.1} parent=0 // pred_check_branch
    %33 = sbr.rel (0) target = $region25
  $region24: #{res_layer_forward.1} parent=0 // pred_region
    _
  $region25: #{res_layer_forward.1} parent=0 // pred_fallthru
    _
  // Predicated region
  $region26: #{res_layer_forward.1} parent=0 // pred_check
    _
  $region27: #{res_layer_forward.1} parent=0 // pred_check_branch
    %35 = sbr.rel (0) target = $region29
  $region28: #{res_layer_forward.1} parent=0 // pred_region
    _
  $region29: #{res_layer_forward.1} parent=0 // pred_fallthru
    _
  // Predicated region
  $region30: #{res_layer_forward.1} parent=0 // pred_check
    _
  $region31: #{res_layer_forward.1} parent=0 // pred_check_branch
    %37 = sbr.rel (0) target = $region33
  $region32: #{res_layer_forward.1} parent=0 // pred_region
    _
  $region33: #{res_layer_forward.1} parent=0 // pred_fallthru
    _
  // Predicated region
  $region34: #{res_layer_forward.1} parent=0 // pred_check
    _
  $region35: #{res_layer_forward.1} parent=0 // pred_check_branch
    %39 = sbr.rel (0) target = $region37
  $region36: #{res_layer_forward.1} parent=0 // pred_region
    _
  $region37: #{res_layer_forward.1} parent=0 // pred_fallthru
    _
  // Predicated region
  $region38: #{res_layer_forward.1} parent=0 // pred_check
    _
  $region39: #{res_layer_forward.1} parent=0 // pred_check_branch
    %41 = sbr.rel (0) target = $region41
  $region40: #{res_layer_forward.1} parent=0 // pred_region
    _
  $region41: #{res_layer_forward.1} parent=0 // pred_fallthru
    _
  // Predicated region
  $region42: #{res_layer_forward.1} parent=0 // pred_check
    _
  $region43: #{res_layer_forward.1} parent=0 // pred_check_branch
    %43 = sbr.rel (0) target = $region45
  $region44: #{res_layer_forward.1} parent=0 // pred_region
    _
  $region45: #{res_layer_forward.1} parent=0 // pred_fallthru
    _
  // Predicated region
  $region46: #{res_layer_forward.1} parent=0 // pred_check
    _
  $region47: #{res_layer_forward.1} parent=0 // pred_check_branch
    %45 = sbr.rel (0) target = $region49
  $region48: #{res_layer_forward.1} parent=0 // pred_region
    _
  $region49: #{res_layer_forward.1} parent=0 // pred_fallthru
    _
  // Predicated region
  $region50: #{res_layer_forward.1} parent=0 // pred_check
    _
  $region51: #{res_layer_forward.1} parent=0 // pred_check_branch
    %47 = sbr.rel (0) target = $region53
  $region52: #{res_layer_forward.1} parent=0 // pred_region
    _
  $region53: #{res_layer_forward.1} parent=0 // pred_fallthru
    _
  // Predicated region
  $region54: #{res_layer_forward.1} parent=0 // pred_check
    _
  $region55: #{res_layer_forward.1} parent=0 // pred_check_branch
    %49 = sbr.rel (0) target = $region57
  $region56: #{res_layer_forward.1} parent=0 // pred_region
    _
  $region57: #{res_layer_forward.1} parent=0 // pred_fallthru
    _
  // Predicated region
  $region58: #{res_layer_forward.1} parent=0 // pred_check
    _
  $region59: #{res_layer_forward.1} parent=0 // pred_check_branch
    %51 = sbr.rel (0) target = $region61
  $region60: #{res_layer_forward.1} parent=0 // pred_region
    _
  $region61: #{res_layer_forward.1} parent=0 // pred_fallthru
    _
  // Predicated region
  $region62: #{res_layer_forward.1} parent=0 // pred_check
    _
  $region63: #{res_layer_forward.1} parent=0 // pred_check_branch
    %53 = sbr.rel (0) target = $region65
  $region64: #{res_layer_forward.1} parent=0 // pred_region
    _
  $region65: #{res_layer_forward.1} parent=0 // pred_fallthru
    _
  // Predicated region
  $region66: #{res_layer_forward.1} parent=0 // pred_check
    _
  $region67: #{res_layer_forward.1} parent=0 // pred_check_branch
    %55 = sbr.rel (0) target = $region69
  $region68: #{res_layer_forward.1} parent=0 // pred_region
    _
  $region69: #{res_layer_forward.1} parent=0 // pred_fallthru
    _
  %v57 = vld [vmem:[%s1] sm:$0xff]
  %v58 = vld [vmem:[%s1 + $0x8] sm:$0xff]
  %v59 = vld [vmem:[%s1 + $0x10] sm:$0xff]
  %v60 = vld [vmem:[%s1 + $0x18] sm:$0xff]
  %v61 = vld [vmem:[%s1 + $0x20] sm:$0xff]
  %v62 = vld [vmem:[%s1 + $0x28] sm:$0xff]
  %v63 = vld [vmem:[%s1 + $0x30] sm:$0xff]
  %v64 = vld [vmem:[%s1 + $0x38] sm:$0xff]
  %v65 = vld [vmem:[%s1 + $0x40] sm:$0xff]
  %v66 = vld [vmem:[%s1 + $0x48] sm:$0xff]
  %v67 = vld [vmem:[%s1 + $0x50] sm:$0xff]
  %v68 = vld [vmem:[%s1 + $0x58] sm:$0xff]
  %v69 = vld [vmem:[%s1 + $0x60] sm:$0xff]
  %v70 = vld [vmem:[%s1 + $0x68] sm:$0xff]
  %v71 = vld [vmem:[%s1 + $0x70] sm:$0xff]
  %v72 = vld [vmem:[%s1 + $0x78] sm:$0xff]
  %v73 = vld [vmem:[%s2] sm:$0xff]
  %v74 = vld [vmem:[%s3] sm:$0xff]
  %v75 = vld [vmem:[%s3 + $0x8] sm:$0xff]
  %v76 = vld [vmem:[%s3 + $0x10] sm:$0xff]
  %v77 = vld [vmem:[%s3 + $0x18] sm:$0xff]
  %v78 = vld [vmem:[%s3 + $0x20] sm:$0xff]
  %v79 = vld [vmem:[%s3 + $0x28] sm:$0xff]
  %v80 = vld [vmem:[%s3 + $0x30] sm:$0xff]
  %v81 = vld [vmem:[%s3 + $0x38] sm:$0xff]
  %v82 = vld [vmem:[%s3 + $0x40] sm:$0xff]
  %v83 = vld [vmem:[%s3 + $0x48] sm:$0xff]
  %v84 = vld [vmem:[%s3 + $0x50] sm:$0xff]
  %v85 = vld [vmem:[%s3 + $0x58] sm:$0xff]
  %v86 = vld [vmem:[%s3 + $0x60] sm:$0xff]
  %v87 = vld [vmem:[%s3 + $0x68] sm:$0xff]
  %v88 = vld [vmem:[%s3 + $0x70] sm:$0xff]
  %v89 = vld [vmem:[%s3 + $0x78] sm:$0xff]
  %v90 = vld [vmem:[%s3 + $0x80] sm:$0xff]
  %v91 = vld [vmem:[%s3 + $0x88] sm:$0xff]
  %v92 = vld [vmem:[%s3 + $0x90] sm:$0xff]
  %v93 = vld [vmem:[%s3 + $0x98] sm:$0xff]
  %v94 = vld [vmem:[%s3 + $0xa0] sm:$0xff]
  %v95 = vld [vmem:[%s3 + $0xa8] sm:$0xff]
  %v96 = vld [vmem:[%s3 + $0xb0] sm:$0xff]
  %v97 = vld [vmem:[%s3 + $0xb8] sm:$0xff]
  %v98 = vld [vmem:[%s3 + $0xc0] sm:$0xff]
  %v99 = vld [vmem:[%s3 + $0xc8] sm:$0xff]
  %v100 = vld [vmem:[%s3 + $0xd0] sm:$0xff]
  %v101 = vld [vmem:[%s3 + $0xd8] sm:$0xff]
  %v102 = vld [vmem:[%s3 + $0xe0] sm:$0xff]
  %v103 = vld [vmem:[%s3 + $0xe8] sm:$0xff]
  %v104 = vld [vmem:[%s3 + $0xf0] sm:$0xff]
  %v105 = vld [vmem:[%s3 + $0xf8] sm:$0xff]
  %v106 = vld [vmem:[%s4] sm:$0xff]
  %v107 = vld [vmem:[%s4 + $0x8] sm:$0xff]
  %v108 = vld [vmem:[%s4 + $0x10] sm:$0xff]
  %v109 = vld [vmem:[%s4 + $0x18] sm:$0xff]
  %110 = vst [vmem:[#allocation2] sm:$0xff] 0.0
  %vm111 = vcmask 130048
  %112 = vst.msk [vmem:[#allocation2 + $0x8] sm:$0xff] %vm111, 0.0
  %113 = vst [vmem:[#allocation2 + $0x10] sm:$0xff] 0.0
  %114 = vst.msk [vmem:[#allocation2 + $0x18] sm:$0xff] %vm111, 0.0
  %115 = vst [vmem:[#allocation2 + $0x20] sm:$0x3] 0.0
  %vm116 = vcmask 123904
  %117 = vst.msk [vmem:[#allocation2 + $0x28] sm:$0x3] %vm116, 0.0
  %118 = vst [vmem:[#allocation2 + $0x30] sm:$0xff] 0.0
  %119 = vst.msk [vmem:[#allocation2 + $0x38] sm:$0xff] %vm111, 0.0
  %120 = vst [vmem:[#allocation2 + $0x40] sm:$0xff] 0.0
  %121 = vst.msk [vmem:[#allocation2 + $0x48] sm:$0xff] %vm111, 0.0
  %122 = vst [vmem:[#allocation2 + $0x50] sm:$0x3] 0.0
  %123 = vst.msk [vmem:[#allocation2 + $0x58] sm:$0x3] %vm116, 0.0
  %v124 = vld [vmem:[%s0] sm:$0xff]
  %v125 = vld [vmem:[%s0 + $0x8] sm:$0xff]
  %v126 = vld [vmem:[%s0 + $0x10] sm:$0x3]
  %v127 = vld [vmem:[%s0 + $0x18] sm:$0xff]
  %v128 = vld [vmem:[%s0 + $0x20] sm:$0xff]
  %v129 = vld [vmem:[%s0 + $0x28] sm:$0x3]
  %v130 = vpack.c.bf16 %v125, %v124
  %v131 = vpack.c.bf16 %v128, %v127
  %v132 = vld [vmem:[%s5] sm:$0xff]
  %v133 = vld [vmem:[%s5 + $0x8] sm:$0xff]
  %v134 = vld [vmem:[%s5 + $0x10] sm:$0xff]
  %v135 = vld [vmem:[%s5 + $0x18] sm:$0xff]
  %v136 = vld [vmem:[%s5 + $0x20] sm:$0xff]
  %v137 = vld [vmem:[%s5 + $0x28] sm:$0xff]
  %v138 = vld [vmem:[%s5 + $0x30] sm:$0xff]
  %v139 = vld [vmem:[%s5 + $0x38] sm:$0xff]
  %v140 = vld [vmem:[%s5 + $0x40] sm:$0xff]
  %vm147 = vcmask 1046528
  %v148 = vrot.slane %v124, 1
  %v149 = vrot.slane %v125, 1
  %v150 = vsel %vm147, %v148, %v149
  %v151 = vrot.slane %v126, 1
  %v152 = vsel %vm147, %v149, %v151
  %v153 = vrot.slane %v127, 1
  %v154 = vrot.slane %v128, 1
  %v155 = vsel %vm147, %v153, %v154
  %v156 = vrot.slane %v129, 1
  %v157 = vsel %vm147, %v154, %v156
  %v162 = vpack.c.bf16 %v152, %v150
  %v163 = vpack.c.bf16 %v157, %v155
  %v164 = vld [vmem:[%s6] sm:$0xff]
  %v165 = vld [vmem:[%s6 + $0x8] sm:$0xff]
  %v166 = vld [vmem:[%s6 + $0x10] sm:$0xff]
  %v167 = vld [vmem:[%s6 + $0x18] sm:$0xff]
  %v168 = vld [vmem:[%s6 + $0x20] sm:$0xff]
  %v169 = vld [vmem:[%s6 + $0x28] sm:$0xff]
  %v170 = vld [vmem:[%s6 + $0x30] sm:$0xff]
  %v171 = vld [vmem:[%s6 + $0x38] sm:$0xff]
  %v172 = vld [vmem:[%s6 + $0x40] sm:$0xff]
  %v182 = vunpack.c.l.b16 %v164
  %v183 = vunpack.c.h.b16 %v164
  %v184 = vunpack.c.l.b16 %v165
  %v185 = vunpack.c.h.b16 %v165
  %v186 = vunpack.c.l.b16 %v166
  %v187 = vunpack.c.h.b16 %v166
  %v188 = vunpack.c.l.b16 %v167
  %v189 = vunpack.c.h.b16 %v167
  %v190 = vunpack.c.l.b16 %v168
  %v191 = vunpack.c.h.b16 %v168
  %v192 = vunpack.c.l.b16 %v169
  %v193 = vunpack.c.h.b16 %v169
  %v194 = vunpack.c.l.b16 %v170
  %v195 = vunpack.c.h.b16 %v170
  %v196 = vunpack.c.l.b16 %v171
  %v197 = vunpack.c.h.b16 %v171
  %v198 = vunpack.c.l.b16 %v172
  %v199 = vunpack.c.h.b16 %v172
  %v200 = vpack.c.b16 %v184, %v182
  %v201 = vpack.c.b16 %v185, %v183
  %v202 = vpack.c.b16 %v188, %v186
  %v203 = vpack.c.b16 %v189, %v187
  %v204 = vpack.c.b16 %v192, %v190
  %v205 = vpack.c.b16 %v193, %v191
  %v206 = vpack.c.b16 %v196, %v194
  %v207 = vpack.c.b16 %v197, %v195
  %v208 = vpack.c.b16 %v198, %v198
  %v209 = vpack.c.b16 %v199, %v199
  %vm218 = vcmask 588800
  %v220 = vsel %vm218, %v162, 0
  %v223 = vsel %vm218, %v163, 0
  %vm225 = vcmask 1043456
  %v227 = vsel %vm225, %v208, 0
  %v230 = vsel %vm225, %v209, 0
  %232 = vmatprep.subr.bf16.mxu0 0
  %233 = vmatpush1.bf16.msra.mxu0 0
  %234 = vmatprep.subr.bf16.mxu0 0
  %235 = vmatpush1.bf16.msra.mxu0 0
  %236 = vmatprep.subr.bf16.mxu0 0
  %237 = vmatpush1.bf16.msra.mxu0 0
  %238 = vmatprep.subr.bf16.mxu0 %v230
  %239 = vmatpush1.bf16.msra.mxu0 %v227
  %240 = vmatprep.subr.bf16.mxu0 %v207
  %241 = vmatpush1.bf16.msra.mxu0 %v206
  %242 = vmatprep.subr.bf16.mxu0 %v205
  %243 = vmatpush1.bf16.msra.mxu0 %v204
  %244 = vmatprep.subr.bf16.mxu0 %v203
  %245 = vmatpush1.bf16.msra.mxu0 %v202
  %246 = vmatprep.subr.bf16.mxu0 %v201
  %247 = vmatpush1.bf16.msra.mxu0 %v200
  %248 = vmatprep.subr.bf16.mxu0 0
  %249 = vmatpush2.bf16.msra.mxu0 0
  %250 = vmatprep.subr.bf16.mxu0 0
  %251 = vmatpush2.bf16.msra.mxu0 0
  %252 = vmatprep.subr.bf16.mxu0 0
  %253 = vmatpush2.bf16.msra.mxu0 0
  %254 = vmatprep.subr.bf16.mxu0 0
  %255 = vmatpush2.bf16.msra.mxu0 0
  %256 = vmatprep.subr.bf16.mxu0 0
  %257 = vmatpush2.bf16.msra.mxu0 0
  %258 = vmatprep.subr.bf16.mxu0 0
  %259 = vmatpush2.bf16.msra.mxu0 0
  %260 = vmatprep.subr.bf16.mxu0 0
  %261 = vmatpush2.bf16.msra.mxu0 0
  %262 = vmatprep.subr.bf16.mxu0 0
  %263 = vmatpush2.bf16.msra.mxu0 0
  %264 = vmatprep.mubr.bf16.mxu0 0
  %265 = vmatmul.mubr.bf16.gmra.mxu0 %v220
  %v266 = vpop.f32.mrf.mxu0
  %v267 = vadd.f32 0.0, %v266
  %v268 = vpop.f32.mrf.mxu0
  %v269 = vadd.f32 0.0, %v268
  %v270 = vpop.f32.mrf.mxu0
  %v271 = vadd.f32 0.0, %v270
  %v272 = vpop.f32.mrf.mxu0
  %v273 = vadd.f32 0.0, %v272
  %274 = vmatprep.mubr.bf16.mxu0 0
  %275 = vmatmul.mubr.bf16.gmra.mxu0 %v223
  %v276 = vpop.f32.mrf.mxu0
  %v277 = vadd.f32 0.0, %v276
  %v278 = vpop.f32.mrf.mxu0
  %v279 = vadd.f32 0.0, %v278
  %v280 = vpop.f32.mrf.mxu0
  %v281 = vadd.f32 0.0, %v280
  %v282 = vpop.f32.mrf.mxu0
  %v283 = vadd.f32 0.0, %v282
  %284 = vdwg.mxu0
  %v294 = vunpack.c.l.b16 %v132
  %v295 = vunpack.c.h.b16 %v132
  %v296 = vunpack.c.l.b16 %v133
  %v297 = vunpack.c.h.b16 %v133
  %v298 = vunpack.c.l.b16 %v134
  %v299 = vunpack.c.h.b16 %v134
  %v300 = vunpack.c.l.b16 %v135
  %v301 = vunpack.c.h.b16 %v135
  %v302 = vunpack.c.l.b16 %v136
  %v303 = vunpack.c.h.b16 %v136
  %v304 = vunpack.c.l.b16 %v137
  %v305 = vunpack.c.h.b16 %v137
  %v306 = vunpack.c.l.b16 %v138
  %v307 = vunpack.c.h.b16 %v138
  %v308 = vunpack.c.l.b16 %v139
  %v309 = vunpack.c.h.b16 %v139
  %v310 = vunpack.c.l.b16 %v140
  %v311 = vunpack.c.h.b16 %v140
  %v312 = vpack.c.b16 %v296, %v294
  %v313 = vpack.c.b16 %v297, %v295
  %v314 = vpack.c.b16 %v300, %v298
  %v315 = vpack.c.b16 %v301, %v299
  %v316 = vpack.c.b16 %v304, %v302
  %v317 = vpack.c.b16 %v305, %v303
  %v318 = vpack.c.b16 %v308, %v306
  %v319 = vpack.c.b16 %v309, %v307
  %v320 = vpack.c.b16 %v310, %v310
  %v321 = vpack.c.b16 %v311, %v311
  %v331 = vsel %vm218, %v130, 0
  %v334 = vsel %vm218, %v131, 0
  %v337 = vsel %vm225, %v320, 0
  %v340 = vsel %vm225, %v321, 0
  %342 = vmatprep.subr.bf16.mxu0 0
  %343 = vmatpush1.bf16.msra.mxu0 0
  %344 = vmatprep.subr.bf16.mxu0 0
  %345 = vmatpush1.bf16.msra.mxu0 0
  %346 = vmatprep.subr.bf16.mxu0 0
  %347 = vmatpush1.bf16.msra.mxu0 0
  %348 = vmatprep.subr.bf16.mxu0 %v340
  %349 = vmatpush1.bf16.msra.mxu0 %v337
  %350 = vmatprep.subr.bf16.mxu0 %v319
  %351 = vmatpush1.bf16.msra.mxu0 %v318
  %352 = vmatprep.subr.bf16.mxu0 %v317
  %353 = vmatpush1.bf16.msra.mxu0 %v316
  %354 = vmatprep.subr.bf16.mxu0 %v315
  %355 = vmatpush1.bf16.msra.mxu0 %v314
  %356 = vmatprep.subr.bf16.mxu0 %v313
  %357 = vmatpush1.bf16.msra.mxu0 %v312
  %358 = vmatprep.subr.bf16.mxu0 0
  %359 = vmatpush2.bf16.msra.mxu0 0
  %360 = vmatprep.subr.bf16.mxu0 0
  %361 = vmatpush2.bf16.msra.mxu0 0
  %362 = vmatprep.subr.bf16.mxu0 0
  %363 = vmatpush2.bf16.msra.mxu0 0
  %364 = vmatprep.subr.bf16.mxu0 0
  %365 = vmatpush2.bf16.msra.mxu0 0
  %366 = vmatprep.subr.bf16.mxu0 0
  %367 = vmatpush2.bf16.msra.mxu0 0
  %368 = vmatprep.subr.bf16.mxu0 0
  %369 = vmatpush2.bf16.msra.mxu0 0
  %370 = vmatprep.subr.bf16.mxu0 0
  %371 = vmatpush2.bf16.msra.mxu0 0
  %372 = vmatprep.subr.bf16.mxu0 0
  %373 = vmatpush2.bf16.msra.mxu0 0
  %374 = vmatprep.mubr.bf16.mxu0 0
  %375 = vmatmul.mubr.bf16.gmra.mxu0 %v331
  %v376 = vpop.f32.mrf.mxu0
  %v377 = vadd.f32 %v267, %v376
  %v378 = vpop.f32.mrf.mxu0
  %v379 = vadd.f32 %v269, %v378
  %v380 = vpop.f32.mrf.mxu0
  %v381 = vadd.f32 %v271, %v380
  %v382 = vpop.f32.mrf.mxu0
  %v383 = vadd.f32 %v273, %v382
  %384 = vmatprep.mubr.bf16.mxu0 0
  %385 = vmatmul.mubr.bf16.gmra.mxu0 %v334
  %v386 = vpop.f32.mrf.mxu0
  %v387 = vadd.f32 %v277, %v386
  %v388 = vpop.f32.mrf.mxu0
  %v389 = vadd.f32 %v279, %v388
  %v390 = vpop.f32.mrf.mxu0
  %v391 = vadd.f32 %v281, %v390
  %v392 = vpop.f32.mrf.mxu0
  %v393 = vadd.f32 %v283, %v392
  %394 = vdwg.mxu0
  %vm395 = vcmask 1045504
  %v396 = vrot.slane %v124, 2
  %v397 = vrot.slane %v125, 2
  %v398 = vsel %vm395, %v396, %v397
  %v399 = vrot.slane %v126, 2
  %v400 = vsel %vm395, %v397, %v399
  %v401 = vrot.slane %v127, 2
  %v402 = vrot.slane %v128, 2
  %v403 = vsel %vm395, %v401, %v402
  %v404 = vrot.slane %v129, 2
  %v405 = vsel %vm395, %v402, %v404
  %v410 = vpack.c.bf16 %v400, %v398
  %v411 = vpack.c.bf16 %v405, %v403
  %v412 = vld [vmem:[%s7] sm:$0xff]
  %v413 = vld [vmem:[%s7 + $0x8] sm:$0xff]
  %v414 = vld [vmem:[%s7 + $0x10] sm:$0xff]
  %v415 = vld [vmem:[%s7 + $0x18] sm:$0xff]
  %v416 = vld [vmem:[%s7 + $0x20] sm:$0xff]
  %v417 = vld [vmem:[%s7 + $0x28] sm:$0xff]
  %v418 = vld [vmem:[%s7 + $0x30] sm:$0xff]
  %v419 = vld [vmem:[%s7 + $0x38] sm:$0xff]
  %v420 = vld [vmem:[%s7 + $0x40] sm:$0xff]
  %v430 = vunpack.c.l.b16 %v412
  %v431 = vunpack.c.h.b16 %v412
  %v432 = vunpack.c.l.b16 %v413
  %v433 = vunpack.c.h.b16 %v413
  %v434 = vunpack.c.l.b16 %v414
  %v435 = vunpack.c.h.b16 %v414
  %v436 = vunpack.c.l.b16 %v415
  %v437 = vunpack.c.h.b16 %v415
  %v438 = vunpack.c.l.b16 %v416
  %v439 = vunpack.c.h.b16 %v416
  %v440 = vunpack.c.l.b16 %v417
  %v441 = vunpack.c.h.b16 %v417
  %v442 = vunpack.c.l.b16 %v418
  %v443 = vunpack.c.h.b16 %v418
  %v444 = vunpack.c.l.b16 %v419
  %v445 = vunpack.c.h.b16 %v419
  %v446 = vunpack.c.l.b16 %v420
  %v447 = vunpack.c.h.b16 %v420
  %v448 = vpack.c.b16 %v432, %v430
  %v449 = vpack.c.b16 %v433, %v431
  %v450 = vpack.c.b16 %v436, %v434
  %v451 = vpack.c.b16 %v437, %v435
  %v452 = vpack.c.b16 %v440, %v438
  %v453 = vpack.c.b16 %v441, %v439
  %v454 = vpack.c.b16 %v444, %v442
  %v455 = vpack.c.b16 %v445, %v443
  %v456 = vpack.c.b16 %v446, %v446
  %v457 = vpack.c.b16 %v447, %v447
  %v467 = vsel %vm218, %v410, 0
  %v470 = vsel %vm218, %v411, 0
  %v473 = vsel %vm225, %v456, 0
  %v476 = vsel %vm225, %v457, 0
  %478 = vmatprep.subr.bf16.mxu0 0
  %479 = vmatpush1.bf16.msra.mxu0 0
  %480 = vmatprep.subr.bf16.mxu0 0
  %481 = vmatpush1.bf16.msra.mxu0 0
  %482 = vmatprep.subr.bf16.mxu0 0
  %483 = vmatpush1.bf16.msra.mxu0 0
  %484 = vmatprep.subr.bf16.mxu0 %v476
  %485 = vmatpush1.bf16.msra.mxu0 %v473
  %486 = vmatprep.subr.bf16.mxu0 %v455
  %487 = vmatpush1.bf16.msra.mxu0 %v454
  %488 = vmatprep.subr.bf16.mxu0 %v453
  %489 = vmatpush1.bf16.msra.mxu0 %v452
  %490 = vmatprep.subr.bf16.mxu0 %v451
  %491 = vmatpush1.bf16.msra.mxu0 %v450
  %492 = vmatprep.subr.bf16.mxu0 %v449
  %493 = vmatpush1.bf16.msra.mxu0 %v448
  %494 = vmatprep.subr.bf16.mxu0 0
  %495 = vmatpush2.bf16.msra.mxu0 0
  %496 = vmatprep.subr.bf16.mxu0 0
  %497 = vmatpush2.bf16.msra.mxu0 0
  %498 = vmatprep.subr.bf16.mxu0 0
  %499 = vmatpush2.bf16.msra.mxu0 0
  %500 = vmatprep.subr.bf16.mxu0 0
  %501 = vmatpush2.bf16.msra.mxu0 0
  %502 = vmatprep.subr.bf16.mxu0 0
  %503 = vmatpush2.bf16.msra.mxu0 0
  %504 = vmatprep.subr.bf16.mxu0 0
  %505 = vmatpush2.bf16.msra.mxu0 0
  %506 = vmatprep.subr.bf16.mxu0 0
  %507 = vmatpush2.bf16.msra.mxu0 0
  %508 = vmatprep.subr.bf16.mxu0 0
  %509 = vmatpush2.bf16.msra.mxu0 0
  %510 = vmatprep.mubr.bf16.mxu0 0
  %511 = vmatmul.mubr.bf16.gmra.mxu0 %v467
  %v512 = vpop.f32.mrf.mxu0
  %v513 = vadd.f32 0.0, %v512
  %v514 = vpop.f32.mrf.mxu0
  %v515 = vadd.f32 0.0, %v514
  %v516 = vpop.f32.mrf.mxu0
  %v517 = vadd.f32 0.0, %v516
  %v518 = vpop.f32.mrf.mxu0
  %v519 = vadd.f32 0.0, %v518
  %520 = vmatprep.mubr.bf16.mxu0 0
  %521 = vmatmul.mubr.bf16.gmra.mxu0 %v470
  %v522 = vpop.f32.mrf.mxu0
  %v523 = vadd.f32 0.0, %v522
  %v524 = vpop.f32.mrf.mxu0
  %v525 = vadd.f32 0.0, %v524
  %v526 = vpop.f32.mrf.mxu0
  %v527 = vadd.f32 0.0, %v526
  %v528 = vpop.f32.mrf.mxu0
  %v529 = vadd.f32 0.0, %v528
  %530 = vdwg.mxu0
  %v531 = vadd.f32 %v377, %v513
  %v532 = vadd.f32 %v379, %v515
  %v533 = vadd.f32 %v381, %v517
  %v534 = vadd.f32 %v383, %v519
  %v535 = vadd.f32 %v387, %v523
  %v536 = vadd.f32 %v389, %v525
  %v537 = vadd.f32 %v391, %v527
  %v538 = vadd.f32 %v393, %v529
  %v539 = vadd.f32 %v531, %v533
  %v540 = vadd.f32 %v539, %v535
  %v541 = vadd.f32 %v540, %v537
  %v542 = vrot.slane %v541, 4
  %v543 = vadd.f32 %v541, %v542
  %v544 = vrot.slane %v543, 2
  %v545 = vadd.f32 %v543, %v544
  %v546 = vrot.slane %v545, 1
  %v547 = vadd.f32 %v545, %v546
  %v548 = vadd.f32 %v532, %v534
  %v549 = vadd.f32 %v548, %v536
  %v550 = vadd.f32 %v549, %v538
  %v551 = vrot.slane %v550, 4
  %v552 = vadd.f32 %v550, %v551
  %v553 = vrot.slane %v552, 2
  %v554 = vadd.f32 %v552, %v553
  %v555 = vrot.slane %v554, 1
  %v556 = vadd.f32 %v554, %v555
  %v557 = vmul.f32 %v531, %v531
  %v558 = vmul.f32 %v532, %v532
  %v559 = vmul.f32 %v533, %v533
  %v560 = vmul.f32 %v534, %v534
  %v561 = vmul.f32 %v535, %v535
  %v562 = vmul.f32 %v536, %v536
  %v563 = vmul.f32 %v537, %v537
  %v564 = vmul.f32 %v538, %v538
  %v565 = vadd.f32 %v557, %v559
  %v566 = vadd.f32 %v565, %v561
  %v567 = vadd.f32 %v566, %v563
  %v568 = vrot.slane %v567, 4
  %v569 = vadd.f32 %v567, %v568
  %v570 = vrot.slane %v569, 2
  %v571 = vadd.f32 %v569, %v570
  %v572 = vrot.slane %v571, 1
  %v573 = vadd.f32 %v571, %v572
  %v574 = vadd.f32 %v558, %v560
  %v575 = vadd.f32 %v574, %v562
  %v576 = vadd.f32 %v575, %v564
  %v577 = vrot.slane %v576, 4
  %v578 = vadd.f32 %v576, %v577
  %v579 = vrot.slane %v578, 2
  %v580 = vadd.f32 %v578, %v579
  %v581 = vrot.slane %v580, 1
  %v582 = vadd.f32 %v580, %v581
  %vm583 = vcmask 1040384
  %v584 = vsel %vm583, %v547, %v573
  %v585 = vsel %vm583, %v556, %v582
  %586 = vmatprep.subr.mxu0 0.0
  %587 = vmatpush1.msra.mxu0 %v89
  %588 = vmatprep.subr.mxu0 0.0
  %589 = vmatpush1.msra.mxu0 %v88
  %590 = vmatprep.subr.mxu0 0.0
  %591 = vmatpush1.msra.mxu0 %v87
  %592 = vmatprep.subr.mxu0 0.0
  %593 = vmatpush1.msra.mxu0 %v86
  %594 = vmatprep.subr.mxu0 0.0
  %595 = vmatpush1.msra.mxu0 %v85
  %596 = vmatprep.subr.mxu0 0.0
  %597 = vmatpush1.msra.mxu0 %v84
  %598 = vmatprep.subr.mxu0 0.0
  %599 = vmatpush1.msra.mxu0 %v83
  %600 = vmatprep.subr.mxu0 0.0
  %601 = vmatpush1.msra.mxu0 %v82
  %602 = vmatprep.subr.mxu0 0.0
  %603 = vmatpush1.msra.mxu0 %v81
  %604 = vmatprep.subr.mxu0 0.0
  %605 = vmatpush1.msra.mxu0 %v80
  %606 = vmatprep.subr.mxu0 0.0
  %607 = vmatpush1.msra.mxu0 %v79
  %608 = vmatprep.subr.mxu0 0.0
  %609 = vmatpush1.msra.mxu0 %v78
  %610 = vmatprep.subr.mxu0 0.0
  %611 = vmatpush1.msra.mxu0 %v77
  %612 = vmatprep.subr.mxu0 0.0
  %613 = vmatpush1.msra.mxu0 %v76
  %614 = vmatprep.subr.mxu0 0.0
  %615 = vmatpush1.msra.mxu0 %v75
  %616 = vmatprep.subr.mxu0 0.0
  %617 = vmatpush1.msra.mxu0 %v74
  %618 = vmatprep.subr.mxu0 0.0
  %619 = vmatpush2.msra.mxu0 %v105
  %620 = vmatprep.subr.mxu0 0.0
  %621 = vmatpush2.msra.mxu0 %v104
  %622 = vmatprep.subr.mxu0 0.0
  %623 = vmatpush2.msra.mxu0 %v103
  %624 = vmatprep.subr.mxu0 0.0
  %625 = vmatpush2.msra.mxu0 %v102
  %626 = vmatprep.subr.mxu0 0.0
  %627 = vmatpush2.msra.mxu0 %v101
  %628 = vmatprep.subr.mxu0 0.0
  %629 = vmatpush2.msra.mxu0 %v100
  %630 = vmatprep.subr.mxu0 0.0
  %631 = vmatpush2.msra.mxu0 %v99
  %632 = vmatprep.subr.mxu0 0.0
  %633 = vmatpush2.msra.mxu0 %v98
  %634 = vmatprep.subr.mxu0 0.0
  %635 = vmatpush2.msra.mxu0 %v97
  %636 = vmatprep.subr.mxu0 0.0
  %637 = vmatpush2.msra.mxu0 %v96
  %638 = vmatprep.subr.mxu0 0.0
  %639 = vmatpush2.msra.mxu0 %v95
  %640 = vmatprep.subr.mxu0 0.0
  %641 = vmatpush2.msra.mxu0 %v94
  %642 = vmatprep.subr.mxu0 0.0
  %643 = vmatpush2.msra.mxu0 %v93
  %644 = vmatprep.subr.mxu0 0.0
  %645 = vmatpush2.msra.mxu0 %v92
  %646 = vmatprep.subr.mxu0 0.0
  %647 = vmatpush2.msra.mxu0 %v91
  %648 = vmatprep.subr.mxu0 0.0
  %649 = vmatpush2.msra.mxu0 %v90
  %650 = vmatprep.mubr.f32.mxu0 %v585
  %651 = vmatmul.mubr.f32.gmra.mxu0 %v584
  %v652 = vpop.f32.mrf.mxu0
  %v653 = vadd.f32 0.0, %v652
  %v654 = vpop.f32.mrf.mxu0
  %655 = vdwg.mxu0
  %v656 = vmul.f32 %v653, 0.001953125
  %v657 = vmul.f32 %v656, %v656
  %v659 = vrot.slane %v657, 7
  %v661 = vsub.f32 %v656, %v659
  %v662 = vadd.f32 %v661, 1e-05
  %v663 = vrsqrt.pop %v662
  %v664 = vsel %vm583, %v656, %v663
  %v666 = vsel %vm111, %v664, 0
  %668 = vmatprep.subr.mxu0 0.0
  %669 = vmatpush1.msra.mxu0 0.0
  %670 = vmatprep.subr.mxu0 0.0
  %671 = vmatpush1.msra.mxu0 0.0
  %672 = vmatprep.subr.mxu0 0.0
  %673 = vmatpush1.msra.mxu0 0.0
  %674 = vmatprep.subr.mxu0 0.0
  %675 = vmatpush1.msra.mxu0 0.0
  %676 = vmatprep.subr.mxu0 0.0
  %677 = vmatpush1.msra.mxu0 0.0
  %678 = vmatprep.subr.mxu0 0.0
  %679 = vmatpush1.msra.mxu0 0.0
  %680 = vmatprep.subr.mxu0 0.0
  %681 = vmatpush1.msra.mxu0 0.0
  %682 = vmatprep.subr.mxu0 0.0
  %683 = vmatpush1.msra.mxu0 0.0
  %684 = vmatprep.subr.mxu0 0.0
  %685 = vmatpush1.msra.mxu0 0.0
  %686 = vmatprep.subr.mxu0 0.0
  %687 = vmatpush1.msra.mxu0 0.0
  %688 = vmatprep.subr.mxu0 0.0
  %689 = vmatpush1.msra.mxu0 0.0
  %690 = vmatprep.subr.mxu0 0.0
  %691 = vmatpush1.msra.mxu0 0.0
  %692 = vmatprep.subr.mxu0 0.0
  %693 = vmatpush1.msra.mxu0 0.0
  %694 = vmatprep.subr.mxu0 0.0
  %695 = vmatpush1.msra.mxu0 0.0
  %696 = vmatprep.subr.mxu0 %v109
  %697 = vmatpush1.msra.mxu0 %v108
  %698 = vmatprep.subr.mxu0 %v107
  %699 = vmatpush1.msra.mxu0 %v106
  %700 = vmatprep.subr.mxu0 0.0
  %701 = vmatpush2.msra.mxu0 0.0
  %702 = vmatprep.subr.mxu0 0.0
  %703 = vmatpush2.msra.mxu0 0.0
  %704 = vmatprep.subr.mxu0 0.0
  %705 = vmatpush2.msra.mxu0 0.0
  %706 = vmatprep.subr.mxu0 0.0
  %707 = vmatpush2.msra.mxu0 0.0
  %708 = vmatprep.subr.mxu0 0.0
  %709 = vmatpush2.msra.mxu0 0.0
  %710 = vmatprep.subr.mxu0 0.0
  %711 = vmatpush2.msra.mxu0 0.0
  %712 = vmatprep.subr.mxu0 0.0
  %713 = vmatpush2.msra.mxu0 0.0
  %714 = vmatprep.subr.mxu0 0.0
  %715 = vmatpush2.msra.mxu0 0.0
  %716 = vmatprep.subr.mxu0 0.0
  %717 = vmatpush2.msra.mxu0 0.0
  %718 = vmatprep.subr.mxu0 0.0
  %719 = vmatpush2.msra.mxu0 0.0
  %720 = vmatprep.subr.mxu0 0.0
  %721 = vmatpush2.msra.mxu0 0.0
  %722 = vmatprep.subr.mxu0 0.0
  %723 = vmatpush2.msra.mxu0 0.0
  %724 = vmatprep.subr.mxu0 0.0
  %725 = vmatpush2.msra.mxu0 0.0
  %726 = vmatprep.subr.mxu0 0.0
  %727 = vmatpush2.msra.mxu0 0.0
  %728 = vmatprep.subr.mxu0 0.0
  %729 = vmatpush2.msra.mxu0 0.0
  %730 = vmatprep.subr.mxu0 0.0
  %731 = vmatpush2.msra.mxu0 0.0
  %732 = vmatprep.mubr.f32.mxu0 0.0
  %733 = vmatmul.mubr.f32.gmra.mxu0 %v666
  %v734 = vpop.f32.mrf.mxu0
  %v735 = vadd.f32 0.0, %v734
  %v736 = vpop.f32.mrf.mxu0
  %v737 = vadd.f32 0.0, %v736
  %738 = vdwg.mxu0
  %v739 = vlaneseq
  %v740 = vshrl.u32 %v739, 7
  %v741 = vsub.s32 0, %v740
  %v742 = vrot.slane %v735, %v741
  %v743 = vlaneseq
  %v744 = vshrl.u32 %v743, 7
  %v745 = vsub.s32 0, %v744
  %v746 = vrot.slane %v737, %v745
  %v747 = vsub.f32 %v531, %v742
  %v748 = vsub.f32 %v532, %v746
  %v749 = vsub.f32 %v533, %v742
  %v750 = vsub.f32 %v534, %v746
  %v751 = vsub.f32 %v535, %v742
  %v752 = vsub.f32 %v536, %v746
  %v753 = vsub.f32 %v537, %v742
  %v754 = vsub.f32 %v538, %v746
  %v755 = vlaneseq
  %v756 = vshrl.u32 %v755, 7
  %v757 = vsub.s32 1, %v756
  %v758 = vrot.slane %v735, %v757
  %v759 = vlaneseq
  %v760 = vshrl.u32 %v759, 7
  %v761 = vsub.s32 1, %v760
  %v762 = vrot.slane %v737, %v761
  %v763 = vmul.f32 %v747, %v758
  %v764 = vmul.f32 %v748, %v762
  %v765 = vmul.f32 %v749, %v758
  %v766 = vmul.f32 %v750, %v762
  %v767 = vmul.f32 %v751, %v758
  %v768 = vmul.f32 %v752, %v762
  %v769 = vmul.f32 %v753, %v758
  %v770 = vmul.f32 %v754, %v762
  %v771 = vmax.f32 %v763, 0.0
  %v772 = vmax.f32 %v765, 0.0
  %v773 = vmax.f32 %v767, 0.0
  %v774 = vmax.f32 %v769, 0.0
  %v779 = vrot.slane %v771, 7
  %v780 = vrot.slane %v772, 7
  %v781 = vsel %vm583, %v779, %v780
  %v782 = vrot.slane %v773, 7
  %v783 = vrot.slane %v774, 7
  %v784 = vsel %vm583, %v782, %v783
  %791 = vst [vmem:[#allocation2] sm:$0xfe] %v779
  %792 = vst [vmem:[#allocation2 + $0x10] sm:$0xff] %v781
  %793 = vst [vmem:[#allocation2 + $0x20] sm:$0x1] %v780
  %794 = vst [vmem:[#allocation2 + $0x30] sm:$0xfe] %v782
  %795 = vst [vmem:[#allocation2 + $0x40] sm:$0xff] %v784
  %796 = vst [vmem:[#allocation2 + $0x50] sm:$0x1] %v783
  %v797 = vld [vmem:[#allocation2] sm:$0xff]
  %v798 = vld [vmem:[#allocation2 + $0x8] sm:$0xff]
  %v799 = vld [vmem:[#allocation2 + $0x10] sm:$0xff]
  %v800 = vld [vmem:[#allocation2 + $0x18] sm:$0xff]
  %v801 = vld [vmem:[#allocation2 + $0x20] sm:$0x3]
  %v802 = vld [vmem:[#allocation2 + $0x28] sm:$0x3]
  %v803 = vld [vmem:[#allocation2 + $0x30] sm:$0xff]
  %v804 = vld [vmem:[#allocation2 + $0x38] sm:$0xff]
  %v805 = vld [vmem:[#allocation2 + $0x40] sm:$0xff]
  %v806 = vld [vmem:[#allocation2 + $0x48] sm:$0xff]
  %v807 = vld [vmem:[#allocation2 + $0x50] sm:$0x3]
  %v808 = vld [vmem:[#allocation2 + $0x58] sm:$0x3]
  %v809 = vpack.c.bf16 %v799, %v797
  %v810 = vpack.c.bf16 %v800, %v798
  %v811 = vpack.c.bf16 %v805, %v803
  %v812 = vpack.c.bf16 %v806, %v804
  %v813 = vld [vmem:[%s8] sm:$0xf]
  %v814 = vld [vmem:[%s8 + $0x4] sm:$0xf]
  %v815 = vld [vmem:[%s8 + $0x8] sm:$0xf]
  %v816 = vld [vmem:[%s8 + $0xc] sm:$0xf]
  %v817 = vld [vmem:[%s8 + $0x10] sm:$0xf]
  %v818 = vld [vmem:[%s8 + $0x14] sm:$0xf]
  %v819 = vld [vmem:[%s8 + $0x18] sm:$0xf]
  %v820 = vld [vmem:[%s8 + $0x1c] sm:$0xf]
  %v821 = vld [vmem:[%s8 + $0x20] sm:$0xf]
  %v822 = vld [vmem:[%s8 + $0x24] sm:$0xf]
  %v823 = vld [vmem:[%s8 + $0x28] sm:$0xf]
  %v824 = vld [vmem:[%s8 + $0x2c] sm:$0xf]
  %v825 = vld [vmem:[%s8 + $0x30] sm:$0xf]
  %v826 = vld [vmem:[%s8 + $0x34] sm:$0xf]
  %v827 = vld [vmem:[%s8 + $0x38] sm:$0xf]
  %v828 = vld [vmem:[%s8 + $0x3c] sm:$0xf]
  %v829 = vld [vmem:[%s8 + $0x40] sm:$0xf]
  %v830 = vld [vmem:[%s8 + $0x44] sm:$0xf]
  %v843 = vrot.slane %v797, 1
  %v844 = vrot.slane %v799, 1
  %v845 = vsel %vm147, %v843, %v844
  %v846 = vrot.slane %v798, 1
  %v847 = vrot.slane %v800, 1
  %v848 = vsel %vm147, %v846, %v847
  %v849 = vrot.slane %v801, 1
  %v850 = vsel %vm147, %v844, %v849
  %v851 = vrot.slane %v802, 1
  %v852 = vsel %vm147, %v847, %v851
  %v853 = vrot.slane %v803, 1
  %v854 = vrot.slane %v805, 1
  %v855 = vsel %vm147, %v853, %v854
  %v856 = vrot.slane %v804, 1
  %v857 = vrot.slane %v806, 1
  %v858 = vsel %vm147, %v856, %v857
  %v859 = vrot.slane %v807, 1
  %v860 = vsel %vm147, %v854, %v859
  %v861 = vrot.slane %v808, 1
  %v862 = vsel %vm147, %v857, %v861
  %v871 = vpack.c.bf16 %v850, %v845
  %v872 = vpack.c.bf16 %v852, %v848
  %v873 = vpack.c.bf16 %v860, %v855
  %v874 = vpack.c.bf16 %v862, %v858
  %v875 = vld [vmem:[%s9] sm:$0xf]
  %v876 = vld [vmem:[%s9 + $0x4] sm:$0xf]
  %v877 = vld [vmem:[%s9 + $0x8] sm:$0xf]
  %v878 = vld [vmem:[%s9 + $0xc] sm:$0xf]
  %v879 = vld [vmem:[%s9 + $0x10] sm:$0xf]
  %v880 = vld [vmem:[%s9 + $0x14] sm:$0xf]
  %v881 = vld [vmem:[%s9 + $0x18] sm:$0xf]
  %v882 = vld [vmem:[%s9 + $0x1c] sm:$0xf]
  %v883 = vld [vmem:[%s9 + $0x20] sm:$0xf]
  %v884 = vld [vmem:[%s9 + $0x24] sm:$0xf]
  %v885 = vld [vmem:[%s9 + $0x28] sm:$0xf]
  %v886 = vld [vmem:[%s9 + $0x2c] sm:$0xf]
  %v887 = vld [vmem:[%s9 + $0x30] sm:$0xf]
  %v888 = vld [vmem:[%s9 + $0x34] sm:$0xf]
  %v889 = vld [vmem:[%s9 + $0x38] sm:$0xf]
  %v890 = vld [vmem:[%s9 + $0x3c] sm:$0xf]
  %v891 = vld [vmem:[%s9 + $0x40] sm:$0xf]
  %v892 = vld [vmem:[%s9 + $0x44] sm:$0xf]
  %v911 = vunpack.c.l.b16 %v875
  %v912 = vunpack.c.l.b16 %v876
  %v913 = vunpack.c.l.b16 %v877
  %v914 = vunpack.c.l.b16 %v878
  %v915 = vunpack.c.l.b16 %v879
  %v916 = vunpack.c.l.b16 %v880
  %v917 = vunpack.c.l.b16 %v881
  %v918 = vunpack.c.l.b16 %v882
  %v919 = vunpack.c.l.b16 %v883
  %v920 = vunpack.c.l.b16 %v884
  %v921 = vunpack.c.l.b16 %v885
  %v922 = vunpack.c.l.b16 %v886
  %v923 = vunpack.c.l.b16 %v887
  %v924 = vunpack.c.l.b16 %v888
  %v925 = vunpack.c.l.b16 %v889
  %v926 = vunpack.c.l.b16 %v890
  %v927 = vunpack.c.l.b16 %v891
  %v928 = vunpack.c.l.b16 %v892
  %v929 = vpack.c.b16 %v912, %v911
  %v930 = vpack.c.b16 %v914, %v913
  %v931 = vpack.c.b16 %v916, %v915
  %v932 = vpack.c.b16 %v918, %v917
  %v933 = vpack.c.b16 %v920, %v919
  %v934 = vpack.c.b16 %v922, %v921
  %v935 = vpack.c.b16 %v924, %v923
  %v936 = vpack.c.b16 %v926, %v925
  %v937 = vpack.c.b16 %v928, %v927
  %v948 = vsel %vm111, %v872, 0
  %v951 = vsel %vm111, %v874, 0
  %953 = vmatprep.subr.bf16.mxu0 0
  %954 = vmatpush1.bf16.msra.mxu0 %v936
  %955 = vmatprep.subr.bf16.mxu0 0
  %956 = vmatpush1.bf16.msra.mxu0 %v935
  %957 = vmatprep.subr.bf16.mxu0 0
  %958 = vmatpush1.bf16.msra.mxu0 %v934
  %959 = vmatprep.subr.bf16.mxu0 0
  %960 = vmatpush1.bf16.msra.mxu0 %v933
  %961 = vmatprep.subr.bf16.mxu0 0
  %962 = vmatpush1.bf16.msra.mxu0 %v932
  %963 = vmatprep.subr.bf16.mxu0 0
  %964 = vmatpush1.bf16.msra.mxu0 %v931
  %965 = vmatprep.subr.bf16.mxu0 0
  %966 = vmatpush1.bf16.msra.mxu0 %v930
  %967 = vmatprep.subr.bf16.mxu0 0
  %968 = vmatpush1.bf16.msra.mxu0 %v929
  %969 = vmatprep.subr.bf16.mxu0 0
  %970 = vmatpush2.bf16.msra.mxu0 0
  %971 = vmatprep.subr.bf16.mxu0 0
  %972 = vmatpush2.bf16.msra.mxu0 0
  %973 = vmatprep.subr.bf16.mxu0 0
  %974 = vmatpush2.bf16.msra.mxu0 0
  %975 = vmatprep.subr.bf16.mxu0 0
  %976 = vmatpush2.bf16.msra.mxu0 0
  %977 = vmatprep.subr.bf16.mxu0 0
  %978 = vmatpush2.bf16.msra.mxu0 0
  %979 = vmatprep.subr.bf16.mxu0 0
  %980 = vmatpush2.bf16.msra.mxu0 0
  %981 = vmatprep.subr.bf16.mxu0 0
  %982 = vmatpush2.bf16.msra.mxu0 0
  %983 = vmatprep.subr.bf16.mxu0 0
  %984 = vmatpush2.bf16.msra.mxu0 %v937
  %985 = vmatprep.mubr.bf16.mxu0 %v948
  %986 = vmatmul.mubr.bf16.gmra.mxu0 %v871
  %v987 = vpop.f32.mrf.mxu0
  %v988 = vadd.f32 0.0, %v987
  %v989 = vpop.f32.mrf.mxu0
  %v990 = vpop.f32.mrf.mxu0
  %v991 = vadd.f32 0.0, %v990
  %v992 = vpop.f32.mrf.mxu0
  %993 = vmatprep.mubr.bf16.mxu0 %v951
  %994 = vmatmul.mubr.bf16.gmra.mxu0 %v873
  %v995 = vpop.f32.mrf.mxu0
  %v996 = vadd.f32 0.0, %v995
  %v997 = vpop.f32.mrf.mxu0
  %v998 = vpop.f32.mrf.mxu0
  %v999 = vadd.f32 0.0, %v998
  %v1000 = vpop.f32.mrf.mxu0
  %1001 = vdwg.mxu0
  %v1020 = vunpack.c.l.b16 %v813
  %v1021 = vunpack.c.l.b16 %v814
  %v1022 = vunpack.c.l.b16 %v815
  %v1023 = vunpack.c.l.b16 %v816
  %v1024 = vunpack.c.l.b16 %v817
  %v1025 = vunpack.c.l.b16 %v818
  %v1026 = vunpack.c.l.b16 %v819
  %v1027 = vunpack.c.l.b16 %v820
  %v1028 = vunpack.c.l.b16 %v821
  %v1029 = vunpack.c.l.b16 %v822
  %v1030 = vunpack.c.l.b16 %v823
  %v1031 = vunpack.c.l.b16 %v824
  %v1032 = vunpack.c.l.b16 %v825
  %v1033 = vunpack.c.l.b16 %v826
  %v1034 = vunpack.c.l.b16 %v827
  %v1035 = vunpack.c.l.b16 %v828
  %v1036 = vunpack.c.l.b16 %v829
  %v1037 = vunpack.c.l.b16 %v830
  %v1038 = vpack.c.b16 %v1021, %v1020
  %v1039 = vpack.c.b16 %v1023, %v1022
  %v1040 = vpack.c.b16 %v1025, %v1024
  %v1041 = vpack.c.b16 %v1027, %v1026
  %v1042 = vpack.c.b16 %v1029, %v1028
  %v1043 = vpack.c.b16 %v1031, %v1030
  %v1044 = vpack.c.b16 %v1033, %v1032
  %v1045 = vpack.c.b16 %v1035, %v1034
  %v1046 = vpack.c.b16 %v1037, %v1036
  %v1057 = vsel %vm111, %v810, 0
  %v1060 = vsel %vm111, %v812, 0
  %1062 = vmatprep.subr.bf16.mxu0 0
  %1063 = vmatpush1.bf16.msra.mxu0 %v1045
  %1064 = vmatprep.subr.bf16.mxu0 0
  %1065 = vmatpush1.bf16.msra.mxu0 %v1044
  %1066 = vmatprep.subr.bf16.mxu0 0
  %1067 = vmatpush1.bf16.msra.mxu0 %v1043
  %1068 = vmatprep.subr.bf16.mxu0 0
  %1069 = vmatpush1.bf16.msra.mxu0 %v1042
  %1070 = vmatprep.subr.bf16.mxu0 0
  %1071 = vmatpush1.bf16.msra.mxu0 %v1041
  %1072 = vmatprep.subr.bf16.mxu0 0
  %1073 = vmatpush1.bf16.msra.mxu0 %v1040
  %1074 = vmatprep.subr.bf16.mxu0 0
  %1075 = vmatpush1.bf16.msra.mxu0 %v1039
  %1076 = vmatprep.subr.bf16.mxu0 0
  %1077 = vmatpush1.bf16.msra.mxu0 %v1038
  %1078 = vmatprep.subr.bf16.mxu0 0
  %1079 = vmatpush2.bf16.msra.mxu0 0
  %1080 = vmatprep.subr.bf16.mxu0 0
  %1081 = vmatpush2.bf16.msra.mxu0 0
  %1082 = vmatprep.subr.bf16.mxu0 0
  %1083 = vmatpush2.bf16.msra.mxu0 0
  %1084 = vmatprep.subr.bf16.mxu0 0
  %1085 = vmatpush2.bf16.msra.mxu0 0
  %1086 = vmatprep.subr.bf16.mxu0 0
  %1087 = vmatpush2.bf16.msra.mxu0 0
  %1088 = vmatprep.subr.bf16.mxu0 0
  %1089 = vmatpush2.bf16.msra.mxu0 0
  %1090 = vmatprep.subr.bf16.mxu0 0
  %1091 = vmatpush2.bf16.msra.mxu0 0
  %1092 = vmatprep.subr.bf16.mxu0 0
  %1093 = vmatpush2.bf16.msra.mxu0 %v1046
  %1094 = vmatprep.mubr.bf16.mxu0 %v1057
  %1095 = vmatmul.mubr.bf16.gmra.mxu0 %v809
  %v1096 = vpop.f32.mrf.mxu0
  %v1097 = vadd.f32 %v988, %v1096
  %v1098 = vpop.f32.mrf.mxu0
  %v1099 = vpop.f32.mrf.mxu0
  %v1100 = vadd.f32 %v991, %v1099
  %v1101 = vpop.f32.mrf.mxu0
  %1102 = vmatprep.mubr.bf16.mxu0 %v1060
  %1103 = vmatmul.mubr.bf16.gmra.mxu0 %v811
  %v1104 = vpop.f32.mrf.mxu0
  %v1105 = vadd.f32 %v996, %v1104
  %v1106 = vpop.f32.mrf.mxu0
  %v1107 = vpop.f32.mrf.mxu0
  %v1108 = vadd.f32 %v999, %v1107
  %v1109 = vpop.f32.mrf.mxu0
  %1110 = vdwg.mxu0
  %v1111 = vrot.slane %v797, 2
  %v1112 = vrot.slane %v799, 2
  %v1113 = vsel %vm395, %v1111, %v1112
  %v1114 = vrot.slane %v798, 2
  %v1115 = vrot.slane %v800, 2
  %v1116 = vsel %vm395, %v1114, %v1115
  %v1117 = vrot.slane %v801, 2
  %v1118 = vsel %vm395, %v1112, %v1117
  %v1119 = vrot.slane %v802, 2
  %v1120 = vsel %vm395, %v1115, %v1119
  %v1121 = vrot.slane %v803, 2
  %v1122 = vrot.slane %v805, 2
  %v1123 = vsel %vm395, %v1121, %v1122
  %v1124 = vrot.slane %v804, 2
  %v1125 = vrot.slane %v806, 2
  %v1126 = vsel %vm395, %v1124, %v1125
  %v1127 = vrot.slane %v807, 2
  %v1128 = vsel %vm395, %v1122, %v1127
  %v1129 = vrot.slane %v808, 2
  %v1130 = vsel %vm395, %v1125, %v1129
  %v1139 = vpack.c.bf16 %v1118, %v1113
  %v1140 = vpack.c.bf16 %v1120, %v1116
  %v1141 = vpack.c.bf16 %v1128, %v1123
  %v1142 = vpack.c.bf16 %v1130, %v1126
  %v1143 = vld [vmem:[%s10] sm:$0xf]
  %v1144 = vld [vmem:[%s10 + $0x4] sm:$0xf]
  %v1145 = vld [vmem:[%s10 + $0x8] sm:$0xf]
  %v1146 = vld [vmem:[%s10 + $0xc] sm:$0xf]
  %v1147 = vld [vmem:[%s10 + $0x10] sm:$0xf]
  %v1148 = vld [vmem:[%s10 + $0x14] sm:$0xf]
  %v1149 = vld [vmem:[%s10 + $0x18] sm:$0xf]
  %v1150 = vld [vmem:[%s10 + $0x1c] sm:$0xf]
  %v1151 = vld [vmem:[%s10 + $0x20] sm:$0xf]
  %v1152 = vld [vmem:[%s10 + $0x24] sm:$0xf]
  %v1153 = vld [vmem:[%s10 + $0x28] sm:$0xf]
  %v1154 = vld [vmem:[%s10 + $0x2c] sm:$0xf]
  %v1155 = vld [vmem:[%s10 + $0x30] sm:$0xf]
  %v1156 = vld [vmem:[%s10 + $0x34] sm:$0xf]
  %v1157 = vld [vmem:[%s10 + $0x38] sm:$0xf]
  %v1158 = vld [vmem:[%s10 + $0x3c] sm:$0xf]
  %v1159 = vld [vmem:[%s10 + $0x40] sm:$0xf]
  %v1160 = vld [vmem:[%s10 + $0x44] sm:$0xf]
  %v1179 = vunpack.c.l.b16 %v1143
  %v1180 = vunpack.c.l.b16 %v1144
  %v1181 = vunpack.c.l.b16 %v1145
  %v1182 = vunpack.c.l.b16 %v1146
  %v1183 = vunpack.c.l.b16 %v1147
  %v1184 = vunpack.c.l.b16 %v1148
  %v1185 = vunpack.c.l.b16 %v1149
  %v1186 = vunpack.c.l.b16 %v1150
  %v1187 = vunpack.c.l.b16 %v1151
  %v1188 = vunpack.c.l.b16 %v1152
  %v1189 = vunpack.c.l.b16 %v1153
  %v1190 = vunpack.c.l.b16 %v1154
  %v1191 = vunpack.c.l.b16 %v1155
  %v1192 = vunpack.c.l.b16 %v1156
  %v1193 = vunpack.c.l.b16 %v1157
  %v1194 = vunpack.c.l.b16 %v1158
  %v1195 = vunpack.c.l.b16 %v1159
  %v1196 = vunpack.c.l.b16 %v1160
  %v1197 = vpack.c.b16 %v1180, %v1179
  %v1198 = vpack.c.b16 %v1182, %v1181
  %v1199 = vpack.c.b16 %v1184, %v1183
  %v1200 = vpack.c.b16 %v1186, %v1185
  %v1201 = vpack.c.b16 %v1188, %v1187
  %v1202 = vpack.c.b16 %v1190, %v1189
  %v1203 = vpack.c.b16 %v1192, %v1191
  %v1204 = vpack.c.b16 %v1194, %v1193
  %v1205 = vpack.c.b16 %v1196, %v1195
  %v1216 = vsel %vm111, %v1140, 0
  %v1219 = vsel %vm111, %v1142, 0
  %1221 = vmatprep.subr.bf16.mxu0 0
  %1222 = vmatpush1.bf16.msra.mxu0 %v1204
  %1223 = vmatprep.subr.bf16.mxu0 0
  %1224 = vmatpush1.bf16.msra.mxu0 %v1203
  %1225 = vmatprep.subr.bf16.mxu0 0
  %1226 = vmatpush1.bf16.msra.mxu0 %v1202
  %1227 = vmatprep.subr.bf16.mxu0 0
  %1228 = vmatpush1.bf16.msra.mxu0 %v1201
  %1229 = vmatprep.subr.bf16.mxu0 0
  %1230 = vmatpush1.bf16.msra.mxu0 %v1200
  %1231 = vmatprep.subr.bf16.mxu0 0
  %1232 = vmatpush1.bf16.msra.mxu0 %v1199
  %1233 = vmatprep.subr.bf16.mxu0 0
  %1234 = vmatpush1.bf16.msra.mxu0 %v1198
  %1235 = vmatprep.subr.bf16.mxu0 0
  %1236 = vmatpush1.bf16.msra.mxu0 %v1197
  %1237 = vmatprep.subr.bf16.mxu0 0
  %1238 = vmatpush2.bf16.msra.mxu0 0
  %1239 = vmatprep.subr.bf16.mxu0 0
  %1240 = vmatpush2.bf16.msra.mxu0 0
  %1241 = vmatprep.subr.bf16.mxu0 0
  %1242 = vmatpush2.bf16.msra.mxu0 0
  %1243 = vmatprep.subr.bf16.mxu0 0
  %1244 = vmatpush2.bf16.msra.mxu0 0
  %1245 = vmatprep.subr.bf16.mxu0 0
  %1246 = vmatpush2.bf16.msra.mxu0 0
  %1247 = vmatprep.subr.bf16.mxu0 0
  %1248 = vmatpush2.bf16.msra.mxu0 0
  %1249 = vmatprep.subr.bf16.mxu0 0
  %1250 = vmatpush2.bf16.msra.mxu0 0
  %1251 = vmatprep.subr.bf16.mxu0 0
  %1252 = vmatpush2.bf16.msra.mxu0 %v1205
  %1253 = vmatprep.mubr.bf16.mxu0 %v1216
  %1254 = vmatmul.mubr.bf16.gmra.mxu0 %v1139
  %v1255 = vpop.f32.mrf.mxu0
  %v1256 = vadd.f32 0.0, %v1255
  %v1257 = vpop.f32.mrf.mxu0
  %v1258 = vpop.f32.mrf.mxu0
  %v1259 = vadd.f32 0.0, %v1258
  %v1260 = vpop.f32.mrf.mxu0
  %1261 = vmatprep.mubr.bf16.mxu0 %v1219
  %1262 = vmatmul.mubr.bf16.gmra.mxu0 %v1141
  %v1263 = vpop.f32.mrf.mxu0
  %v1264 = vadd.f32 0.0, %v1263
  %v1265 = vpop.f32.mrf.mxu0
  %v1266 = vpop.f32.mrf.mxu0
  %v1267 = vadd.f32 0.0, %v1266
  %v1268 = vpop.f32.mrf.mxu0
  %1269 = vdwg.mxu0
  %v1270 = vadd.f32 %v1097, %v1256
  %v1271 = vadd.f32 %v1100, %v1259
  %v1272 = vadd.f32 %v1105, %v1264
  %v1273 = vadd.f32 %v1108, %v1267
  %v1274 = vadd.f32 %v1270, %v1271
  %v1275 = vadd.f32 %v1274, %v1272
  %v1276 = vadd.f32 %v1275, %v1273
  %v1277 = vrot.slane %v1276, 4
  %v1278 = vadd.f32 %v1276, %v1277
  %v1279 = vrot.slane %v1278, 2
  %v1280 = vadd.f32 %v1278, %v1279
  %v1281 = vrot.slane %v1280, 1
  %v1282 = vadd.f32 %v1280, %v1281
  %v1283 = vmul.f32 %v1270, %v1270
  %v1284 = vmul.f32 %v1271, %v1271
  %v1285 = vmul.f32 %v1272, %v1272
  %v1286 = vmul.f32 %v1273, %v1273
  %v1287 = vadd.f32 %v1283, %v1284
  %v1288 = vadd.f32 %v1287, %v1285
  %v1289 = vadd.f32 %v1288, %v1286
  %v1290 = vrot.slane %v1289, 4
  %v1291 = vadd.f32 %v1289, %v1290
  %v1292 = vrot.slane %v1291, 2
  %v1293 = vadd.f32 %v1291, %v1292
  %v1294 = vrot.slane %v1293, 1
  %v1295 = vadd.f32 %v1293, %v1294
  %v1296 = vsel %vm583, %v1282, %v1295
  %1297 = vmatprep.subr.mxu0 0.0
  %1298 = vmatpush1.msra.mxu0 %v72
  %1299 = vmatprep.subr.mxu0 0.0
  %1300 = vmatpush1.msra.mxu0 %v71
  %1301 = vmatprep.subr.mxu0 0.0
  %1302 = vmatpush1.msra.mxu0 %v70
  %1303 = vmatprep.subr.mxu0 0.0
  %1304 = vmatpush1.msra.mxu0 %v69
  %1305 = vmatprep.subr.mxu0 0.0
  %1306 = vmatpush1.msra.mxu0 %v68
  %1307 = vmatprep.subr.mxu0 0.0
  %1308 = vmatpush1.msra.mxu0 %v67
  %1309 = vmatprep.subr.mxu0 0.0
  %1310 = vmatpush1.msra.mxu0 %v66
  %1311 = vmatprep.subr.mxu0 0.0
  %1312 = vmatpush1.msra.mxu0 %v65
  %1313 = vmatprep.subr.mxu0 0.0
  %1314 = vmatpush1.msra.mxu0 %v64
  %1315 = vmatprep.subr.mxu0 0.0
  %1316 = vmatpush1.msra.mxu0 %v63
  %1317 = vmatprep.subr.mxu0 0.0
  %1318 = vmatpush1.msra.mxu0 %v62
  %1319 = vmatprep.subr.mxu0 0.0
  %1320 = vmatpush1.msra.mxu0 %v61
  %1321 = vmatprep.subr.mxu0 0.0
  %1322 = vmatpush1.msra.mxu0 %v60
  %1323 = vmatprep.subr.mxu0 0.0
  %1324 = vmatpush1.msra.mxu0 %v59
  %1325 = vmatprep.subr.mxu0 0.0
  %1326 = vmatpush1.msra.mxu0 %v58
  %1327 = vmatprep.subr.mxu0 0.0
  %1328 = vmatpush1.msra.mxu0 %v57
  %1329 = vmatprep.subr.mxu0 0.0
  %1330 = vmatpush2.msra.mxu0 0.0
  %1331 = vmatprep.subr.mxu0 0.0
  %1332 = vmatpush2.msra.mxu0 0.0
  %1333 = vmatprep.subr.mxu0 0.0
  %1334 = vmatpush2.msra.mxu0 0.0
  %1335 = vmatprep.subr.mxu0 0.0
  %1336 = vmatpush2.msra.mxu0 0.0
  %1337 = vmatprep.subr.mxu0 0.0
  %1338 = vmatpush2.msra.mxu0 0.0
  %1339 = vmatprep.subr.mxu0 0.0
  %1340 = vmatpush2.msra.mxu0 0.0
  %1341 = vmatprep.subr.mxu0 0.0
  %1342 = vmatpush2.msra.mxu0 0.0
  %1343 = vmatprep.subr.mxu0 0.0
  %1344 = vmatpush2.msra.mxu0 0.0
  %1345 = vmatprep.subr.mxu0 0.0
  %1346 = vmatpush2.msra.mxu0 0.0
  %1347 = vmatprep.subr.mxu0 0.0
  %1348 = vmatpush2.msra.mxu0 0.0
  %1349 = vmatprep.subr.mxu0 0.0
  %1350 = vmatpush2.msra.mxu0 0.0
  %1351 = vmatprep.subr.mxu0 0.0
  %1352 = vmatpush2.msra.mxu0 0.0
  %1353 = vmatprep.subr.mxu0 0.0
  %1354 = vmatpush2.msra.mxu0 0.0
  %1355 = vmatprep.subr.mxu0 0.0
  %1356 = vmatpush2.msra.mxu0 0.0
  %1357 = vmatprep.subr.mxu0 0.0
  %1358 = vmatpush2.msra.mxu0 0.0
  %1359 = vmatprep.subr.mxu0 0.0
  %1360 = vmatpush2.msra.mxu0 0.0
  %1361 = vmatprep.mubr.f32.mxu0 0.0
  %1362 = vmatmul.mubr.f32.gmra.mxu0 %v1296
  %v1363 = vpop.f32.mrf.mxu0
  %v1364 = vadd.f32 0.0, %v1363
  %v1365 = vpop.f32.mrf.mxu0
  %1366 = vdwg.mxu0
  %v1367 = vmul.f32 %v1364, 0.001953125
  %v1368 = vmul.f32 %v1367, %v1367
  %v1370 = vrot.slane %v1368, 7
  %v1372 = vsub.f32 %v1367, %v1370
  %v1373 = vadd.f32 %v1372, 1e-05
  %v1374 = vrsqrt.pop %v1373
  %v1375 = vsel %vm583, %v1367, %v1374
  %vm1376 = vcmask 64512
  %v1378 = vsel %vm1376, %v1375, 0
  %1380 = vmatprep.subr.mxu0 0.0
  %1381 = vmatpush1.msra.mxu0 0.0
  %1382 = vmatprep.subr.mxu0 0.0
  %1383 = vmatpush1.msra.mxu0 0.0
  %1384 = vmatprep.subr.mxu0 0.0
  %1385 = vmatpush1.msra.mxu0 0.0
  %1386 = vmatprep.subr.mxu0 0.0
  %1387 = vmatpush1.msra.mxu0 0.0
  %1388 = vmatprep.subr.mxu0 0.0
  %1389 = vmatpush1.msra.mxu0 0.0
  %1390 = vmatprep.subr.mxu0 0.0
  %1391 = vmatpush1.msra.mxu0 0.0
  %1392 = vmatprep.subr.mxu0 0.0
  %1393 = vmatpush1.msra.mxu0 0.0
  %1394 = vmatprep.subr.mxu0 0.0
  %1395 = vmatpush1.msra.mxu0 0.0
  %1396 = vmatprep.subr.mxu0 0.0
  %1397 = vmatpush1.msra.mxu0 0.0
  %1398 = vmatprep.subr.mxu0 0.0
  %1399 = vmatpush1.msra.mxu0 0.0
  %1400 = vmatprep.subr.mxu0 0.0
  %1401 = vmatpush1.msra.mxu0 0.0
  %1402 = vmatprep.subr.mxu0 0.0
  %1403 = vmatpush1.msra.mxu0 0.0
  %1404 = vmatprep.subr.mxu0 0.0
  %1405 = vmatpush1.msra.mxu0 0.0
  %1406 = vmatprep.subr.mxu0 0.0
  %1407 = vmatpush1.msra.mxu0 0.0
  %1408 = vmatprep.subr.mxu0 0.0
  %1409 = vmatpush1.msra.mxu0 0.0
  %1410 = vmatprep.subr.mxu0 0.0
  %1411 = vmatpush1.msra.mxu0 %v73
  %1412 = vmatprep.subr.mxu0 0.0
  %1413 = vmatpush2.msra.mxu0 0.0
  %1414 = vmatprep.subr.mxu0 0.0
  %1415 = vmatpush2.msra.mxu0 0.0
  %1416 = vmatprep.subr.mxu0 0.0
  %1417 = vmatpush2.msra.mxu0 0.0
  %1418 = vmatprep.subr.mxu0 0.0
  %1419 = vmatpush2.msra.mxu0 0.0
  %1420 = vmatprep.subr.mxu0 0.0
  %1421 = vmatpush2.msra.mxu0 0.0
  %1422 = vmatprep.subr.mxu0 0.0
  %1423 = vmatpush2.msra.mxu0 0.0
  %1424 = vmatprep.subr.mxu0 0.0
  %1425 = vmatpush2.msra.mxu0 0.0
  %1426 = vmatprep.subr.mxu0 0.0
  %1427 = vmatpush2.msra.mxu0 0.0
  %1428 = vmatprep.subr.mxu0 0.0
  %1429 = vmatpush2.msra.mxu0 0.0
  %1430 = vmatprep.subr.mxu0 0.0
  %1431 = vmatpush2.msra.mxu0 0.0
  %1432 = vmatprep.subr.mxu0 0.0
  %1433 = vmatpush2.msra.mxu0 0.0
  %1434 = vmatprep.subr.mxu0 0.0
  %1435 = vmatpush2.msra.mxu0 0.0
  %1436 = vmatprep.subr.mxu0 0.0
  %1437 = vmatpush2.msra.mxu0 0.0
  %1438 = vmatprep.subr.mxu0 0.0
  %1439 = vmatpush2.msra.mxu0 0.0
  %1440 = vmatprep.subr.mxu0 0.0
  %1441 = vmatpush2.msra.mxu0 0.0
  %1442 = vmatprep.subr.mxu0 0.0
  %1443 = vmatpush2.msra.mxu0 0.0
  %1444 = vmatprep.mubr.f32.mxu0 0.0
  %1445 = vmatmul.mubr.f32.gmra.mxu0 %v1378
  %v1446 = vpop.f32.mrf.mxu0
  %v1447 = vadd.f32 0.0, %v1446
  %v1448 = vpop.f32.mrf.mxu0
  %1449 = vdwg.mxu0
  %v1450 = vlaneseq
  %v1451 = vshrl.u32 %v1450, 7
  %v1452 = vsub.s32 0, %v1451
  %v1453 = vrot.slane %v1447, %v1452
  %v1454 = vsub.f32 %v1270, %v1453
  %v1455 = vsub.f32 %v1271, %v1453
  %v1456 = vsub.f32 %v1272, %v1453
  %v1457 = vsub.f32 %v1273, %v1453
  %v1458 = vlaneseq
  %v1459 = vshrl.u32 %v1458, 7
  %v1460 = vsub.s32 1, %v1459
  %v1461 = vrot.slane %v1447, %v1460
  %v1462 = vmul.f32 %v1454, %v1461
  %v1463 = vmul.f32 %v1455, %v1461
  %v1464 = vmul.f32 %v1456, %v1461
  %v1465 = vmul.f32 %v1457, %v1461
  %v1466 = vadd.f32 %v1462, %v764
  %v1467 = vadd.f32 %v1463, %v766
  %v1468 = vadd.f32 %v1464, %v768
  %v1469 = vadd.f32 %v1465, %v770
  %v1470 = vmax.f32 %v1466, 0.0
  %v1471 = vmax.f32 %v1467, 0.0
  %v1472 = vmax.f32 %v1468, 0.0
  %v1473 = vmax.f32 %v1469, 0.0
  %v1478 = vrot.slane %v1470, 7
  %v1479 = vrot.slane %v1471, 7
  %v1480 = vsel %vm583, %v1478, %v1479
  %v1481 = vrot.slane %v1472, 7
  %v1482 = vrot.slane %v1473, 7
  %v1483 = vsel %vm583, %v1481, %v1482
  %1490 = vst [vmem:[#allocation2] sm:$0xfe] %v1478
  %1491 = vst [vmem:[#allocation2 + $0x10] sm:$0xff] %v1480
  %1492 = vst [vmem:[#allocation2 + $0x20] sm:$0x1] %v1479
  %1493 = vst [vmem:[#allocation2 + $0x30] sm:$0xfe] %v1481
  %1494 = vst [vmem:[#allocation2 + $0x40] sm:$0xff] %v1483
  %1495 = vst [vmem:[#allocation2 + $0x50] sm:$0x1] %v1482
  %v1496 = vld [vmem:[#allocation2] sm:$0xff]
  %v1497 = vld [vmem:[#allocation2 + $0x8] sm:$0xff]
  %v1498 = vld [vmem:[#allocation2 + $0x10] sm:$0xff]
  %v1499 = vld [vmem:[#allocation2 + $0x18] sm:$0xff]
  %v1500 = vld [vmem:[#allocation2 + $0x20] sm:$0x3]
  %v1501 = vld [vmem:[#allocation2 + $0x28] sm:$0x3]
  %v1502 = vld [vmem:[#allocation2 + $0x30] sm:$0xff]
  %v1503 = vld [vmem:[#allocation2 + $0x38] sm:$0xff]
  %v1504 = vld [vmem:[#allocation2 + $0x40] sm:$0xff]
  %v1505 = vld [vmem:[#allocation2 + $0x48] sm:$0xff]
  %v1506 = vld [vmem:[#allocation2 + $0x50] sm:$0x3]
  %v1507 = vld [vmem:[#allocation2 + $0x58] sm:$0x3]
  %v1508 = vpack.c.bf16 %v1498, %v1496
  %v1509 = vpack.c.bf16 %v1499, %v1497
  %v1510 = vpack.c.bf16 %v1504, %v1502
  %v1511 = vpack.c.bf16 %v1505, %v1503
  %v1512 = vld [vmem:[%s11] sm:$0xff]
  %v1513 = vld [vmem:[%s11 + $0x8] sm:$0xff]
  %v1514 = vld [vmem:[%s11 + $0x10] sm:$0xff]
  %v1515 = vld [vmem:[%s11 + $0x18] sm:$0xff]
  %v1516 = vld [vmem:[%s11 + $0x20] sm:$0xff]
  %v1517 = vld [vmem:[%s11 + $0x28] sm:$0xff]
  %v1518 = vld [vmem:[%s11 + $0x30] sm:$0xff]
  %v1519 = vld [vmem:[%s11 + $0x38] sm:$0xff]
  %v1520 = vld [vmem:[%s11 + $0x40] sm:$0xff]
  %v1521 = vld [vmem:[%s11 + $0x48] sm:$0xff]
  %v1522 = vld [vmem:[%s11 + $0x50] sm:$0xff]
  %v1523 = vld [vmem:[%s11 + $0x58] sm:$0xff]
  %v1524 = vld [vmem:[%s11 + $0x60] sm:$0xff]
  %v1525 = vld [vmem:[%s11 + $0x68] sm:$0xff]
  %v1526 = vld [vmem:[%s11 + $0x70] sm:$0xff]
  %v1527 = vld [vmem:[%s11 + $0x78] sm:$0xff]
  %v1528 = vld [vmem:[%s11 + $0x80] sm:$0xff]
  %v1529 = vld [vmem:[%s11 + $0x88] sm:$0xff]
  %v1542 = vrot.slane %v1496, 1
  %v1543 = vrot.slane %v1498, 1
  %v1544 = vsel %vm147, %v1542, %v1543
  %v1545 = vrot.slane %v1497, 1
  %v1546 = vrot.slane %v1499, 1
  %v1547 = vsel %vm147, %v1545, %v1546
  %v1548 = vrot.slane %v1500, 1
  %v1549 = vsel %vm147, %v1543, %v1548
  %v1550 = vrot.slane %v1501, 1
  %v1551 = vsel %vm147, %v1546, %v1550
  %v1552 = vrot.slane %v1502, 1
  %v1553 = vrot.slane %v1504, 1
  %v1554 = vsel %vm147, %v1552, %v1553
  %v1555 = vrot.slane %v1503, 1
  %v1556 = vrot.slane %v1505, 1
  %v1557 = vsel %vm147, %v1555, %v1556
  %v1558 = vrot.slane %v1506, 1
  %v1559 = vsel %vm147, %v1553, %v1558
  %v1560 = vrot.slane %v1507, 1
  %v1561 = vsel %vm147, %v1556, %v1560
  %v1570 = vpack.c.bf16 %v1549, %v1544
  %v1571 = vpack.c.bf16 %v1551, %v1547
  %v1572 = vpack.c.bf16 %v1559, %v1554
  %v1573 = vpack.c.bf16 %v1561, %v1557
  %v1574 = vld [vmem:[%s12] sm:$0xff]
  %v1575 = vld [vmem:[%s12 + $0x8] sm:$0xff]
  %v1576 = vld [vmem:[%s12 + $0x10] sm:$0xff]
  %v1577 = vld [vmem:[%s12 + $0x18] sm:$0xff]
  %v1578 = vld [vmem:[%s12 + $0x20] sm:$0xff]
  %v1579 = vld [vmem:[%s12 + $0x28] sm:$0xff]
  %v1580 = vld [vmem:[%s12 + $0x30] sm:$0xff]
  %v1581 = vld [vmem:[%s12 + $0x38] sm:$0xff]
  %v1582 = vld [vmem:[%s12 + $0x40] sm:$0xff]
  %v1583 = vld [vmem:[%s12 + $0x48] sm:$0xff]
  %v1584 = vld [vmem:[%s12 + $0x50] sm:$0xff]
  %v1585 = vld [vmem:[%s12 + $0x58] sm:$0xff]
  %v1586 = vld [vmem:[%s12 + $0x60] sm:$0xff]
  %v1587 = vld [vmem:[%s12 + $0x68] sm:$0xff]
  %v1588 = vld [vmem:[%s12 + $0x70] sm:$0xff]
  %v1589 = vld [vmem:[%s12 + $0x78] sm:$0xff]
  %v1590 = vld [vmem:[%s12 + $0x80] sm:$0xff]
  %v1591 = vld [vmem:[%s12 + $0x88] sm:$0xff]
  %v1610 = vunpack.c.l.b16 %v1574
  %v1611 = vunpack.c.h.b16 %v1574
  %v1612 = vunpack.c.l.b16 %v1575
  %v1613 = vunpack.c.h.b16 %v1575
  %v1614 = vunpack.c.l.b16 %v1576
  %v1615 = vunpack.c.h.b16 %v1576
  %v1616 = vunpack.c.l.b16 %v1577
  %v1617 = vunpack.c.h.b16 %v1577
  %v1618 = vunpack.c.l.b16 %v1578
  %v1619 = vunpack.c.h.b16 %v1578
  %v1620 = vunpack.c.l.b16 %v1579
  %v1621 = vunpack.c.h.b16 %v1579
  %v1622 = vunpack.c.l.b16 %v1580
  %v1623 = vunpack.c.h.b16 %v1580
  %v1624 = vunpack.c.l.b16 %v1581
  %v1625 = vunpack.c.h.b16 %v1581
  %v1626 = vunpack.c.l.b16 %v1582
  %v1627 = vunpack.c.h.b16 %v1582
  %v1628 = vunpack.c.l.b16 %v1583
  %v1629 = vunpack.c.h.b16 %v1583
  %v1630 = vunpack.c.l.b16 %v1584
  %v1631 = vunpack.c.h.b16 %v1584
  %v1632 = vunpack.c.l.b16 %v1585
  %v1633 = vunpack.c.h.b16 %v1585
  %v1634 = vunpack.c.l.b16 %v1586
  %v1635 = vunpack.c.h.b16 %v1586
  %v1636 = vunpack.c.l.b16 %v1587
  %v1637 = vunpack.c.h.b16 %v1587
  %v1638 = vunpack.c.l.b16 %v1588
  %v1639 = vunpack.c.h.b16 %v1588
  %v1640 = vunpack.c.l.b16 %v1589
  %v1641 = vunpack.c.h.b16 %v1589
  %v1642 = vunpack.c.l.b16 %v1590
  %v1643 = vunpack.c.h.b16 %v1590
  %v1644 = vunpack.c.l.b16 %v1591
  %v1645 = vunpack.c.h.b16 %v1591
  %v1646 = vpack.c.b16 %v1612, %v1610
  %v1647 = vpack.c.b16 %v1613, %v1611
  %v1648 = vpack.c.b16 %v1616, %v1614
  %v1649 = vpack.c.b16 %v1617, %v1615
  %v1650 = vpack.c.b16 %v1620, %v1618
  %v1651 = vpack.c.b16 %v1621, %v1619
  %v1652 = vpack.c.b16 %v1624, %v1622
  %v1653 = vpack.c.b16 %v1625, %v1623
  %v1654 = vpack.c.b16 %v1628, %v1626
  %v1655 = vpack.c.b16 %v1629, %v1627
  %v1656 = vpack.c.b16 %v1632, %v1630
  %v1657 = vpack.c.b16 %v1633, %v1631
  %v1658 = vpack.c.b16 %v1636, %v1634
  %v1659 = vpack.c.b16 %v1637, %v1635
  %v1660 = vpack.c.b16 %v1640, %v1638
  %v1661 = vpack.c.b16 %v1641, %v1639
  %v1662 = vpack.c.b16 %v1644, %v1642
  %v1663 = vpack.c.b16 %v1645, %v1643
  %v1683 = vsel %vm111, %v1571, 0
  %v1686 = vsel %vm111, %v1573, 0
  %1688 = vmatprep.subr.bf16.mxu0 %v1661
  %1689 = vmatpush1.bf16.msra.mxu0 %v1660
  %1690 = vmatprep.subr.bf16.mxu0 %v1659
  %1691 = vmatpush1.bf16.msra.mxu0 %v1658
  %1692 = vmatprep.subr.bf16.mxu0 %v1657
  %1693 = vmatpush1.bf16.msra.mxu0 %v1656
  %1694 = vmatprep.subr.bf16.mxu0 %v1655
  %1695 = vmatpush1.bf16.msra.mxu0 %v1654
  %1696 = vmatprep.subr.bf16.mxu0 %v1653
  %1697 = vmatpush1.bf16.msra.mxu0 %v1652
  %1698 = vmatprep.subr.bf16.mxu0 %v1651
  %1699 = vmatpush1.bf16.msra.mxu0 %v1650
  %1700 = vmatprep.subr.bf16.mxu0 %v1649
  %1701 = vmatpush1.bf16.msra.mxu0 %v1648
  %1702 = vmatprep.subr.bf16.mxu0 %v1647
  %1703 = vmatpush1.bf16.msra.mxu0 %v1646
  %1704 = vmatprep.subr.bf16.mxu0 0
  %1705 = vmatpush2.bf16.msra.mxu0 0
  %1706 = vmatprep.subr.bf16.mxu0 0
  %1707 = vmatpush2.bf16.msra.mxu0 0
  %1708 = vmatprep.subr.bf16.mxu0 0
  %1709 = vmatpush2.bf16.msra.mxu0 0
  %1710 = vmatprep.subr.bf16.mxu0 0
  %1711 = vmatpush2.bf16.msra.mxu0 0
  %1712 = vmatprep.subr.bf16.mxu0 0
  %1713 = vmatpush2.bf16.msra.mxu0 0
  %1714 = vmatprep.subr.bf16.mxu0 0
  %1715 = vmatpush2.bf16.msra.mxu0 0
  %1716 = vmatprep.subr.bf16.mxu0 0
  %1717 = vmatpush2.bf16.msra.mxu0 0
  %1718 = vmatprep.subr.bf16.mxu0 %v1663
  %1719 = vmatpush2.bf16.msra.mxu0 %v1662
  %1720 = vmatprep.mubr.bf16.mxu0 %v1683
  %1721 = vmatmul.mubr.bf16.gmra.mxu0 %v1570
  %v1722 = vpop.f32.mrf.mxu0
  %v1723 = vadd.f32 0.0, %v1722
  %v1724 = vpop.f32.mrf.mxu0
  %v1725 = vadd.f32 0.0, %v1724
  %v1726 = vpop.f32.mrf.mxu0
  %v1727 = vadd.f32 0.0, %v1726
  %v1728 = vpop.f32.mrf.mxu0
  %v1729 = vadd.f32 0.0, %v1728
  %1730 = vmatprep.mubr.bf16.mxu0 %v1686
  %1731 = vmatmul.mubr.bf16.gmra.mxu0 %v1572
  %v1732 = vpop.f32.mrf.mxu0
  %v1733 = vadd.f32 0.0, %v1732
  %v1734 = vpop.f32.mrf.mxu0
  %v1735 = vadd.f32 0.0, %v1734
  %v1736 = vpop.f32.mrf.mxu0
  %v1737 = vadd.f32 0.0, %v1736
  %v1738 = vpop.f32.mrf.mxu0
  %v1739 = vadd.f32 0.0, %v1738
  %1740 = vdwg.mxu0
  %v1759 = vunpack.c.l.b16 %v1512
  %v1760 = vunpack.c.h.b16 %v1512
  %v1761 = vunpack.c.l.b16 %v1513
  %v1762 = vunpack.c.h.b16 %v1513
  %v1763 = vunpack.c.l.b16 %v1514
  %v1764 = vunpack.c.h.b16 %v1514
  %v1765 = vunpack.c.l.b16 %v1515
  %v1766 = vunpack.c.h.b16 %v1515
  %v1767 = vunpack.c.l.b16 %v1516
  %v1768 = vunpack.c.h.b16 %v1516
  %v1769 = vunpack.c.l.b16 %v1517
  %v1770 = vunpack.c.h.b16 %v1517
  %v1771 = vunpack.c.l.b16 %v1518
  %v1772 = vunpack.c.h.b16 %v1518
  %v1773 = vunpack.c.l.b16 %v1519
  %v1774 = vunpack.c.h.b16 %v1519
  %v1775 = vunpack.c.l.b16 %v1520
  %v1776 = vunpack.c.h.b16 %v1520
  %v1777 = vunpack.c.l.b16 %v1521
  %v1778 = vunpack.c.h.b16 %v1521
  %v1779 = vunpack.c.l.b16 %v1522
  %v1780 = vunpack.c.h.b16 %v1522
  %v1781 = vunpack.c.l.b16 %v1523
  %v1782 = vunpack.c.h.b16 %v1523
  %v1783 = vunpack.c.l.b16 %v1524
  %v1784 = vunpack.c.h.b16 %v1524
  %v1785 = vunpack.c.l.b16 %v1525
  %v1786 = vunpack.c.h.b16 %v1525
  %v1787 = vunpack.c.l.b16 %v1526
  %v1788 = vunpack.c.h.b16 %v1526
  %v1789 = vunpack.c.l.b16 %v1527
  %v1790 = vunpack.c.h.b16 %v1527
  %v1791 = vunpack.c.l.b16 %v1528
  %v1792 = vunpack.c.h.b16 %v1528
  %v1793 = vunpack.c.l.b16 %v1529
  %v1794 = vunpack.c.h.b16 %v1529
  %v1795 = vpack.c.b16 %v1761, %v1759
  %v1796 = vpack.c.b16 %v1762, %v1760
  %v1797 = vpack.c.b16 %v1765, %v1763
  %v1798 = vpack.c.b16 %v1766, %v1764
  %v1799 = vpack.c.b16 %v1769, %v1767
  %v1800 = vpack.c.b16 %v1770, %v1768
  %v1801 = vpack.c.b16 %v1773, %v1771
  %v1802 = vpack.c.b16 %v1774, %v1772
  %v1803 = vpack.c.b16 %v1777, %v1775
  %v1804 = vpack.c.b16 %v1778, %v1776
  %v1805 = vpack.c.b16 %v1781, %v1779
  %v1806 = vpack.c.b16 %v1782, %v1780
  %v1807 = vpack.c.b16 %v1785, %v1783
  %v1808 = vpack.c.b16 %v1786, %v1784
  %v1809 = vpack.c.b16 %v1789, %v1787
  %v1810 = vpack.c.b16 %v1790, %v1788
  %v1811 = vpack.c.b16 %v1793, %v1791
  %v1812 = vpack.c.b16 %v1794, %v1792
  %v1832 = vsel %vm111, %v1509, 0
  %v1835 = vsel %vm111, %v1511, 0
  %1837 = vmatprep.subr.bf16.mxu0 %v1810
  %1838 = vmatpush1.bf16.msra.mxu0 %v1809
  %1839 = vmatprep.subr.bf16.mxu0 %v1808
  %1840 = vmatpush1.bf16.msra.mxu0 %v1807
  %1841 = vmatprep.subr.bf16.mxu0 %v1806
  %1842 = vmatpush1.bf16.msra.mxu0 %v1805
  %1843 = vmatprep.subr.bf16.mxu0 %v1804
  %1844 = vmatpush1.bf16.msra.mxu0 %v1803
  %1845 = vmatprep.subr.bf16.mxu0 %v1802
  %1846 = vmatpush1.bf16.msra.mxu0 %v1801
  %1847 = vmatprep.subr.bf16.mxu0 %v1800
  %1848 = vmatpush1.bf16.msra.mxu0 %v1799
  %1849 = vmatprep.subr.bf16.mxu0 %v1798
  %1850 = vmatpush1.bf16.msra.mxu0 %v1797
  %1851 = vmatprep.subr.bf16.mxu0 %v1796
  %1852 = vmatpush1.bf16.msra.mxu0 %v1795
  %1853 = vmatprep.subr.bf16.mxu0 0
  %1854 = vmatpush2.bf16.msra.mxu0 0
  %1855 = vmatprep.subr.bf16.mxu0 0
  %1856 = vmatpush2.bf16.msra.mxu0 0
  %1857 = vmatprep.subr.bf16.mxu0 0
  %1858 = vmatpush2.bf16.msra.mxu0 0
  %1859 = vmatprep.subr.bf16.mxu0 0
  %1860 = vmatpush2.bf16.msra.mxu0 0
  %1861 = vmatprep.subr.bf16.mxu0 0
  %1862 = vmatpush2.bf16.msra.mxu0 0
  %1863 = vmatprep.subr.bf16.mxu0 0
  %1864 = vmatpush2.bf16.msra.mxu0 0
  %1865 = vmatprep.subr.bf16.mxu0 0
  %1866 = vmatpush2.bf16.msra.mxu0 0
  %1867 = vmatprep.subr.bf16.mxu0 %v1812
  %1868 = vmatpush2.bf16.msra.mxu0 %v1811
  %1869 = vmatprep.mubr.bf16.mxu0 %v1832
  %1870 = vmatmul.mubr.bf16.gmra.mxu0 %v1508
  %v1871 = vpop.f32.mrf.mxu0
  %v1872 = vadd.f32 %v1723, %v1871
  %v1873 = vpop.f32.mrf.mxu0
  %v1874 = vadd.f32 %v1725, %v1873
  %v1875 = vpop.f32.mrf.mxu0
  %v1876 = vadd.f32 %v1727, %v1875
  %v1877 = vpop.f32.mrf.mxu0
  %v1878 = vadd.f32 %v1729, %v1877
  %1879 = vmatprep.mubr.bf16.mxu0 %v1835
  %1880 = vmatmul.mubr.bf16.gmra.mxu0 %v1510
  %v1881 = vpop.f32.mrf.mxu0
  %v1882 = vadd.f32 %v1733, %v1881
  %v1883 = vpop.f32.mrf.mxu0
  %v1884 = vadd.f32 %v1735, %v1883
  %v1885 = vpop.f32.mrf.mxu0
  %v1886 = vadd.f32 %v1737, %v1885
  %v1887 = vpop.f32.mrf.mxu0
  %v1888 = vadd.f32 %v1739, %v1887
  %1889 = vdwg.mxu0
  %v1890 = vrot.slane %v1496, 2
  %v1891 = vrot.slane %v1498, 2
  %v1892 = vsel %vm395, %v1890, %v1891
  %v1893 = vrot.slane %v1497, 2
  %v1894 = vrot.slane %v1499, 2
  %v1895 = vsel %vm395, %v1893, %v1894
  %v1896 = vrot.slane %v1500, 2
  %v1897 = vsel %vm395, %v1891, %v1896
  %v1898 = vrot.slane %v1501, 2
  %v1899 = vsel %vm395, %v1894, %v1898
  %v1900 = vrot.slane %v1502, 2
  %v1901 = vrot.slane %v1504, 2
  %v1902 = vsel %vm395, %v1900, %v1901
  %v1903 = vrot.slane %v1503, 2
  %v1904 = vrot.slane %v1505, 2
  %v1905 = vsel %vm395, %v1903, %v1904
  %v1906 = vrot.slane %v1506, 2
  %v1907 = vsel %vm395, %v1901, %v1906
  %v1908 = vrot.slane %v1507, 2
  %v1909 = vsel %vm395, %v1904, %v1908
  %v1918 = vpack.c.bf16 %v1897, %v1892
  %v1919 = vpack.c.bf16 %v1899, %v1895
  %v1920 = vpack.c.bf16 %v1907, %v1902
  %v1921 = vpack.c.bf16 %v1909, %v1905
  %v1922 = vld [vmem:[%s13] sm:$0xff]
  %v1923 = vld [vmem:[%s13 + $0x8] sm:$0xff]
  %v1924 = vld [vmem:[%s13 + $0x10] sm:$0xff]
  %v1925 = vld [vmem:[%s13 + $0x18] sm:$0xff]
  %v1926 = vld [vmem:[%s13 + $0x20] sm:$0xff]
  %v1927 = vld [vmem:[%s13 + $0x28] sm:$0xff]
  %v1928 = vld [vmem:[%s13 + $0x30] sm:$0xff]
  %v1929 = vld [vmem:[%s13 + $0x38] sm:$0xff]
  %v1930 = vld [vmem:[%s13 + $0x40] sm:$0xff]
  %v1931 = vld [vmem:[%s13 + $0x48] sm:$0xff]
  %v1932 = vld [vmem:[%s13 + $0x50] sm:$0xff]
  %v1933 = vld [vmem:[%s13 + $0x58] sm:$0xff]
  %v1934 = vld [vmem:[%s13 + $0x60] sm:$0xff]
  %v1935 = vld [vmem:[%s13 + $0x68] sm:$0xff]
  %v1936 = vld [vmem:[%s13 + $0x70] sm:$0xff]
  %v1937 = vld [vmem:[%s13 + $0x78] sm:$0xff]
  %v1938 = vld [vmem:[%s13 + $0x80] sm:$0xff]
  %v1939 = vld [vmem:[%s13 + $0x88] sm:$0xff]
  %v1958 = vunpack.c.l.b16 %v1922
  %v1959 = vunpack.c.h.b16 %v1922
  %v1960 = vunpack.c.l.b16 %v1923
  %v1961 = vunpack.c.h.b16 %v1923
  %v1962 = vunpack.c.l.b16 %v1924
  %v1963 = vunpack.c.h.b16 %v1924
  %v1964 = vunpack.c.l.b16 %v1925
  %v1965 = vunpack.c.h.b16 %v1925
  %v1966 = vunpack.c.l.b16 %v1926
  %v1967 = vunpack.c.h.b16 %v1926
  %v1968 = vunpack.c.l.b16 %v1927
  %v1969 = vunpack.c.h.b16 %v1927
  %v1970 = vunpack.c.l.b16 %v1928
  %v1971 = vunpack.c.h.b16 %v1928
  %v1972 = vunpack.c.l.b16 %v1929
  %v1973 = vunpack.c.h.b16 %v1929
  %v1974 = vunpack.c.l.b16 %v1930
  %v1975 = vunpack.c.h.b16 %v1930
  %v1976 = vunpack.c.l.b16 %v1931
  %v1977 = vunpack.c.h.b16 %v1931
  %v1978 = vunpack.c.l.b16 %v1932
  %v1979 = vunpack.c.h.b16 %v1932
  %v1980 = vunpack.c.l.b16 %v1933
  %v1981 = vunpack.c.h.b16 %v1933
  %v1982 = vunpack.c.l.b16 %v1934
  %v1983 = vunpack.c.h.b16 %v1934
  %v1984 = vunpack.c.l.b16 %v1935
  %v1985 = vunpack.c.h.b16 %v1935
  %v1986 = vunpack.c.l.b16 %v1936
  %v1987 = vunpack.c.h.b16 %v1936
  %v1988 = vunpack.c.l.b16 %v1937
  %v1989 = vunpack.c.h.b16 %v1937
  %v1990 = vunpack.c.l.b16 %v1938
  %v1991 = vunpack.c.h.b16 %v1938
  %v1992 = vunpack.c.l.b16 %v1939
  %v1993 = vunpack.c.h.b16 %v1939
  %v1994 = vpack.c.b16 %v1960, %v1958
  %v1995 = vpack.c.b16 %v1961, %v1959
  %v1996 = vpack.c.b16 %v1964, %v1962
  %v1997 = vpack.c.b16 %v1965, %v1963
  %v1998 = vpack.c.b16 %v1968, %v1966
  %v1999 = vpack.c.b16 %v1969, %v1967
  %v2000 = vpack.c.b16 %v1972, %v1970
  %v2001 = vpack.c.b16 %v1973, %v1971
  %v2002 = vpack.c.b16 %v1976, %v1974
  %v2003 = vpack.c.b16 %v1977, %v1975
  %v2004 = vpack.c.b16 %v1980, %v1978
  %v2005 = vpack.c.b16 %v1981, %v1979
  %v2006 = vpack.c.b16 %v1984, %v1982
  %v2007 = vpack.c.b16 %v1985, %v1983
  %v2008 = vpack.c.b16 %v1988, %v1986
  %v2009 = vpack.c.b16 %v1989, %v1987
  %v2010 = vpack.c.b16 %v1992, %v1990
  %v2011 = vpack.c.b16 %v1993, %v1991
  %v2031 = vsel %vm111, %v1919, 0
  %v2034 = vsel %vm111, %v1921, 0
  %2036 = vmatprep.subr.bf16.mxu0 %v2009
  %2037 = vmatpush1.bf16.msra.mxu0 %v2008
  %2038 = vmatprep.subr.bf16.mxu0 %v2007
  %2039 = vmatpush1.bf16.msra.mxu0 %v2006
  %2040 = vmatprep.subr.bf16.mxu0 %v2005
  %2041 = vmatpush1.bf16.msra.mxu0 %v2004
  %2042 = vmatprep.subr.bf16.mxu0 %v2003
  %2043 = vmatpush1.bf16.msra.mxu0 %v2002
  %2044 = vmatprep.subr.bf16.mxu0 %v2001
  %2045 = vmatpush1.bf16.msra.mxu0 %v2000
  %2046 = vmatprep.subr.bf16.mxu0 %v1999
  %2047 = vmatpush1.bf16.msra.mxu0 %v1998
  %2048 = vmatprep.subr.bf16.mxu0 %v1997
  %2049 = vmatpush1.bf16.msra.mxu0 %v1996
  %2050 = vmatprep.subr.bf16.mxu0 %v1995
  %2051 = vmatpush1.bf16.msra.mxu0 %v1994
  %2052 = vmatprep.subr.bf16.mxu0 0
  %2053 = vmatpush2.bf16.msra.mxu0 0
  %2054 = vmatprep.subr.bf16.mxu0 0
  %2055 = vmatpush2.bf16.msra.mxu0 0
  %2056 = vmatprep.subr.bf16.mxu0 0
  %2057 = vmatpush2.bf16.msra.mxu0 0
  %2058 = vmatprep.subr.bf16.mxu0 0
  %2059 = vmatpush2.bf16.msra.mxu0 0
  %2060 = vmatprep.subr.bf16.mxu0 0
  %2061 = vmatpush2.bf16.msra.mxu0 0
  %2062 = vmatprep.subr.bf16.mxu0 0
  %2063 = vmatpush2.bf16.msra.mxu0 0
  %2064 = vmatprep.subr.bf16.mxu0 0
  %2065 = vmatpush2.bf16.msra.mxu0 0
  %2066 = vmatprep.subr.bf16.mxu0 %v2011
  %2067 = vmatpush2.bf16.msra.mxu0 %v2010
  %2068 = vmatprep.mubr.bf16.mxu0 %v2031
  %2069 = vmatmul.mubr.bf16.gmra.mxu0 %v1918
  %v2070 = vpop.f32.mrf.mxu0
  %v2071 = vadd.f32 0.0, %v2070
  %v2072 = vpop.f32.mrf.mxu0
  %v2073 = vadd.f32 0.0, %v2072
  %v2074 = vpop.f32.mrf.mxu0
  %v2075 = vadd.f32 0.0, %v2074
  %v2076 = vpop.f32.mrf.mxu0
  %v2077 = vadd.f32 0.0, %v2076
  %2078 = vmatprep.mubr.bf16.mxu0 %v2034
  %2079 = vmatmul.mubr.bf16.gmra.mxu0 %v1920
  %v2080 = vpop.f32.mrf.mxu0
  %v2081 = vadd.f32 0.0, %v2080
  %v2082 = vpop.f32.mrf.mxu0
  %v2083 = vadd.f32 0.0, %v2082
  %v2084 = vpop.f32.mrf.mxu0
  %v2085 = vadd.f32 0.0, %v2084
  %v2086 = vpop.f32.mrf.mxu0
  %v2087 = vadd.f32 0.0, %v2086
  %2088 = vdwg.mxu0
  %v2089 = vadd.f32 %v1872, %v2071
  %v2090 = vadd.f32 %v1874, %v2073
  %v2091 = vadd.f32 %v1876, %v2075
  %v2092 = vadd.f32 %v1878, %v2077
  %v2093 = vadd.f32 %v1882, %v2081
  %v2094 = vadd.f32 %v1884, %v2083
  %v2095 = vadd.f32 %v1886, %v2085
  %v2096 = vadd.f32 %v1888, %v2087
  %v2097 = vadd.f32 %v2089, %v2091
  %v2098 = vadd.f32 %v2097, %v2093
  %v2099 = vadd.f32 %v2098, %v2095
  %v2100 = vrot.slane %v2099, 4
  %v2101 = vadd.f32 %v2099, %v2100
  %v2102 = vrot.slane %v2101, 2
  %v2103 = vadd.f32 %v2101, %v2102
  %v2104 = vrot.slane %v2103, 1
  %v2105 = vadd.f32 %v2103, %v2104
  %v2106 = vadd.f32 %v2090, %v2092
  %v2107 = vadd.f32 %v2106, %v2094
  %v2108 = vadd.f32 %v2107, %v2096
  %v2109 = vrot.slane %v2108, 4
  %v2110 = vadd.f32 %v2108, %v2109
  %v2111 = vrot.slane %v2110, 2
  %v2112 = vadd.f32 %v2110, %v2111
  %v2113 = vrot.slane %v2112, 1
  %v2114 = vadd.f32 %v2112, %v2113
  %v2115 = vmul.f32 %v2089, %v2089
  %v2116 = vmul.f32 %v2090, %v2090
  %v2117 = vmul.f32 %v2091, %v2091
  %v2118 = vmul.f32 %v2092, %v2092
  %v2119 = vmul.f32 %v2093, %v2093
  %v2120 = vmul.f32 %v2094, %v2094
  %v2121 = vmul.f32 %v2095, %v2095
  %v2122 = vmul.f32 %v2096, %v2096
  %v2123 = vadd.f32 %v2115, %v2117
  %v2124 = vadd.f32 %v2123, %v2119
  %v2125 = vadd.f32 %v2124, %v2121
  %v2126 = vrot.slane %v2125, 4
  %v2127 = vadd.f32 %v2125, %v2126
  %v2128 = vrot.slane %v2127, 2
  %v2129 = vadd.f32 %v2127, %v2128
  %v2130 = vrot.slane %v2129, 1
  %v2131 = vadd.f32 %v2129, %v2130
  %v2132 = vadd.f32 %v2116, %v2118
  %v2133 = vadd.f32 %v2132, %v2120
  %v2134 = vadd.f32 %v2133, %v2122
  %v2135 = vrot.slane %v2134, 4
  %v2136 = vadd.f32 %v2134, %v2135
  %v2137 = vrot.slane %v2136, 2
  %v2138 = vadd.f32 %v2136, %v2137
  %v2139 = vrot.slane %v2138, 1
  %v2140 = vadd.f32 %v2138, %v2139
  %v2141 = vsel %vm583, %v2105, %v2131
  %v2142 = vsel %vm583, %v2114, %v2140
  %2143 = vmatprep.subr.mxu0 0.0
  %2144 = vmatpush1.msra.mxu0 %v89
  %2145 = vmatprep.subr.mxu0 0.0
  %2146 = vmatpush1.msra.mxu0 %v88
  %2147 = vmatprep.subr.mxu0 0.0
  %2148 = vmatpush1.msra.mxu0 %v87
  %2149 = vmatprep.subr.mxu0 0.0
  %2150 = vmatpush1.msra.mxu0 %v86
  %2151 = vmatprep.subr.mxu0 0.0
  %2152 = vmatpush1.msra.mxu0 %v85
  %2153 = vmatprep.subr.mxu0 0.0
  %2154 = vmatpush1.msra.mxu0 %v84
  %2155 = vmatprep.subr.mxu0 0.0
  %2156 = vmatpush1.msra.mxu0 %v83
  %2157 = vmatprep.subr.mxu0 0.0
  %2158 = vmatpush1.msra.mxu0 %v82
  %2159 = vmatprep.subr.mxu0 0.0
  %2160 = vmatpush1.msra.mxu0 %v81
  %2161 = vmatprep.subr.mxu0 0.0
  %2162 = vmatpush1.msra.mxu0 %v80
  %2163 = vmatprep.subr.mxu0 0.0
  %2164 = vmatpush1.msra.mxu0 %v79
  %2165 = vmatprep.subr.mxu0 0.0
  %2166 = vmatpush1.msra.mxu0 %v78
  %2167 = vmatprep.subr.mxu0 0.0
  %2168 = vmatpush1.msra.mxu0 %v77
  %2169 = vmatprep.subr.mxu0 0.0
  %2170 = vmatpush1.msra.mxu0 %v76
  %2171 = vmatprep.subr.mxu0 0.0
  %2172 = vmatpush1.msra.mxu0 %v75
  %2173 = vmatprep.subr.mxu0 0.0
  %2174 = vmatpush1.msra.mxu0 %v74
  %2175 = vmatprep.subr.mxu0 0.0
  %2176 = vmatpush2.msra.mxu0 %v105
  %2177 = vmatprep.subr.mxu0 0.0
  %2178 = vmatpush2.msra.mxu0 %v104
  %2179 = vmatprep.subr.mxu0 0.0
  %2180 = vmatpush2.msra.mxu0 %v103
  %2181 = vmatprep.subr.mxu0 0.0
  %2182 = vmatpush2.msra.mxu0 %v102
  %2183 = vmatprep.subr.mxu0 0.0
  %2184 = vmatpush2.msra.mxu0 %v101
  %2185 = vmatprep.subr.mxu0 0.0
  %2186 = vmatpush2.msra.mxu0 %v100
  %2187 = vmatprep.subr.mxu0 0.0
  %2188 = vmatpush2.msra.mxu0 %v99
  %2189 = vmatprep.subr.mxu0 0.0
  %2190 = vmatpush2.msra.mxu0 %v98
  %2191 = vmatprep.subr.mxu0 0.0
  %2192 = vmatpush2.msra.mxu0 %v97
  %2193 = vmatprep.subr.mxu0 0.0
  %2194 = vmatpush2.msra.mxu0 %v96
  %2195 = vmatprep.subr.mxu0 0.0
  %2196 = vmatpush2.msra.mxu0 %v95
  %2197 = vmatprep.subr.mxu0 0.0
  %2198 = vmatpush2.msra.mxu0 %v94
  %2199 = vmatprep.subr.mxu0 0.0
  %2200 = vmatpush2.msra.mxu0 %v93
  %2201 = vmatprep.subr.mxu0 0.0
  %2202 = vmatpush2.msra.mxu0 %v92
  %2203 = vmatprep.subr.mxu0 0.0
  %2204 = vmatpush2.msra.mxu0 %v91
  %2205 = vmatprep.subr.mxu0 0.0
  %2206 = vmatpush2.msra.mxu0 %v90
  %2207 = vmatprep.mubr.f32.mxu0 %v2142
  %2208 = vmatmul.mubr.f32.gmra.mxu0 %v2141
  %v2209 = vpop.f32.mrf.mxu0
  %v2210 = vadd.f32 0.0, %v2209
  %v2211 = vpop.f32.mrf.mxu0
  %2212 = vdwg.mxu0
  %v2213 = vmul.f32 %v2210, 0.001953125
  %v2214 = vmul.f32 %v2213, %v2213
  %v2216 = vrot.slane %v2214, 7
  %v2218 = vsub.f32 %v2213, %v2216
  %v2219 = vadd.f32 %v2218, 1e-05
  %v2220 = vrsqrt.pop %v2219
  %v2221 = vsel %vm583, %v2213, %v2220
  %v2223 = vsel %vm111, %v2221, 0
  %2225 = vmatprep.subr.mxu0 0.0
  %2226 = vmatpush1.msra.mxu0 0.0
  %2227 = vmatprep.subr.mxu0 0.0
  %2228 = vmatpush1.msra.mxu0 0.0
  %2229 = vmatprep.subr.mxu0 0.0
  %2230 = vmatpush1.msra.mxu0 0.0
  %2231 = vmatprep.subr.mxu0 0.0
  %2232 = vmatpush1.msra.mxu0 0.0
  %2233 = vmatprep.subr.mxu0 0.0
  %2234 = vmatpush1.msra.mxu0 0.0
  %2235 = vmatprep.subr.mxu0 0.0
  %2236 = vmatpush1.msra.mxu0 0.0
  %2237 = vmatprep.subr.mxu0 0.0
  %2238 = vmatpush1.msra.mxu0 0.0
  %2239 = vmatprep.subr.mxu0 0.0
  %2240 = vmatpush1.msra.mxu0 0.0
  %2241 = vmatprep.subr.mxu0 0.0
  %2242 = vmatpush1.msra.mxu0 0.0
  %2243 = vmatprep.subr.mxu0 0.0
  %2244 = vmatpush1.msra.mxu0 0.0
  %2245 = vmatprep.subr.mxu0 0.0
  %2246 = vmatpush1.msra.mxu0 0.0
  %2247 = vmatprep.subr.mxu0 0.0
  %2248 = vmatpush1.msra.mxu0 0.0
  %2249 = vmatprep.subr.mxu0 0.0
  %2250 = vmatpush1.msra.mxu0 0.0
  %2251 = vmatprep.subr.mxu0 0.0
  %2252 = vmatpush1.msra.mxu0 0.0
  %2253 = vmatprep.subr.mxu0 %v109
  %2254 = vmatpush1.msra.mxu0 %v108
  %2255 = vmatprep.subr.mxu0 %v107
  %2256 = vmatpush1.msra.mxu0 %v106
  %2257 = vmatprep.subr.mxu0 0.0
  %2258 = vmatpush2.msra.mxu0 0.0
  %2259 = vmatprep.subr.mxu0 0.0
  %2260 = vmatpush2.msra.mxu0 0.0
  %2261 = vmatprep.subr.mxu0 0.0
  %2262 = vmatpush2.msra.mxu0 0.0
  %2263 = vmatprep.subr.mxu0 0.0
  %2264 = vmatpush2.msra.mxu0 0.0
  %2265 = vmatprep.subr.mxu0 0.0
  %2266 = vmatpush2.msra.mxu0 0.0
  %2267 = vmatprep.subr.mxu0 0.0
  %2268 = vmatpush2.msra.mxu0 0.0
  %2269 = vmatprep.subr.mxu0 0.0
  %2270 = vmatpush2.msra.mxu0 0.0
  %2271 = vmatprep.subr.mxu0 0.0
  %2272 = vmatpush2.msra.mxu0 0.0
  %2273 = vmatprep.subr.mxu0 0.0
  %2274 = vmatpush2.msra.mxu0 0.0
  %2275 = vmatprep.subr.mxu0 0.0
  %2276 = vmatpush2.msra.mxu0 0.0
  %2277 = vmatprep.subr.mxu0 0.0
  %2278 = vmatpush2.msra.mxu0 0.0
  %2279 = vmatprep.subr.mxu0 0.0
  %2280 = vmatpush2.msra.mxu0 0.0
  %2281 = vmatprep.subr.mxu0 0.0
  %2282 = vmatpush2.msra.mxu0 0.0
  %2283 = vmatprep.subr.mxu0 0.0
  %2284 = vmatpush2.msra.mxu0 0.0
  %2285 = vmatprep.subr.mxu0 0.0
  %2286 = vmatpush2.msra.mxu0 0.0
  %2287 = vmatprep.subr.mxu0 0.0
  %2288 = vmatpush2.msra.mxu0 0.0
  %2289 = vmatprep.mubr.f32.mxu0 0.0
  %2290 = vmatmul.mubr.f32.gmra.mxu0 %v2223
  %v2291 = vpop.f32.mrf.mxu0
  %v2292 = vadd.f32 0.0, %v2291
  %v2293 = vpop.f32.mrf.mxu0
  %v2294 = vadd.f32 0.0, %v2293
  %2295 = vdwg.mxu0
  %v2296 = vlaneseq
  %v2297 = vshrl.u32 %v2296, 7
  %v2298 = vsub.s32 0, %v2297
  %v2299 = vrot.slane %v2292, %v2298
  %v2300 = vlaneseq
  %v2301 = vshrl.u32 %v2300, 7
  %v2302 = vsub.s32 0, %v2301
  %v2303 = vrot.slane %v2294, %v2302
  %v2304 = vsub.f32 %v2089, %v2299
  %v2305 = vsub.f32 %v2090, %v2303
  %v2306 = vsub.f32 %v2091, %v2299
  %v2307 = vsub.f32 %v2092, %v2303
  %v2308 = vsub.f32 %v2093, %v2299
  %v2309 = vsub.f32 %v2094, %v2303
  %v2310 = vsub.f32 %v2095, %v2299
  %v2311 = vsub.f32 %v2096, %v2303
  %v2312 = vlaneseq
  %v2313 = vshrl.u32 %v2312, 7
  %v2314 = vsub.s32 1, %v2313
  %v2315 = vrot.slane %v2292, %v2314
  %v2316 = vlaneseq
  %v2317 = vshrl.u32 %v2316, 7
  %v2318 = vsub.s32 1, %v2317
  %v2319 = vrot.slane %v2294, %v2318
  %v2320 = vmul.f32 %v2304, %v2315
  %v2321 = vmul.f32 %v2305, %v2319
  %v2322 = vmul.f32 %v2306, %v2315
  %v2323 = vmul.f32 %v2307, %v2319
  %v2324 = vmul.f32 %v2308, %v2315
  %v2325 = vmul.f32 %v2309, %v2319
  %v2326 = vmul.f32 %v2310, %v2315
  %v2327 = vmul.f32 %v2311, %v2319
  %v2328 = vmax.f32 %v2320, 0.0
  %v2329 = vmax.f32 %v2322, 0.0
  %v2330 = vmax.f32 %v2324, 0.0
  %v2331 = vmax.f32 %v2326, 0.0
  %v2336 = vrot.slane %v2328, 7
  %v2337 = vrot.slane %v2329, 7
  %v2338 = vsel %vm583, %v2336, %v2337
  %v2339 = vrot.slane %v2330, 7
  %v2340 = vrot.slane %v2331, 7
  %v2341 = vsel %vm583, %v2339, %v2340
  %2348 = vst [vmem:[#allocation2] sm:$0xfe] %v2336
  %2349 = vst [vmem:[#allocation2 + $0x10] sm:$0xff] %v2338
  %2350 = vst [vmem:[#allocation2 + $0x20] sm:$0x1] %v2337
  %2351 = vst [vmem:[#allocation2 + $0x30] sm:$0xfe] %v2339
  %2352 = vst [vmem:[#allocation2 + $0x40] sm:$0xff] %v2341
  %2353 = vst [vmem:[#allocation2 + $0x50] sm:$0x1] %v2340
  %v2354 = vld [vmem:[#allocation2] sm:$0xff]
  %v2355 = vld [vmem:[#allocation2 + $0x8] sm:$0xff]
  %v2356 = vld [vmem:[#allocation2 + $0x10] sm:$0xff]
  %v2357 = vld [vmem:[#allocation2 + $0x18] sm:$0xff]
  %v2358 = vld [vmem:[#allocation2 + $0x20] sm:$0x3]
  %v2359 = vld [vmem:[#allocation2 + $0x28] sm:$0x3]
  %v2360 = vld [vmem:[#allocation2 + $0x30] sm:$0xff]
  %v2361 = vld [vmem:[#allocation2 + $0x38] sm:$0xff]
  %v2362 = vld [vmem:[#allocation2 + $0x40] sm:$0xff]
  %v2363 = vld [vmem:[#allocation2 + $0x48] sm:$0xff]
  %v2364 = vld [vmem:[#allocation2 + $0x50] sm:$0x3]
  %v2365 = vld [vmem:[#allocation2 + $0x58] sm:$0x3]
  %v2366 = vpack.c.bf16 %v2356, %v2354
  %v2367 = vpack.c.bf16 %v2357, %v2355
  %v2368 = vpack.c.bf16 %v2362, %v2360
  %v2369 = vpack.c.bf16 %v2363, %v2361
  %v2370 = vld [vmem:[%s14] sm:$0xf]
  %v2371 = vld [vmem:[%s14 + $0x4] sm:$0xf]
  %v2372 = vld [vmem:[%s14 + $0x8] sm:$0xf]
  %v2373 = vld [vmem:[%s14 + $0xc] sm:$0xf]
  %v2374 = vld [vmem:[%s14 + $0x10] sm:$0xf]
  %v2375 = vld [vmem:[%s14 + $0x14] sm:$0xf]
  %v2376 = vld [vmem:[%s14 + $0x18] sm:$0xf]
  %v2377 = vld [vmem:[%s14 + $0x1c] sm:$0xf]
  %v2378 = vld [vmem:[%s14 + $0x20] sm:$0xf]
  %v2379 = vld [vmem:[%s14 + $0x24] sm:$0xf]
  %v2380 = vld [vmem:[%s14 + $0x28] sm:$0xf]
  %v2381 = vld [vmem:[%s14 + $0x2c] sm:$0xf]
  %v2382 = vld [vmem:[%s14 + $0x30] sm:$0xf]
  %v2383 = vld [vmem:[%s14 + $0x34] sm:$0xf]
  %v2384 = vld [vmem:[%s14 + $0x38] sm:$0xf]
  %v2385 = vld [vmem:[%s14 + $0x3c] sm:$0xf]
  %v2386 = vld [vmem:[%s14 + $0x40] sm:$0xf]
  %v2387 = vld [vmem:[%s14 + $0x44] sm:$0xf]
  %v2400 = vrot.slane %v2354, 1
  %v2401 = vrot.slane %v2356, 1
  %v2402 = vsel %vm147, %v2400, %v2401
  %v2403 = vrot.slane %v2355, 1
  %v2404 = vrot.slane %v2357, 1
  %v2405 = vsel %vm147, %v2403, %v2404
  %v2406 = vrot.slane %v2358, 1
  %v2407 = vsel %vm147, %v2401, %v2406
  %v2408 = vrot.slane %v2359, 1
  %v2409 = vsel %vm147, %v2404, %v2408
  %v2410 = vrot.slane %v2360, 1
  %v2411 = vrot.slane %v2362, 1
  %v2412 = vsel %vm147, %v2410, %v2411
  %v2413 = vrot.slane %v2361, 1
  %v2414 = vrot.slane %v2363, 1
  %v2415 = vsel %vm147, %v2413, %v2414
  %v2416 = vrot.slane %v2364, 1
  %v2417 = vsel %vm147, %v2411, %v2416
  %v2418 = vrot.slane %v2365, 1
  %v2419 = vsel %vm147, %v2414, %v2418
  %v2428 = vpack.c.bf16 %v2407, %v2402
  %v2429 = vpack.c.bf16 %v2409, %v2405
  %v2430 = vpack.c.bf16 %v2417, %v2412
  %v2431 = vpack.c.bf16 %v2419, %v2415
  %v2432 = vld [vmem:[%s15] sm:$0xf]
  %v2433 = vld [vmem:[%s15 + $0x4] sm:$0xf]
  %v2434 = vld [vmem:[%s15 + $0x8] sm:$0xf]
  %v2435 = vld [vmem:[%s15 + $0xc] sm:$0xf]
  %v2436 = vld [vmem:[%s15 + $0x10] sm:$0xf]
  %v2437 = vld [vmem:[%s15 + $0x14] sm:$0xf]
  %v2438 = vld [vmem:[%s15 + $0x18] sm:$0xf]
  %v2439 = vld [vmem:[%s15 + $0x1c] sm:$0xf]
  %v2440 = vld [vmem:[%s15 + $0x20] sm:$0xf]
  %v2441 = vld [vmem:[%s15 + $0x24] sm:$0xf]
  %v2442 = vld [vmem:[%s15 + $0x28] sm:$0xf]
  %v2443 = vld [vmem:[%s15 + $0x2c] sm:$0xf]
  %v2444 = vld [vmem:[%s15 + $0x30] sm:$0xf]
  %v2445 = vld [vmem:[%s15 + $0x34] sm:$0xf]
  %v2446 = vld [vmem:[%s15 + $0x38] sm:$0xf]
  %v2447 = vld [vmem:[%s15 + $0x3c] sm:$0xf]
  %v2448 = vld [vmem:[%s15 + $0x40] sm:$0xf]
  %v2449 = vld [vmem:[%s15 + $0x44] sm:$0xf]
  %v2468 = vunpack.c.l.b16 %v2432
  %v2469 = vunpack.c.l.b16 %v2433
  %v2470 = vunpack.c.l.b16 %v2434
  %v2471 = vunpack.c.l.b16 %v2435
  %v2472 = vunpack.c.l.b16 %v2436
  %v2473 = vunpack.c.l.b16 %v2437
  %v2474 = vunpack.c.l.b16 %v2438
  %v2475 = vunpack.c.l.b16 %v2439
  %v2476 = vunpack.c.l.b16 %v2440
  %v2477 = vunpack.c.l.b16 %v2441
  %v2478 = vunpack.c.l.b16 %v2442
  %v2479 = vunpack.c.l.b16 %v2443
  %v2480 = vunpack.c.l.b16 %v2444
  %v2481 = vunpack.c.l.b16 %v2445
  %v2482 = vunpack.c.l.b16 %v2446
  %v2483 = vunpack.c.l.b16 %v2447
  %v2484 = vunpack.c.l.b16 %v2448
  %v2485 = vunpack.c.l.b16 %v2449
  %v2486 = vpack.c.b16 %v2469, %v2468
  %v2487 = vpack.c.b16 %v2471, %v2470
  %v2488 = vpack.c.b16 %v2473, %v2472
  %v2489 = vpack.c.b16 %v2475, %v2474
  %v2490 = vpack.c.b16 %v2477, %v2476
  %v2491 = vpack.c.b16 %v2479, %v2478
  %v2492 = vpack.c.b16 %v2481, %v2480
  %v2493 = vpack.c.b16 %v2483, %v2482
  %v2494 = vpack.c.b16 %v2485, %v2484
  %v2505 = vsel %vm111, %v2429, 0
  %v2508 = vsel %vm111, %v2431, 0
  %2510 = vmatprep.subr.bf16.mxu0 0
  %2511 = vmatpush1.bf16.msra.mxu0 %v2493
  %2512 = vmatprep.subr.bf16.mxu0 0
  %2513 = vmatpush1.bf16.msra.mxu0 %v2492
  %2514 = vmatprep.subr.bf16.mxu0 0
  %2515 = vmatpush1.bf16.msra.mxu0 %v2491
  %2516 = vmatprep.subr.bf16.mxu0 0
  %2517 = vmatpush1.bf16.msra.mxu0 %v2490
  %2518 = vmatprep.subr.bf16.mxu0 0
  %2519 = vmatpush1.bf16.msra.mxu0 %v2489
  %2520 = vmatprep.subr.bf16.mxu0 0
  %2521 = vmatpush1.bf16.msra.mxu0 %v2488
  %2522 = vmatprep.subr.bf16.mxu0 0
  %2523 = vmatpush1.bf16.msra.mxu0 %v2487
  %2524 = vmatprep.subr.bf16.mxu0 0
  %2525 = vmatpush1.bf16.msra.mxu0 %v2486
  %2526 = vmatprep.subr.bf16.mxu0 0
  %2527 = vmatpush2.bf16.msra.mxu0 0
  %2528 = vmatprep.subr.bf16.mxu0 0
  %2529 = vmatpush2.bf16.msra.mxu0 0
  %2530 = vmatprep.subr.bf16.mxu0 0
  %2531 = vmatpush2.bf16.msra.mxu0 0
  %2532 = vmatprep.subr.bf16.mxu0 0
  %2533 = vmatpush2.bf16.msra.mxu0 0
  %2534 = vmatprep.subr.bf16.mxu0 0
  %2535 = vmatpush2.bf16.msra.mxu0 0
  %2536 = vmatprep.subr.bf16.mxu0 0
  %2537 = vmatpush2.bf16.msra.mxu0 0
  %2538 = vmatprep.subr.bf16.mxu0 0
  %2539 = vmatpush2.bf16.msra.mxu0 0
  %2540 = vmatprep.subr.bf16.mxu0 0
  %2541 = vmatpush2.bf16.msra.mxu0 %v2494
  %2542 = vmatprep.mubr.bf16.mxu0 %v2505
  %2543 = vmatmul.mubr.bf16.gmra.mxu0 %v2428
  %v2544 = vpop.f32.mrf.mxu0
  %v2545 = vadd.f32 0.0, %v2544
  %v2546 = vpop.f32.mrf.mxu0
  %v2547 = vpop.f32.mrf.mxu0
  %v2548 = vadd.f32 0.0, %v2547
  %v2549 = vpop.f32.mrf.mxu0
  %2550 = vmatprep.mubr.bf16.mxu0 %v2508
  %2551 = vmatmul.mubr.bf16.gmra.mxu0 %v2430
  %v2552 = vpop.f32.mrf.mxu0
  %v2553 = vadd.f32 0.0, %v2552
  %v2554 = vpop.f32.mrf.mxu0
  %v2555 = vpop.f32.mrf.mxu0
  %v2556 = vadd.f32 0.0, %v2555
  %v2557 = vpop.f32.mrf.mxu0
  %2558 = vdwg.mxu0
  %v2577 = vunpack.c.l.b16 %v2370
  %v2578 = vunpack.c.l.b16 %v2371
  %v2579 = vunpack.c.l.b16 %v2372
  %v2580 = vunpack.c.l.b16 %v2373
  %v2581 = vunpack.c.l.b16 %v2374
  %v2582 = vunpack.c.l.b16 %v2375
  %v2583 = vunpack.c.l.b16 %v2376
  %v2584 = vunpack.c.l.b16 %v2377
  %v2585 = vunpack.c.l.b16 %v2378
  %v2586 = vunpack.c.l.b16 %v2379
  %v2587 = vunpack.c.l.b16 %v2380
  %v2588 = vunpack.c.l.b16 %v2381
  %v2589 = vunpack.c.l.b16 %v2382
  %v2590 = vunpack.c.l.b16 %v2383
  %v2591 = vunpack.c.l.b16 %v2384
  %v2592 = vunpack.c.l.b16 %v2385
  %v2593 = vunpack.c.l.b16 %v2386
  %v2594 = vunpack.c.l.b16 %v2387
  %v2595 = vpack.c.b16 %v2578, %v2577
  %v2596 = vpack.c.b16 %v2580, %v2579
  %v2597 = vpack.c.b16 %v2582, %v2581
  %v2598 = vpack.c.b16 %v2584, %v2583
  %v2599 = vpack.c.b16 %v2586, %v2585
  %v2600 = vpack.c.b16 %v2588, %v2587
  %v2601 = vpack.c.b16 %v2590, %v2589
  %v2602 = vpack.c.b16 %v2592, %v2591
  %v2603 = vpack.c.b16 %v2594, %v2593
  %v2614 = vsel %vm111, %v2367, 0
  %v2617 = vsel %vm111, %v2369, 0
  %2619 = vmatprep.subr.bf16.mxu0 0
  %2620 = vmatpush1.bf16.msra.mxu0 %v2602
  %2621 = vmatprep.subr.bf16.mxu0 0
  %2622 = vmatpush1.bf16.msra.mxu0 %v2601
  %2623 = vmatprep.subr.bf16.mxu0 0
  %2624 = vmatpush1.bf16.msra.mxu0 %v2600
  %2625 = vmatprep.subr.bf16.mxu0 0
  %2626 = vmatpush1.bf16.msra.mxu0 %v2599
  %2627 = vmatprep.subr.bf16.mxu0 0
  %2628 = vmatpush1.bf16.msra.mxu0 %v2598
  %2629 = vmatprep.subr.bf16.mxu0 0
  %2630 = vmatpush1.bf16.msra.mxu0 %v2597
  %2631 = vmatprep.subr.bf16.mxu0 0
  %2632 = vmatpush1.bf16.msra.mxu0 %v2596
  %2633 = vmatprep.subr.bf16.mxu0 0
  %2634 = vmatpush1.bf16.msra.mxu0 %v2595
  %2635 = vmatprep.subr.bf16.mxu0 0
  %2636 = vmatpush2.bf16.msra.mxu0 0
  %2637 = vmatprep.subr.bf16.mxu0 0
  %2638 = vmatpush2.bf16.msra.mxu0 0
  %2639 = vmatprep.subr.bf16.mxu0 0
  %2640 = vmatpush2.bf16.msra.mxu0 0
  %2641 = vmatprep.subr.bf16.mxu0 0
  %2642 = vmatpush2.bf16.msra.mxu0 0
  %2643 = vmatprep.subr.bf16.mxu0 0
  %2644 = vmatpush2.bf16.msra.mxu0 0
  %2645 = vmatprep.subr.bf16.mxu0 0
  %2646 = vmatpush2.bf16.msra.mxu0 0
  %2647 = vmatprep.subr.bf16.mxu0 0
  %2648 = vmatpush2.bf16.msra.mxu0 0
  %2649 = vmatprep.subr.bf16.mxu0 0
  %2650 = vmatpush2.bf16.msra.mxu0 %v2603
  %2651 = vmatprep.mubr.bf16.mxu0 %v2614
  %2652 = vmatmul.mubr.bf16.gmra.mxu0 %v2366
  %v2653 = vpop.f32.mrf.mxu0
  %v2654 = vadd.f32 %v2545, %v2653
  %v2655 = vpop.f32.mrf.mxu0
  %v2656 = vpop.f32.mrf.mxu0
  %v2657 = vadd.f32 %v2548, %v2656
  %v2658 = vpop.f32.mrf.mxu0
  %2659 = vmatprep.mubr.bf16.mxu0 %v2617
  %2660 = vmatmul.mubr.bf16.gmra.mxu0 %v2368
  %v2661 = vpop.f32.mrf.mxu0
  %v2662 = vadd.f32 %v2553, %v2661
  %v2663 = vpop.f32.mrf.mxu0
  %v2664 = vpop.f32.mrf.mxu0
  %v2665 = vadd.f32 %v2556, %v2664
  %v2666 = vpop.f32.mrf.mxu0
  %2667 = vdwg.mxu0
  %v2668 = vrot.slane %v2354, 2
  %v2669 = vrot.slane %v2356, 2
  %v2670 = vsel %vm395, %v2668, %v2669
  %v2671 = vrot.slane %v2355, 2
  %v2672 = vrot.slane %v2357, 2
  %v2673 = vsel %vm395, %v2671, %v2672
  %v2674 = vrot.slane %v2358, 2
  %v2675 = vsel %vm395, %v2669, %v2674
  %v2676 = vrot.slane %v2359, 2
  %v2677 = vsel %vm395, %v2672, %v2676
  %v2678 = vrot.slane %v2360, 2
  %v2679 = vrot.slane %v2362, 2
  %v2680 = vsel %vm395, %v2678, %v2679
  %v2681 = vrot.slane %v2361, 2
  %v2682 = vrot.slane %v2363, 2
  %v2683 = vsel %vm395, %v2681, %v2682
  %v2684 = vrot.slane %v2364, 2
  %v2685 = vsel %vm395, %v2679, %v2684
  %v2686 = vrot.slane %v2365, 2
  %v2687 = vsel %vm395, %v2682, %v2686
  %v2696 = vpack.c.bf16 %v2675, %v2670
  %v2697 = vpack.c.bf16 %v2677, %v2673
  %v2698 = vpack.c.bf16 %v2685, %v2680
  %v2699 = vpack.c.bf16 %v2687, %v2683
  %v2700 = vld [vmem:[%s16] sm:$0xf]
  %v2701 = vld [vmem:[%s16 + $0x4] sm:$0xf]
  %v2702 = vld [vmem:[%s16 + $0x8] sm:$0xf]
  %v2703 = vld [vmem:[%s16 + $0xc] sm:$0xf]
  %v2704 = vld [vmem:[%s16 + $0x10] sm:$0xf]
  %v2705 = vld [vmem:[%s16 + $0x14] sm:$0xf]
  %v2706 = vld [vmem:[%s16 + $0x18] sm:$0xf]
  %v2707 = vld [vmem:[%s16 + $0x1c] sm:$0xf]
  %v2708 = vld [vmem:[%s16 + $0x20] sm:$0xf]
  %v2709 = vld [vmem:[%s16 + $0x24] sm:$0xf]
  %v2710 = vld [vmem:[%s16 + $0x28] sm:$0xf]
  %v2711 = vld [vmem:[%s16 + $0x2c] sm:$0xf]
  %v2712 = vld [vmem:[%s16 + $0x30] sm:$0xf]
  %v2713 = vld [vmem:[%s16 + $0x34] sm:$0xf]
  %v2714 = vld [vmem:[%s16 + $0x38] sm:$0xf]
  %v2715 = vld [vmem:[%s16 + $0x3c] sm:$0xf]
  %v2716 = vld [vmem:[%s16 + $0x40] sm:$0xf]
  %v2717 = vld [vmem:[%s16 + $0x44] sm:$0xf]
  %v2736 = vunpack.c.l.b16 %v2700
  %v2737 = vunpack.c.l.b16 %v2701
  %v2738 = vunpack.c.l.b16 %v2702
  %v2739 = vunpack.c.l.b16 %v2703
  %v2740 = vunpack.c.l.b16 %v2704
  %v2741 = vunpack.c.l.b16 %v2705
  %v2742 = vunpack.c.l.b16 %v2706
  %v2743 = vunpack.c.l.b16 %v2707
  %v2744 = vunpack.c.l.b16 %v2708
  %v2745 = vunpack.c.l.b16 %v2709
  %v2746 = vunpack.c.l.b16 %v2710
  %v2747 = vunpack.c.l.b16 %v2711
  %v2748 = vunpack.c.l.b16 %v2712
  %v2749 = vunpack.c.l.b16 %v2713
  %v2750 = vunpack.c.l.b16 %v2714
  %v2751 = vunpack.c.l.b16 %v2715
  %v2752 = vunpack.c.l.b16 %v2716
  %v2753 = vunpack.c.l.b16 %v2717
  %v2754 = vpack.c.b16 %v2737, %v2736
  %v2755 = vpack.c.b16 %v2739, %v2738
  %v2756 = vpack.c.b16 %v2741, %v2740
  %v2757 = vpack.c.b16 %v2743, %v2742
  %v2758 = vpack.c.b16 %v2745, %v2744
  %v2759 = vpack.c.b16 %v2747, %v2746
  %v2760 = vpack.c.b16 %v2749, %v2748
  %v2761 = vpack.c.b16 %v2751, %v2750
  %v2762 = vpack.c.b16 %v2753, %v2752
  %v2773 = vsel %vm111, %v2697, 0
  %v2776 = vsel %vm111, %v2699, 0
  %2778 = vmatprep.subr.bf16.mxu0 0
  %2779 = vmatpush1.bf16.msra.mxu0 %v2761
  %2780 = vmatprep.subr.bf16.mxu0 0
  %2781 = vmatpush1.bf16.msra.mxu0 %v2760
  %2782 = vmatprep.subr.bf16.mxu0 0
  %2783 = vmatpush1.bf16.msra.mxu0 %v2759
  %2784 = vmatprep.subr.bf16.mxu0 0
  %2785 = vmatpush1.bf16.msra.mxu0 %v2758
  %2786 = vmatprep.subr.bf16.mxu0 0
  %2787 = vmatpush1.bf16.msra.mxu0 %v2757
  %2788 = vmatprep.subr.bf16.mxu0 0
  %2789 = vmatpush1.bf16.msra.mxu0 %v2756
  %2790 = vmatprep.subr.bf16.mxu0 0
  %2791 = vmatpush1.bf16.msra.mxu0 %v2755
  %2792 = vmatprep.subr.bf16.mxu0 0
  %2793 = vmatpush1.bf16.msra.mxu0 %v2754
  %2794 = vmatprep.subr.bf16.mxu0 0
  %2795 = vmatpush2.bf16.msra.mxu0 0
  %2796 = vmatprep.subr.bf16.mxu0 0
  %2797 = vmatpush2.bf16.msra.mxu0 0
  %2798 = vmatprep.subr.bf16.mxu0 0
  %2799 = vmatpush2.bf16.msra.mxu0 0
  %2800 = vmatprep.subr.bf16.mxu0 0
  %2801 = vmatpush2.bf16.msra.mxu0 0
  %2802 = vmatprep.subr.bf16.mxu0 0
  %2803 = vmatpush2.bf16.msra.mxu0 0
  %2804 = vmatprep.subr.bf16.mxu0 0
  %2805 = vmatpush2.bf16.msra.mxu0 0
  %2806 = vmatprep.subr.bf16.mxu0 0
  %2807 = vmatpush2.bf16.msra.mxu0 0
  %2808 = vmatprep.subr.bf16.mxu0 0
  %2809 = vmatpush2.bf16.msra.mxu0 %v2762
  %2810 = vmatprep.mubr.bf16.mxu0 %v2773
  %2811 = vmatmul.mubr.bf16.gmra.mxu0 %v2696
  %v2812 = vpop.f32.mrf.mxu0
  %v2813 = vadd.f32 0.0, %v2812
  %v2814 = vpop.f32.mrf.mxu0
  %v2815 = vpop.f32.mrf.mxu0
  %v2816 = vadd.f32 0.0, %v2815
  %v2817 = vpop.f32.mrf.mxu0
  %2818 = vmatprep.mubr.bf16.mxu0 %v2776
  %2819 = vmatmul.mubr.bf16.gmra.mxu0 %v2698
  %v2820 = vpop.f32.mrf.mxu0
  %v2821 = vadd.f32 0.0, %v2820
  %v2822 = vpop.f32.mrf.mxu0
  %v2823 = vpop.f32.mrf.mxu0
  %v2824 = vadd.f32 0.0, %v2823
  %v2825 = vpop.f32.mrf.mxu0
  %2826 = vdwg.mxu0
  %v2827 = vadd.f32 %v2654, %v2813
  %v2828 = vadd.f32 %v2657, %v2816
  %v2829 = vadd.f32 %v2662, %v2821
  %v2830 = vadd.f32 %v2665, %v2824
  %v2831 = vadd.f32 %v2827, %v2828
  %v2832 = vadd.f32 %v2831, %v2829
  %v2833 = vadd.f32 %v2832, %v2830
  %v2834 = vrot.slane %v2833, 4
  %v2835 = vadd.f32 %v2833, %v2834
  %v2836 = vrot.slane %v2835, 2
  %v2837 = vadd.f32 %v2835, %v2836
  %v2838 = vrot.slane %v2837, 1
  %v2839 = vadd.f32 %v2837, %v2838
  %v2840 = vmul.f32 %v2827, %v2827
  %v2841 = vmul.f32 %v2828, %v2828
  %v2842 = vmul.f32 %v2829, %v2829
  %v2843 = vmul.f32 %v2830, %v2830
  %v2844 = vadd.f32 %v2840, %v2841
  %v2845 = vadd.f32 %v2844, %v2842
  %v2846 = vadd.f32 %v2845, %v2843
  %v2847 = vrot.slane %v2846, 4
  %v2848 = vadd.f32 %v2846, %v2847
  %v2849 = vrot.slane %v2848, 2
  %v2850 = vadd.f32 %v2848, %v2849
  %v2851 = vrot.slane %v2850, 1
  %v2852 = vadd.f32 %v2850, %v2851
  %v2853 = vsel %vm583, %v2839, %v2852
  %2854 = vmatprep.subr.mxu0 0.0
  %2855 = vmatpush1.msra.mxu0 %v72
  %2856 = vmatprep.subr.mxu0 0.0
  %2857 = vmatpush1.msra.mxu0 %v71
  %2858 = vmatprep.subr.mxu0 0.0
  %2859 = vmatpush1.msra.mxu0 %v70
  %2860 = vmatprep.subr.mxu0 0.0
  %2861 = vmatpush1.msra.mxu0 %v69
  %2862 = vmatprep.subr.mxu0 0.0
  %2863 = vmatpush1.msra.mxu0 %v68
  %2864 = vmatprep.subr.mxu0 0.0
  %2865 = vmatpush1.msra.mxu0 %v67
  %2866 = vmatprep.subr.mxu0 0.0
  %2867 = vmatpush1.msra.mxu0 %v66
  %2868 = vmatprep.subr.mxu0 0.0
  %2869 = vmatpush1.msra.mxu0 %v65
  %2870 = vmatprep.subr.mxu0 0.0
  %2871 = vmatpush1.msra.mxu0 %v64
  %2872 = vmatprep.subr.mxu0 0.0
  %2873 = vmatpush1.msra.mxu0 %v63
  %2874 = vmatprep.subr.mxu0 0.0
  %2875 = vmatpush1.msra.mxu0 %v62
  %2876 = vmatprep.subr.mxu0 0.0
  %2877 = vmatpush1.msra.mxu0 %v61
  %2878 = vmatprep.subr.mxu0 0.0
  %2879 = vmatpush1.msra.mxu0 %v60
  %2880 = vmatprep.subr.mxu0 0.0
  %2881 = vmatpush1.msra.mxu0 %v59
  %2882 = vmatprep.subr.mxu0 0.0
  %2883 = vmatpush1.msra.mxu0 %v58
  %2884 = vmatprep.subr.mxu0 0.0
  %2885 = vmatpush1.msra.mxu0 %v57
  %2886 = vmatprep.subr.mxu0 0.0
  %2887 = vmatpush2.msra.mxu0 0.0
  %2888 = vmatprep.subr.mxu0 0.0
  %2889 = vmatpush2.msra.mxu0 0.0
  %2890 = vmatprep.subr.mxu0 0.0
  %2891 = vmatpush2.msra.mxu0 0.0
  %2892 = vmatprep.subr.mxu0 0.0
  %2893 = vmatpush2.msra.mxu0 0.0
  %2894 = vmatprep.subr.mxu0 0.0
  %2895 = vmatpush2.msra.mxu0 0.0
  %2896 = vmatprep.subr.mxu0 0.0
  %2897 = vmatpush2.msra.mxu0 0.0
  %2898 = vmatprep.subr.mxu0 0.0
  %2899 = vmatpush2.msra.mxu0 0.0
  %2900 = vmatprep.subr.mxu0 0.0
  %2901 = vmatpush2.msra.mxu0 0.0
  %2902 = vmatprep.subr.mxu0 0.0
  %2903 = vmatpush2.msra.mxu0 0.0
  %2904 = vmatprep.subr.mxu0 0.0
  %2905 = vmatpush2.msra.mxu0 0.0
  %2906 = vmatprep.subr.mxu0 0.0
  %2907 = vmatpush2.msra.mxu0 0.0
  %2908 = vmatprep.subr.mxu0 0.0
  %2909 = vmatpush2.msra.mxu0 0.0
  %2910 = vmatprep.subr.mxu0 0.0
  %2911 = vmatpush2.msra.mxu0 0.0
  %2912 = vmatprep.subr.mxu0 0.0
  %2913 = vmatpush2.msra.mxu0 0.0
  %2914 = vmatprep.subr.mxu0 0.0
  %2915 = vmatpush2.msra.mxu0 0.0
  %2916 = vmatprep.subr.mxu0 0.0
  %2917 = vmatpush2.msra.mxu0 0.0
  %2918 = vmatprep.mubr.f32.mxu0 0.0
  %2919 = vmatmul.mubr.f32.gmra.mxu0 %v2853
  %v2920 = vpop.f32.mrf.mxu0
  %v2921 = vadd.f32 0.0, %v2920
  %v2922 = vpop.f32.mrf.mxu0
  %2923 = vdwg.mxu0
  %v2924 = vmul.f32 %v2921, 0.001953125
  %v2925 = vmul.f32 %v2924, %v2924
  %v2927 = vrot.slane %v2925, 7
  %v2929 = vsub.f32 %v2924, %v2927
  %v2930 = vadd.f32 %v2929, 1e-05
  %v2931 = vrsqrt.pop %v2930
  %v2932 = vsel %vm583, %v2924, %v2931
  %v2934 = vsel %vm1376, %v2932, 0
  %2936 = vmatprep.subr.mxu0 0.0
  %2937 = vmatpush1.msra.mxu0 0.0
  %2938 = vmatprep.subr.mxu0 0.0
  %2939 = vmatpush1.msra.mxu0 0.0
  %2940 = vmatprep.subr.mxu0 0.0
  %2941 = vmatpush1.msra.mxu0 0.0
  %2942 = vmatprep.subr.mxu0 0.0
  %2943 = vmatpush1.msra.mxu0 0.0
  %2944 = vmatprep.subr.mxu0 0.0
  %2945 = vmatpush1.msra.mxu0 0.0
  %2946 = vmatprep.subr.mxu0 0.0
  %2947 = vmatpush1.msra.mxu0 0.0
  %2948 = vmatprep.subr.mxu0 0.0
  %2949 = vmatpush1.msra.mxu0 0.0
  %2950 = vmatprep.subr.mxu0 0.0
  %2951 = vmatpush1.msra.mxu0 0.0
  %2952 = vmatprep.subr.mxu0 0.0
  %2953 = vmatpush1.msra.mxu0 0.0
  %2954 = vmatprep.subr.mxu0 0.0
  %2955 = vmatpush1.msra.mxu0 0.0
  %2956 = vmatprep.subr.mxu0 0.0
  %2957 = vmatpush1.msra.mxu0 0.0
  %2958 = vmatprep.subr.mxu0 0.0
  %2959 = vmatpush1.msra.mxu0 0.0
  %2960 = vmatprep.subr.mxu0 0.0
  %2961 = vmatpush1.msra.mxu0 0.0
  %2962 = vmatprep.subr.mxu0 0.0
  %2963 = vmatpush1.msra.mxu0 0.0
  %2964 = vmatprep.subr.mxu0 0.0
  %2965 = vmatpush1.msra.mxu0 0.0
  %2966 = vmatprep.subr.mxu0 0.0
  %2967 = vmatpush1.msra.mxu0 %v73
  %2968 = vmatprep.subr.mxu0 0.0
  %2969 = vmatpush2.msra.mxu0 0.0
  %2970 = vmatprep.subr.mxu0 0.0
  %2971 = vmatpush2.msra.mxu0 0.0
  %2972 = vmatprep.subr.mxu0 0.0
  %2973 = vmatpush2.msra.mxu0 0.0
  %2974 = vmatprep.subr.mxu0 0.0
  %2975 = vmatpush2.msra.mxu0 0.0
  %2976 = vmatprep.subr.mxu0 0.0
  %2977 = vmatpush2.msra.mxu0 0.0
  %2978 = vmatprep.subr.mxu0 0.0
  %2979 = vmatpush2.msra.mxu0 0.0
  %2980 = vmatprep.subr.mxu0 0.0
  %2981 = vmatpush2.msra.mxu0 0.0
  %2982 = vmatprep.subr.mxu0 0.0
  %2983 = vmatpush2.msra.mxu0 0.0
  %2984 = vmatprep.subr.mxu0 0.0
  %2985 = vmatpush2.msra.mxu0 0.0
  %2986 = vmatprep.subr.mxu0 0.0
  %2987 = vmatpush2.msra.mxu0 0.0
  %2988 = vmatprep.subr.mxu0 0.0
  %2989 = vmatpush2.msra.mxu0 0.0
  %2990 = vmatprep.subr.mxu0 0.0
  %2991 = vmatpush2.msra.mxu0 0.0
  %2992 = vmatprep.subr.mxu0 0.0
  %2993 = vmatpush2.msra.mxu0 0.0
  %2994 = vmatprep.subr.mxu0 0.0
  %2995 = vmatpush2.msra.mxu0 0.0
  %2996 = vmatprep.subr.mxu0 0.0
  %2997 = vmatpush2.msra.mxu0 0.0
  %2998 = vmatprep.subr.mxu0 0.0
  %2999 = vmatpush2.msra.mxu0 0.0
  %3000 = vmatprep.mubr.f32.mxu0 0.0
  %3001 = vmatmul.mubr.f32.gmra.mxu0 %v2934
  %v3002 = vpop.f32.mrf.mxu0
  %v3003 = vadd.f32 0.0, %v3002
  %v3004 = vpop.f32.mrf.mxu0
  %3005 = vdwg.mxu0
  %v3006 = vlaneseq
  %v3007 = vshrl.u32 %v3006, 7
  %v3008 = vsub.s32 0, %v3007
  %v3009 = vrot.slane %v3003, %v3008
  %v3010 = vsub.f32 %v2827, %v3009
  %v3011 = vsub.f32 %v2828, %v3009
  %v3012 = vsub.f32 %v2829, %v3009
  %v3013 = vsub.f32 %v2830, %v3009
  %v3014 = vlaneseq
  %v3015 = vshrl.u32 %v3014, 7
  %v3016 = vsub.s32 1, %v3015
  %v3017 = vrot.slane %v3003, %v3016
  %v3018 = vmul.f32 %v3010, %v3017
  %v3019 = vmul.f32 %v3011, %v3017
  %v3020 = vmul.f32 %v3012, %v3017
  %v3021 = vmul.f32 %v3013, %v3017
  %v3022 = vadd.f32 %v3018, %v2321
  %v3023 = vadd.f32 %v3019, %v2323
  %v3024 = vadd.f32 %v3020, %v2325
  %v3025 = vadd.f32 %v3021, %v2327
  %v3026 = vmax.f32 %v3022, 0.0
  %v3027 = vmax.f32 %v3023, 0.0
  %v3028 = vmax.f32 %v3024, 0.0
  %v3029 = vmax.f32 %v3025, 0.0
  %3030 = vst [vmem:[%s17] sm:$0xff] %v3026
  %3031 = vst [vmem:[%s17 + $0x8] sm:$0xff] %v3027
  %3032 = vst [vmem:[%s17 + $0x10] sm:$0xff] %v3028
  %3033 = vst [vmem:[%s17 + $0x18] sm:$0xff] %v3029
  // Predicated region
  $region70: #{res_layer_forward.1} parent=0 // pred_check
    _
  $region71: #{res_layer_forward.1} parent=0 // pred_check_branch
    %3035 = sbr.rel (0) target = $region73
  $region72: #{res_layer_forward.1} parent=0 // pred_region
    _
  $region73: #{res_layer_forward.1} parent=0 // pred_fallthru
    _
  // Predicated region
  $region74: #{res_layer_forward.1} parent=0 // pred_check
    _
  $region75: #{res_layer_forward.1} parent=0 // pred_check_branch
    %3037 = sbr.rel (0) target = $region77
  $region76: #{res_layer_forward.1} parent=0 // pred_region
    _
  $region77: #{res_layer_forward.1} parent=0 // pred_fallthru
    _

</llo_original>
